<compile_context>
chip_gen: v7x
topology: tpu7x:2x2x1
jax: 0.10.0
libtpu: 0.0.40
codegen_flags: <defaults>
</compile_context>

<pallas_src>
import jax
import jax.numpy as jnp
from jax.experimental import pallas as pl
from jax.experimental.pallas import tpu as pltpu

D_IN = 8192
D_H1 = 2048
D_H2 = 256
D_OUT = 1
TK = 1024                   # K tile of fc1 (8192 / 1024 = 8 reduction steps)
N_SPLIT = 2                 # split of fc1 output columns ('parallel' axis, v7x megacore)
D_H1_SPLIT = D_H1 // N_SPLIT


def _fc12_kernel(x_ref, w1_ref, b1_ref, w2_ref, o_ref, acc_ref):
    """Per column-half h: relu(x) @ W1[:, h] (+b1, relu) @ W2[h_rows, :] -> partial fc2 (no b2).

    Grid: (N_SPLIT 'parallel', K 'arbitrary'). acc_ref accumulates fc1 in f32.
    """
    k = pl.program_id(1)

    @pl.when(k == 0)
    def _():
        acc_ref[...] = jnp.zeros_like(acc_ref)

    # dropout (inference) == identity; relu; bf16 feed to the MXU (bf16 W1).
    x_tile = jnp.maximum(x_ref[...], 0.0).astype(jnp.bfloat16)
    acc_ref[...] += jnp.dot(x_tile, w1_ref[...],
                            preferred_element_type=jnp.float32)

    @pl.when(k == pl.num_programs(1) - 1)
    def _():
        # fc1 bias, (dropout=identity), relu; then this half's fc2 contribution.
        h1 = jnp.maximum(acc_ref[...] + b1_ref[...], 0.0).astype(jnp.bfloat16)
        o_ref[0] = jnp.dot(h1, w2_ref[...],
                           preferred_element_type=jnp.float32).astype(o_ref.dtype)


def _head_kernel(p_ref, b2_ref, w3_ref, b3_ref, o_ref):
    """Combine the column-split fc2 partials, then b2 + relu -> fc3 -> sigmoid."""
    h2 = jnp.maximum(jnp.sum(p_ref[...], axis=0) + b2_ref[...], 0.0)
    h3 = jnp.dot(h2, w3_ref[...], preferred_element_type=jnp.float32) + b3_ref[...]
    o_ref[...] = jax.nn.sigmoid(h3).astype(o_ref.dtype)


@jax.jit
def classify_layer(x, w1, b1, w2, b2, w3, b3):
    """x: (B, C, H, W) NCHW with C*H*W == 8192 (same flatten order as torch .view).

    W1/W2 are streamed in bf16 (cast here is a no-op if already stored bf16).
    Returns (B, 1) float32.
    """
    B = x.shape[0]
    xf = x.reshape(B, -1)
    assert xf.shape[1] == D_IN, f"expected flattened dim {D_IN}, got {xf.shape[1]}"

    w1 = w1.astype(jnp.bfloat16)
    w2 = w2.astype(jnp.bfloat16)

    partials = pl.pallas_call(
        _fc12_kernel,
        out_shape=jax.ShapeDtypeStruct((N_SPLIT, B, D_H2), jnp.float32),
        grid_spec=pltpu.PrefetchScalarGridSpec(
            num_scalar_prefetch=0,
            grid=(N_SPLIT, D_IN // TK),
            in_specs=[
                pl.BlockSpec((B, TK), lambda h, k: (0, k)),             # x tile (f32)
                pl.BlockSpec((TK, D_H1_SPLIT), lambda h, k: (k, h)),    # W1 tile (bf16)
                pl.BlockSpec((1, D_H1_SPLIT), lambda h, k: (0, h)),     # b1 half
                pl.BlockSpec((D_H1_SPLIT, D_H2), lambda h, k: (h, 0)),  # W2 half (bf16)
            ],
            out_specs=pl.BlockSpec((1, B, D_H2), lambda h, k: (h, 0, 0)),
            scratch_shapes=[pltpu.VMEM((B, D_H1_SPLIT), jnp.float32)],
        ),
        compiler_params=pltpu.CompilerParams(
            dimension_semantics=("parallel", "arbitrary"),
            vmem_limit_bytes=32 << 20,
        ),
    )(xf, w1, b1, w2)

    out = pl.pallas_call(
        _head_kernel,
        out_shape=jax.ShapeDtypeStruct((B, D_OUT), jnp.float32),
    )(partials, b2, w3, b3)
    return out


def _init_linear(key, fan_in, fan_out):
    """Deterministic init mimicking nn.Linear default (uniform +/- 1/sqrt(fan_in))."""
    kw, kb = jax.random.split(key)
    bound = 1.0 / jnp.sqrt(fan_in)
    # stored as (fan_in, fan_out) so the kernel does x @ W (== x @ W_torch.T)
    w = jax.random.uniform(kw, (fan_in, fan_out), jnp.float32, -bound, bound)
    b = jax.random.uniform(kb, (1, fan_out), jnp.float32, -bound, bound)
    return w, b


def _reference(x, w1_bf16, b1, w2_bf16, b2, w3, b3):
    """Plain-XLA reference using the same bf16 weight values / mixed precision."""
    xf = x.reshape(x.shape[0], -1)
    h = jnp.maximum(xf, 0.0).astype(jnp.bfloat16)
    h1 = jnp.dot(h, w1_bf16, preferred_element_type=jnp.float32) + b1
    h1 = jnp.maximum(h1, 0.0).astype(jnp.bfloat16)
    h2 = jnp.dot(h1, w2_bf16, preferred_element_type=jnp.float32) + b2
    h2 = jnp.maximum(h2, 0.0)
    h3 = jnp.dot(h2, w3, preferred_element_type=jnp.float32) + b3
    return jax.nn.sigmoid(h3)


if __name__ == "__main__":
    key = jax.random.PRNGKey(0)
    kx, k1, k2, k3 = jax.random.split(key, 4)

    # NCHW input consistent with fc1's 8192 input features: (2, 512, 4, 4).
    x = jax.random.normal(kx, (2, 512, 4, 4), jnp.float32)

    w1, b1 = _init_linear(k1, D_IN, D_H1)
    w2, b2 = _init_linear(k2, D_H1, D_H2)
    w3, b3 = _init_linear(k3, D_H2, D_OUT)

    # Store the big weights in bf16 (kernel is W1-bandwidth bound).
    w1 = w1.astype(jnp.bfloat16)
    w2 = w2.astype(jnp.bfloat16)

    out = classify_layer(x, w1, b1, w2, b2, w3, b3)
    out = jax.block_until_ready(out)

    ref = _reference(x, w1, b1, w2, b2, w3, b3)
    assert out.shape == (2, 1), out.shape
    err = jnp.max(jnp.abs(out - ref))
    assert jnp.allclose(out, ref, atol=1e-4, rtol=1e-4), f"max abs err {err}"

    print("KERNEL_OK")
</pallas_src>

<mosaic_0001>
module attributes {stable_mosaic.version = 11 : i64} {
  func.func @_fc12_kernel(%arg0: i32, %arg1: i32, %arg2: memref<2x1024xf32, #tpu.memory_space<vmem>>, %arg3: memref<1024x1024xbf16, #tpu.memory_space<vmem>>, %arg4: memref<1x1024xf32, #tpu.memory_space<vmem>>, %arg5: memref<1024x256xbf16, #tpu.memory_space<vmem>>, %arg6: memref<1x2x256xf32, #tpu.memory_space<vmem>>, %arg7: memref<2x1024xf32, #tpu.memory_space<vmem>>) attributes {dimension_semantics = [#tpu.dimension_semantics<parallel>, #tpu.dimension_semantics<arbitrary>], iteration_bounds = array<i64: 2, 8>, scalar_prefetch = 0 : i64, scratch_operands = 1 : i64, tpu.core_type = #tpu.core_type<tc>, window_params = [{transform_indices = @transform_0, window_bounds = array<i64: 2, 1024>}, {transform_indices = @transform_1, window_bounds = array<i64: 1024, 1024>}, {transform_indices = @transform_2, window_bounds = array<i64: 1, 1024>}, {transform_indices = @transform_3, window_bounds = array<i64: 1024, 256>}, {transform_indices = @transform_4, window_bounds = array<i64: 1, 2, 256>}]} {
    %c0_i32 = arith.constant 0 : i32
    %0 = arith.cmpi eq, %arg1, %c0_i32 : i32
    %1 = arith.extui %0 : i1 to i32
    %c0_i32_0 = arith.constant 0 : i32
    %2 = arith.cmpi ne, %1, %c0_i32_0 : i32
    scf.if %2 {
      %cst_10 = arith.constant 0.000000e+00 : f32
      %15 = vector.broadcast %cst_10 : f32 to vector<2x1024xf32>
      %c0_11 = arith.constant 0 : index
      %c0_12 = arith.constant 0 : index
      %16 = vector.load %arg7[%c0_11, %c0_12] : memref<2x1024xf32, #tpu.memory_space<vmem>>, vector<2x1024xf32>
      tpu.vector_store %arg7[%c0_11, %c0_12], %15 {strides = array<i32>} : memref<2x1024xf32, #tpu.memory_space<vmem>>, vector<2x1024xf32>,
    } else {
    }
    %c0 = arith.constant 0 : index
    %c0_1 = arith.constant 0 : index
    %3 = vector.load %arg2[%c0, %c0_1] : memref<2x1024xf32, #tpu.memory_space<vmem>>, vector<2x1024xf32>
    %cst = arith.constant 0.000000e+00 : f32
    %4 = vector.broadcast %cst : f32 to vector<2x1024xf32>
    %5 = arith.maximumf %3, %4 : vector<2x1024xf32>
    %6 = arith.truncf %5 : vector<2x1024xf32> to vector<2x1024xbf16>
    %c0_2 = arith.constant 0 : index
    %c0_3 = arith.constant 0 : index
    %7 = vector.load %arg7[%c0_2, %c0_3] : memref<2x1024xf32, #tpu.memory_space<vmem>>, vector<2x1024xf32>
    %c0_4 = arith.constant 0 : index
    %c0_5 = arith.constant 0 : index
    %8 = vector.load %arg3[%c0_4, %c0_5] : memref<1024x1024xbf16, #tpu.memory_space<vmem>>, vector<1024x1024xbf16>
    %cst_6 = arith.constant dense<0.000000e+00> : vector<2x1024xf32>
    %9 = tpu.matmul %6, %8, %cst_6 {dimension_numbers = #tpu.dot_dimension_numbers<[1], [0], [0], [1], [0, 0, 1, 1], [], []>} : vector<2x1024xbf16>, vector<1024x1024xbf16>, vector<2x1024xf32> -> vector<2x1024xf32>
    %10 = arith.addf %7, %9 : vector<2x1024xf32>
    %c0_7 = arith.constant 0 : index
    %c0_8 = arith.constant 0 : index
    %11 = vector.load %arg7[%c0_7, %c0_8] : memref<2x1024xf32, #tpu.memory_space<vmem>>, vector<2x1024xf32>
    tpu.vector_store %arg7[%c0_7, %c0_8], %10 {strides = array<i32>} : memref<2x1024xf32, #tpu.memory_space<vmem>>, vector<2x1024xf32>,
    %c7_i32 = arith.constant 7 : i32
    %12 = arith.cmpi eq, %arg1, %c7_i32 : i32
    %13 = arith.extui %12 : i1 to i32
    %c0_i32_9 = arith.constant 0 : i32
    %14 = arith.cmpi ne, %13, %c0_i32_9 : i32
    scf.if %14 {
      %c0_10 = arith.constant 0 : index
      %c0_11 = arith.constant 0 : index
      %15 = vector.load %arg7[%c0_10, %c0_11] : memref<2x1024xf32, #tpu.memory_space<vmem>>, vector<2x1024xf32>
      %c0_12 = arith.constant 0 : index
      %c0_13 = arith.constant 0 : index
      %16 = vector.load %arg4[%c0_12, %c0_13] : memref<1x1024xf32, #tpu.memory_space<vmem>>, vector<1x1024xf32>
      %17 = vector.broadcast %16 : vector<1x1024xf32> to vector<2x1024xf32>
      %18 = arith.addf %15, %17 : vector<2x1024xf32>
      %cst_14 = arith.constant 0.000000e+00 : f32
      %19 = vector.broadcast %cst_14 : f32 to vector<2x1024xf32>
      %20 = arith.maximumf %18, %19 : vector<2x1024xf32>
      %21 = arith.truncf %20 : vector<2x1024xf32> to vector<2x1024xbf16>
      %c0_15 = arith.constant 0 : index
      %c0_16 = arith.constant 0 : index
      %22 = vector.load %arg5[%c0_15, %c0_16] : memref<1024x256xbf16, #tpu.memory_space<vmem>>, vector<1024x256xbf16>
      %cst_17 = arith.constant dense<0.000000e+00> : vector<2x256xf32>
      %23 = tpu.matmul %21, %22, %cst_17 {dimension_numbers = #tpu.dot_dimension_numbers<[1], [0], [0], [1], [0, 0, 1, 1], [], []>} : vector<2x1024xbf16>, vector<1024x256xbf16>, vector<2x256xf32> -> vector<2x256xf32>
      %c0_18 = arith.constant 0 : index
      %c0_19 = arith.constant 0 : index
      %c0_20 = arith.constant 0 : index
      %24 = vector.load %arg6[%c0_18, %c0_19, %c0_20] : memref<1x2x256xf32, #tpu.memory_space<vmem>>, vector<1x2x256xf32>
      %25 = vector.shape_cast %24 : vector<1x2x256xf32> to vector<2x256xf32>
      %26 = vector.shape_cast %23 : vector<2x256xf32> to vector<1x2x256xf32>
      tpu.vector_store %arg6[%c0_18, %c0_19, %c0_20], %26 {strides = array<i32>} : memref<1x2x256xf32, #tpu.memory_space<vmem>>, vector<1x2x256xf32>,
    } else {
    }
    return
  }
  func.func @transform_0(%arg0: i32, %arg1: i32) -> (i32, i32) {
    %c0_i32 = arith.constant 0 : i32
    %c0_i32_0 = arith.constant 0 : i32
    return %c0_i32, %arg1 : i32, i32
  }
  func.func @transform_1(%arg0: i32, %arg1: i32) -> (i32, i32) {
    %c0_i32 = arith.constant 0 : i32
    return %arg1, %arg0 : i32, i32
  }
  func.func @transform_2(%arg0: i32, %arg1: i32) -> (i32, i32) {
    %c0_i32 = arith.constant 0 : i32
    %c0_i32_0 = arith.constant 0 : i32
    return %c0_i32, %arg0 : i32, i32
  }
  func.func @transform_3(%arg0: i32, %arg1: i32) -> (i32, i32) {
    %c0_i32 = arith.constant 0 : i32
    %c0_i32_0 = arith.constant 0 : i32
    return %arg0, %c0_i32 : i32, i32
  }
  func.func @transform_4(%arg0: i32, %arg1: i32) -> (i32, i32, i32) {
    %c0_i32 = arith.constant 0 : i32
    %c0_i32_0 = arith.constant 0 : i32
    %c0_i32_1 = arith.constant 0 : i32
    return %arg0, %c0_i32, %c0_i32_0 : i32, i32, i32
  }
}

module attributes {stable_mosaic.version = 11 : i64} {
  func.func @_head_kernel(%arg0: memref<2x2x256xf32, #tpu.memory_space<vmem>>, %arg1: memref<1x256xf32, #tpu.memory_space<vmem>>, %arg2: memref<256x1xf32, #tpu.memory_space<vmem>>, %arg3: memref<1x1xf32, #tpu.memory_space<vmem>>, %arg4: memref<2x1xf32, #tpu.memory_space<vmem>>) attributes {dimension_semantics = [], scalar_prefetch = 0 : i64, scratch_operands = 0 : i64, tpu.core_type = #tpu.core_type<tc>} {
    %c0 = arith.constant 0 : index
    %c0_0 = arith.constant 0 : index
    %c0_1 = arith.constant 0 : index
    %0 = vector.load %arg0[%c0, %c0_0, %c0_1] : memref<2x2x256xf32, #tpu.memory_space<vmem>>, vector<2x2x256xf32>
    %cst = arith.constant dense<0.000000e+00> : vector<2x256xf32>
    %1 = vector.multi_reduction <add>, %0, %cst [0] : vector<2x2x256xf32> to vector<2x256xf32>
    %c0_2 = arith.constant 0 : index
    %c0_3 = arith.constant 0 : index
    %2 = vector.load %arg1[%c0_2, %c0_3] : memref<1x256xf32, #tpu.memory_space<vmem>>, vector<1x256xf32>
    %3 = vector.broadcast %2 : vector<1x256xf32> to vector<2x256xf32>
    %4 = arith.addf %1, %3 : vector<2x256xf32>
    %cst_4 = arith.constant 0.000000e+00 : f32
    %5 = vector.broadcast %cst_4 : f32 to vector<2x256xf32>
    %6 = arith.maximumf %4, %5 : vector<2x256xf32>
    %c0_5 = arith.constant 0 : index
    %c0_6 = arith.constant 0 : index
    %7 = vector.load %arg2[%c0_5, %c0_6] : memref<256x1xf32, #tpu.memory_space<vmem>>, vector<256x1xf32>
    %cst_7 = arith.constant dense<0.000000e+00> : vector<2x1xf32>
    %8 = tpu.matmul %6, %7, %cst_7 {dimension_numbers = #tpu.dot_dimension_numbers<[1], [0], [0], [1], [0, 0, 1, 1], [], []>} : vector<2x256xf32>, vector<256x1xf32>, vector<2x1xf32> -> vector<2x1xf32>
    %c0_8 = arith.constant 0 : index
    %c0_9 = arith.constant 0 : index
    %9 = vector.load %arg3[%c0_8, %c0_9] : memref<1x1xf32, #tpu.memory_space<vmem>>, vector<1x1xf32>
    %10 = vector.broadcast %9 : vector<1x1xf32> to vector<2x1xf32>
    %11 = arith.addf %8, %10 : vector<2x1xf32>
    %12 = arith.negf %11 : vector<2x1xf32>
    %13 = math.exp %12 : vector<2x1xf32>
    %cst_10 = arith.constant 1.000000e+00 : f32
    %14 = vector.broadcast %cst_10 : f32 to vector<2x1xf32>
    %15 = arith.addf %14, %13 : vector<2x1xf32>
    %16 = arith.divf %14, %15 : vector<2x1xf32>
    %c0_11 = arith.constant 0 : index
    %c0_12 = arith.constant 0 : index
    %17 = vector.load %arg4[%c0_11, %c0_12] : memref<2x1xf32, #tpu.memory_space<vmem>>, vector<2x1xf32>
    tpu.vector_store %arg4[%c0_11, %c0_12], %16 {strides = array<i32>} : memref<2x1xf32, #tpu.memory_space<vmem>>, vector<2x1xf32>,
    return
  }
}

</mosaic_0001>

<llo_original>
// kernel: classify_layer.3
$region0: #{classify_layer.3}
  #allocation0 [shape = 'u32[]', space=smem, size = 0x4, offset = 0x4, fixed_abs, tag = 'smem constant byte address 0x4 - core index']
  #allocation1 [shape = 'u32[144,128]{1,0:T(1,128)}', space=vmem, size = 0x12000, scoped, tag = 'internal scratch']
  #allocation2 [shape = 'f32[1,1]{1,0:T(1,128)S(1)}', space=vmem, size = 0x200, scoped, tag = 'scoped memory for classify_layer.3']
  %s0 = inlined_call_operand.vmem [shape: f32[2,2,256], index: 0, kind: input, shape index: {}]
  %s1 = inlined_call_operand.vmem [shape: f32[1,256], index: 1, kind: input, shape index: {}]
  %s2 = inlined_call_operand.vmem [shape: f32[256,1], index: 2, kind: input, shape index: {}]
  %s3 = inlined_call_operand.<no memory space> [shape: f32[1,1], index: 3, kind: input, shape index: {}]
  %s4 = inlined_call_operand.vmem [shape: f32[2,1], index: 4, kind: output, shape index: {}]
  %s5 = sld [smem:[#allocation0]]
  $region26: #{classify_layer.3} parent=0
    _
  %s7 = ssub.s32 1, %s5
  %s8 = scalar_select 0, %s7, %s5
  %v9 = vstv %s3
  %10 = vst [vmem:[#allocation2] sm:$0x1] %v9
  // Predicated region
  $region2: #{classify_layer.3} parent=0 // pred_check
    _
  $region3: #{classify_layer.3} parent=0 // pred_check_branch
    %12 = sbr.rel (0) target = $region5
  $region4: #{classify_layer.3} parent=0 // pred_region
    _
  $region5: #{classify_layer.3} parent=0 // pred_fallthru
    _
  // Predicated region
  $region6: #{classify_layer.3} parent=0 // pred_check
    _
  $region7: #{classify_layer.3} parent=0 // pred_check_branch
    %14 = sbr.rel (0) target = $region9
  $region8: #{classify_layer.3} parent=0 // pred_region
    _
  $region9: #{classify_layer.3} parent=0 // pred_fallthru
    _
  // Predicated region
  $region10: #{classify_layer.3} parent=0 // pred_check
    _
  $region11: #{classify_layer.3} parent=0 // pred_check_branch
    %16 = sbr.rel (0) target = $region13
  $region12: #{classify_layer.3} parent=0 // pred_region
    _
  $region13: #{classify_layer.3} parent=0 // pred_fallthru
    _
  // Predicated region
  $region14: #{classify_layer.3} parent=0 // pred_check
    _
  $region15: #{classify_layer.3} parent=0 // pred_check_branch
    %18 = sbr.rel (0) target = $region17
  $region16: #{classify_layer.3} parent=0 // pred_region
    _
  $region17: #{classify_layer.3} parent=0 // pred_fallthru
    _
  %v19 = vld [vmem:[%s0] sm:$0xf]
  %v20 = vld [vmem:[%s0 + $0x4] sm:$0xf]
  %v24 = vunpack.c.l.s4 1983009808
  %v25 = vunpack.c.0.s8 %v24
  %v26 = vlaneseq
  %v27 = vshrl.u32 %v26, 7
  %v28 = vsub.s32 %v25, %v27
  %v29 = vrot.slane %v19, %v28
  %v30 = vcombine.high %v29, %v29
  %v32 = vunpack.c.l.s4 1983009808
  %v33 = vunpack.c.0.s8 %v32
  %v34 = vlaneseq
  %v35 = vshrl.u32 %v34, 7
  %v36 = vsub.s32 %v33, %v35
  %v37 = vrot.slane %v20, %v36
  %v38 = vcombine.high %v37, %v37
  %vm43 = vcmask 1041408
  %v44 = vsel %vm43, %v29, 0.0
  %v45 = vsel %vm43, %v37, 0.0
  %v46 = vadd.f32 %v44, %v45
  %v47 = vsel %vm43, %v30, 0.0
  %v48 = vsel %vm43, %v38, 0.0
  %v49 = vadd.f32 %v47, %v48
  %v50 = vld [vmem:[%s1] sm:$0x3]
  %v52 = vlaneseq
  %v53 = vshrl.u32 %v52, 7
  %v54 = vsub.s32 0, %v53
  %v55 = vrot.slane %v50, %v54
  %v56 = vlaneseq
  %v57 = vshrl.u32 %v56, 7
  %v58 = vsub.s32 1, %v57
  %v59 = vrot.slane %v50, %v58
  %v62 = vadd.f32 %v46, %v55
  %v63 = vadd.f32 %v49, %v59
  %v64 = vmax.f32 %v62, 0.0
  %v65 = vmax.f32 %v63, 0.0
  %v66 = vld [vmem:[%s2] sm:$0xff]
  %v67 = vld [vmem:[%s2 + $0x8] sm:$0xff]
  %v68 = vld [vmem:[%s2 + $0x10] sm:$0xff]
  %v69 = vld [vmem:[%s2 + $0x18] sm:$0xff]
  %v70 = vld [vmem:[%s2 + $0x20] sm:$0xff]
  %v71 = vld [vmem:[%s2 + $0x28] sm:$0xff]
  %v72 = vld [vmem:[%s2 + $0x30] sm:$0xff]
  %v73 = vld [vmem:[%s2 + $0x38] sm:$0xff]
  %v74 = vld [vmem:[%s2 + $0x40] sm:$0xff]
  %v75 = vld [vmem:[%s2 + $0x48] sm:$0xff]
  %v76 = vld [vmem:[%s2 + $0x50] sm:$0xff]
  %v77 = vld [vmem:[%s2 + $0x58] sm:$0xff]
  %v78 = vld [vmem:[%s2 + $0x60] sm:$0xff]
  %v79 = vld [vmem:[%s2 + $0x68] sm:$0xff]
  %v80 = vld [vmem:[%s2 + $0x70] sm:$0xff]
  %v81 = vld [vmem:[%s2 + $0x78] sm:$0xff]
  %v82 = vld [vmem:[%s2 + $0x80] sm:$0xff]
  %v83 = vld [vmem:[%s2 + $0x88] sm:$0xff]
  %v84 = vld [vmem:[%s2 + $0x90] sm:$0xff]
  %v85 = vld [vmem:[%s2 + $0x98] sm:$0xff]
  %v86 = vld [vmem:[%s2 + $0xa0] sm:$0xff]
  %v87 = vld [vmem:[%s2 + $0xa8] sm:$0xff]
  %v88 = vld [vmem:[%s2 + $0xb0] sm:$0xff]
  %v89 = vld [vmem:[%s2 + $0xb8] sm:$0xff]
  %v90 = vld [vmem:[%s2 + $0xc0] sm:$0xff]
  %v91 = vld [vmem:[%s2 + $0xc8] sm:$0xff]
  %v92 = vld [vmem:[%s2 + $0xd0] sm:$0xff]
  %v93 = vld [vmem:[%s2 + $0xd8] sm:$0xff]
  %v94 = vld [vmem:[%s2 + $0xe0] sm:$0xff]
  %v95 = vld [vmem:[%s2 + $0xe8] sm:$0xff]
  %v96 = vld [vmem:[%s2 + $0xf0] sm:$0xff]
  %v97 = vld [vmem:[%s2 + $0xf8] sm:$0xff]
  %v98 = vld [vmem:[#allocation2] sm:$0x1]
  %v100 = vlaneseq
  %v101 = vshrl.u32 %v100, 7
  %v102 = vsub.s32 0, %v101
  %v103 = vrot.slane %v98, %v102
  %105 = vmatprep.subr.mxu0 0.0
  %106 = vmatpush1.msra.mxu0 %v66
  %107 = vmatprep.subr.mxu0 0.0
  %108 = vmatpush1.msra.mxu0 %v67
  %109 = vmatprep.subr.mxu0 0.0
  %110 = vmatpush1.msra.mxu0 %v68
  %111 = vmatprep.subr.mxu0 0.0
  %112 = vmatpush1.msra.mxu0 %v69
  %113 = vmatprep.subr.mxu0 0.0
  %114 = vmatpush1.msra.mxu0 %v70
  %115 = vmatprep.subr.mxu0 0.0
  %116 = vmatpush1.msra.mxu0 %v71
  %117 = vmatprep.subr.mxu0 0.0
  %118 = vmatpush1.msra.mxu0 %v72
  %119 = vmatprep.subr.mxu0 0.0
  %120 = vmatpush1.msra.mxu0 %v73
  %121 = vmatprep.subr.mxu0 0.0
  %122 = vmatpush1.msra.mxu0 %v74
  %123 = vmatprep.subr.mxu0 0.0
  %124 = vmatpush1.msra.mxu0 %v75
  %125 = vmatprep.subr.mxu0 0.0
  %126 = vmatpush1.msra.mxu0 %v76
  %127 = vmatprep.subr.mxu0 0.0
  %128 = vmatpush1.msra.mxu0 %v77
  %129 = vmatprep.subr.mxu0 0.0
  %130 = vmatpush1.msra.mxu0 %v78
  %131 = vmatprep.subr.mxu0 0.0
  %132 = vmatpush1.msra.mxu0 %v79
  %133 = vmatprep.subr.mxu0 0.0
  %134 = vmatpush1.msra.mxu0 %v80
  %135 = vmatprep.subr.mxu0 0.0
  %136 = vmatpush1.msra.mxu0 %v81
  %137 = vmatprep.subr.mxu0 0.0
  %138 = vmatpush1.msra.mxu0 %v82
  %139 = vmatprep.subr.mxu0 0.0
  %140 = vmatpush1.msra.mxu0 %v83
  %141 = vmatprep.subr.mxu0 0.0
  %142 = vmatpush1.msra.mxu0 %v84
  %143 = vmatprep.subr.mxu0 0.0
  %144 = vmatpush1.msra.mxu0 %v85
  %145 = vmatprep.subr.mxu0 0.0
  %146 = vmatpush1.msra.mxu0 %v86
  %147 = vmatprep.subr.mxu0 0.0
  %148 = vmatpush1.msra.mxu0 %v87
  %149 = vmatprep.subr.mxu0 0.0
  %150 = vmatpush1.msra.mxu0 %v88
  %151 = vmatprep.subr.mxu0 0.0
  %152 = vmatpush1.msra.mxu0 %v89
  %153 = vmatprep.subr.mxu0 0.0
  %154 = vmatpush1.msra.mxu0 %v90
  %155 = vmatprep.subr.mxu0 0.0
  %156 = vmatpush1.msra.mxu0 %v91
  %157 = vmatprep.subr.mxu0 0.0
  %158 = vmatpush1.msra.mxu0 %v92
  %159 = vmatprep.subr.mxu0 0.0
  %160 = vmatpush1.msra.mxu0 %v93
  %161 = vmatprep.subr.mxu0 0.0
  %162 = vmatpush1.msra.mxu0 %v94
  %163 = vmatprep.subr.mxu0 0.0
  %164 = vmatpush1.msra.mxu0 %v95
  %165 = vmatprep.subr.mxu0 0.0
  %166 = vmatpush1.msra.mxu0 %v96
  %167 = vmatprep.subr.mxu0 0.0
  %168 = vmatpush1.msra.mxu0 %v97
  %169 = vmatprep.mubr.f32.mxu0 %v65
  %170 = vmatmul.mubr.f32.gmra.mrb[0].mxu0 %v64
  %v171 = vpop.f32.mrb[0].mxu0
  %v172 = vadd.f32 %v103, %v171
  %v173 = vpop.f32.mrb[0].mxu0
  %174 = vdwg.mxu0
  %v175 = vxor.u32 %v172, 2147483648
  %v176 = vmul.f32 %v175, 1.442695
  %v177 = vpow.pop %v176
  %v178 = vadd.f32 %v177, 1.0
  %v179 = vrcp.pop %v178
  %v180 = vmul.f32 1.0, %v179
  %vm181 = vcmask 1024
  %182 = vst.msk [vmem:[%s4] sm:$0x3] %vm181, %v180
  // Predicated region
  $region18: #{classify_layer.3} parent=0 // pred_check
    _
  $region19: #{classify_layer.3} parent=0 // pred_check_branch
    %184 = sbr.rel (0) target = $region21
  $region20: #{classify_layer.3} parent=0 // pred_region
    _
  $region21: #{classify_layer.3} parent=0 // pred_fallthru
    _
  // Predicated region
  $region22: #{classify_layer.3} parent=0 // pred_check
    _
  $region23: #{classify_layer.3} parent=0 // pred_check_branch
    %186 = sbr.rel (0) target = $region25
  $region24: #{classify_layer.3} parent=0 // pred_region
    _
  $region25: #{classify_layer.3} parent=0 // pred_fallthru
    _

// kernel: classify_layer.2
$region0: #{classify_layer.2}
  #allocation0 [shape = 'u32[]', space=smem, size = 0x4, offset = 0x4, fixed_abs, tag = 'smem constant byte address 0x4 - core index']
  #allocation1 [shape = 'u32[144,128]{1,0:T(1,128)}', space=vmem, size = 0x12000, scoped, tag = 'internal scratch']
  #allocation2 [shape = 'f32[2,1024]{1,0:T(2,128)}', space=vmem, size = 0x2000, scoped, tag = 'scratch operand']
  %s0 = inlined_call_operand.vmem [shape: f32[2,8192], index: 0, kind: input, shape index: {}]
  %s1 = inlined_call_operand.hbm [shape: bf16[8192,2048], index: 1, kind: input, shape index: {}]
  %s2 = inlined_call_operand.hbm [shape: f32[1,2048], index: 2, kind: input, shape index: {}]
  %s3 = inlined_call_operand.hbm [shape: bf16[2048,256], index: 3, kind: input, shape index: {}]
  %s4 = inlined_call_operand.vmem [shape: f32[2,2,256], index: 4, kind: output, shape index: {}]
  %s5 = sld [smem:[#allocation0]]
  $region69: #{classify_layer.2} parent=0
    _
  %s7 = ssub.s32 1, %s5
  %s8 = scalar_select 0, %s7, %s5
  $region1: #{classify_layer.2} parent=0
    #allocation3 [shape = 'u8[4194304]{0}', space=vmem, size = 0x400000, scoped, tag = 'input window, operand 1']
    #allocation4 [shape = 's32[2]{0}', space=sflag, size = 0x8, scoped, tag = 'scoped memory for classify_layer.2']
    #allocation5 [shape = 'u8[8192]{0}', space=vmem, size = 0x2000, scoped, tag = 'input window, operand 2']
    #allocation6 [shape = 's32[2]{0}', space=sflag, size = 0x8, scoped, tag = 'scoped memory for classify_layer.2']
    #allocation7 [shape = 'u8[1048576]{0}', space=vmem, size = 0x100000, scoped, tag = 'input window, operand 3']
    %9 = vsyncpa [#allocation4], 0
    %s10 = scalar_lea.sflag [#allocation4], 1
    %11 = vsyncpa %s10, 0
    %12 = vsyncpa [#allocation6], 0
    %s13 = scalar_lea.sflag [#allocation6], 1
    %14 = vsyncpa %s13, 0
    loop: start=0, step=1, limit=18
    $region2: #{classify_layer.2} parent=1 // loop_pre_header
      _
    $region3: #{classify_layer.2} parent=1 // loop_header
      %s16 = sphi 0, %s20
      %p17 = scmp.ge.s32.totalorder %s16, 18
      %s23 = sphi 0, %s35
      %s24 = sphi 0, %s31
      %s25 = sphi 0, %s23
      %s26 = sphi 0, %s24
      %s27 = sphi 0, %s25
      %s28 = sphi 0, %s26
      %s38 = sphi 0, %s40
      %s41 = sphi 0, %s38
      %s42 = sphi 0, %s41
      %s58 = sphi 0, %s42
      %s66 = sphi 0, %s68
      %s69 = sphi 0, %s66
      %s70 = sphi 0, %s69
      %s86 = sphi 0, %s70
      %s92 = sphi 0, %s94
      %s95 = sphi 0, %s92
      %s96 = sphi 0, %s95
      %s112 = sphi 0, %s96
      %s118 = sphi 0, %s120
      %s121 = sphi 0, %s118
      %s122 = sphi 0, %s121
      %s138 = sphi 0, %s122
      %s144 = sphi 0, %s146
      %s147 = sphi 0, %s144
      %s148 = sphi 0, %s147
      %s164 = sphi 0, %s148
    $region4: #{classify_layer.2} parent=1 // loop_header_branch
      %19 = sbr.rel (%p17) target = $region8
    $region5: #{classify_layer.2} parent=1 // loop_body
      %s21 = ssub.s32 %s16, 1
      %s22 = ssub.s32 %s16, 2
      %s29 = sadd.s32 1, %s24
      %p30 = scmp.ge.s32.totalorder %s29, 8
      %s31 = scalar_select %p30, 0, %s29
      %s32 = sadd.s32 1, %s23
      %s33 = scalar_select %p30, %s32, %s23
      %p34 = scmp.ge.s32.totalorder %s33, 2
      %s35 = scalar_select %p34, 0, %s33
      %s36 = ssub.s32 %s24, %s31
      %p37 = scmp.eq.s32.totalorder %s36, 0
      %s39 = sadd.s32 %s38, 1
      %s40 = scalar_select %p37, %s38, %s39
      %p43 = pneg %p37
      %p44 = scmp.eq.s32.totalorder %s16, 15
      %p45 = por %p43, %p44
      %p46 = scmp.ne.s32.totalorder %s38, %s41
      %p47 = scmp.eq.s32.totalorder %s16, 0
      %p48 = por %p46, %p47
      %p49 = scmp.ne.s32.totalorder %s38, %s41
      %p50 = scmp.eq.s32.totalorder %s21, 15
      %p51 = por %p49, %p50
      %p52 = scmp.ne.s32.totalorder %s41, %s42
      %p53 = scmp.eq.s32.totalorder %s21, 0
      %p54 = por %p52, %p53
      %p55 = scmp.ne.s32.totalorder %s41, %s42
      %p56 = scmp.eq.s32.totalorder %s22, 15
      %p57 = por %p55, %p56
      %p59 = scmp.ne.s32.totalorder %s42, %s58
      %p60 = scmp.eq.s32.totalorder %s22, 0
      %p61 = por %p59, %p60
      %s62 = ssub.s32 %s24, %s31
      %s63 = ssub.s32 %s23, %s35
      %s64 = sor.u32 %s62, %s63
      %p65 = scmp.eq.s32.totalorder %s64, 0
      %s67 = sadd.s32 %s66, 1
      %s68 = scalar_select %p65, %s66, %s67
      %p71 = pneg %p65
      %p72 = scmp.eq.s32.totalorder %s16, 15
      %p73 = por %p71, %p72
      %p74 = scmp.ne.s32.totalorder %s66, %s69
      %p75 = scmp.eq.s32.totalorder %s16, 0
      %p76 = por %p74, %p75
      %p77 = scmp.ne.s32.totalorder %s66, %s69
      %p78 = scmp.eq.s32.totalorder %s21, 15
      %p79 = por %p77, %p78
      %p80 = scmp.ne.s32.totalorder %s69, %s70
      %p81 = scmp.eq.s32.totalorder %s21, 0
      %p82 = por %p80, %p81
      %p83 = scmp.ne.s32.totalorder %s69, %s70
      %p84 = scmp.eq.s32.totalorder %s22, 15
      %p85 = por %p83, %p84
      %p87 = scmp.ne.s32.totalorder %s70, %s86
      %p88 = scmp.eq.s32.totalorder %s22, 0
      %p89 = por %p87, %p88
      %s90 = ssub.s32 %s23, %s35
      %p91 = scmp.eq.s32.totalorder %s90, 0
      %s93 = sadd.s32 %s92, 1
      %s94 = scalar_select %p91, %s92, %s93
      %p97 = pneg %p91
      %p98 = scmp.eq.s32.totalorder %s16, 15
      %p99 = por %p97, %p98
      %p100 = scmp.ne.s32.totalorder %s92, %s95
      %p101 = scmp.eq.s32.totalorder %s16, 0
      %p102 = por %p100, %p101
      %p103 = scmp.ne.s32.totalorder %s92, %s95
      %p104 = scmp.eq.s32.totalorder %s21, 15
      %p105 = por %p103, %p104
      %p106 = scmp.ne.s32.totalorder %s95, %s96
      %p107 = scmp.eq.s32.totalorder %s21, 0
      %p108 = por %p106, %p107
      %p109 = scmp.ne.s32.totalorder %s95, %s96
      %p110 = scmp.eq.s32.totalorder %s22, 15
      %p111 = por %p109, %p110
      %p113 = scmp.ne.s32.totalorder %s96, %s112
      %p114 = scmp.eq.s32.totalorder %s22, 0
      %p115 = por %p113, %p114
      %s116 = ssub.s32 %s23, %s35
      %p117 = scmp.eq.s32.totalorder %s116, 0
      %s119 = sadd.s32 %s118, 1
      %s120 = scalar_select %p117, %s118, %s119
      %p123 = pneg %p117
      %p124 = scmp.eq.s32.totalorder %s16, 15
      %p125 = por %p123, %p124
      %p126 = scmp.ne.s32.totalorder %s118, %s121
      %p127 = scmp.eq.s32.totalorder %s16, 0
      %p128 = por %p126, %p127
      %p129 = scmp.ne.s32.totalorder %s118, %s121
      %p130 = scmp.eq.s32.totalorder %s21, 15
      %p131 = por %p129, %p130
      %p132 = scmp.ne.s32.totalorder %s121, %s122
      %p133 = scmp.eq.s32.totalorder %s21, 0
      %p134 = por %p132, %p133
      %p135 = scmp.ne.s32.totalorder %s121, %s122
      %p136 = scmp.eq.s32.totalorder %s22, 15
      %p137 = por %p135, %p136
      %p139 = scmp.ne.s32.totalorder %s122, %s138
      %p140 = scmp.eq.s32.totalorder %s22, 0
      %p141 = por %p139, %p140
      %s142 = ssub.s32 %s23, %s35
      %p143 = scmp.eq.s32.totalorder %s142, 0
      %s145 = sadd.s32 %s144, 1
      %s146 = scalar_select %p143, %s144, %s145
      %p149 = pneg %p143
      %p150 = scmp.eq.s32.totalorder %s16, 15
      %p151 = por %p149, %p150
      %p152 = scmp.ne.s32.totalorder %s144, %s147
      %p153 = scmp.eq.s32.totalorder %s16, 0
      %p154 = por %p152, %p153
      %p155 = scmp.ne.s32.totalorder %s144, %s147
      %p156 = scmp.eq.s32.totalorder %s21, 15
      %p157 = por %p155, %p156
      %p158 = scmp.ne.s32.totalorder %s147, %s148
      %p159 = scmp.eq.s32.totalorder %s21, 0
      %p160 = por %p158, %p159
      %p161 = scmp.ne.s32.totalorder %s147, %s148
      %p162 = scmp.eq.s32.totalorder %s22, 15
      %p163 = por %p161, %p162
      %p165 = scmp.ne.s32.totalorder %s148, %s164
      %p166 = scmp.eq.s32.totalorder %s22, 0
      %p167 = por %p165, %p166
      %p168 = scmp.le.s32.totalorder 1, %s16
      %p169 = scmp.lt.s32.totalorder %s16, 17
      %p170 = pnand %p168, %p169
      %p171 = pneg %p170
      // Predicated region
      $region9: #{classify_layer.2} parent=5 // pred_check
        _
      $region10: #{classify_layer.2} parent=5 // pred_check_branch
        %173 = sbr.rel (%p170) target = $region12
      $region11: #{classify_layer.2} parent=5 // pred_region
        %s174 = ssub.s32 %s16, 1
      $region12: #{classify_layer.2} parent=5 // pred_fallthru
        _
      %p175 = scmp.lt.s32.totalorder %s16, 16
      // Predicated region
      $region13: #{classify_layer.2} parent=5 // pred_check
        %p176 = pneg %p175
      $region14: #{classify_layer.2} parent=5 // pred_check_branch
        %178 = sbr.rel (%p176) target = $region16
      $region15: #{classify_layer.2} parent=5 // pred_region
        // Predicated region
        $region17: #{classify_layer.2} parent=15 // pred_check
          %p179 = pneg %p48
        $region18: #{classify_layer.2} parent=15 // pred_check_branch
          %181 = sbr.rel (%p179) target = $region20
        $region19: #{classify_layer.2} parent=15 // pred_region
          %s182 = smul.u32 8, %s24
          %p183 = scmp.lt.s32.totalorder %s182, 63
          %s184 = scalar_select %p183, %s182, 63
          %s185 = smul.addr %s184, 2
          %s186 = scalar_lea.vmem %s0, %s185
          %s187 = smul.u32 8, %s24
        $region20: #{classify_layer.2} parent=15 // pred_fallthru
          _
        // Predicated region
        $region21: #{classify_layer.2} parent=15 // pred_check
          %p188 = pneg %p76
        $region22: #{classify_layer.2} parent=15 // pred_check_branch
          %190 = sbr.rel (%p188) target = $region24
        $region23: #{classify_layer.2} parent=15 // pred_region
          %s191 = sand.u32 %s66, 1
          %s192 = scalar_lea.sflag [#allocation4], %s191
          %s193 = sand.u32 %s66, 1
          %s194 = smul.addr %s193, 4096
          %s195 = scalar_lea.vmem [#allocation3], %s194
          %s196 = smul.u32 128, %s24
          %s197 = smul.u32 8, %s23
          %s199 = ssub.s32 65536, 65536
          %200 = vsyncadd %s192, %s199
          %s201 = smul.addr %s196, 16
          %s202 = sadd.s32 %s197, %s201
          %s203 = smul.addr %s202, 64
          %s204 = scalar_lea.hbm %s1, %s203
          %s205 = sshll.u32 %s195, 4
          %s206 = int_to_ptr.vmem [resolvable:$true] %s205
          %211 = dma.hbm_to_vmem [thread:$0]  %s204, 65536, %s206, %s192, 1024, 512, 32
        $region24: #{classify_layer.2} parent=15 // pred_fallthru
          _
        // Predicated region
        $region25: #{classify_layer.2} parent=15 // pred_check
          %p212 = pneg %p102
        $region26: #{classify_layer.2} parent=15 // pred_check_branch
          %214 = sbr.rel (%p212) target = $region28
        $region27: #{classify_layer.2} parent=15 // pred_region
          %s215 = sand.u32 %s16, 1
          %s216 = scalar_lea.sflag [#allocation6], %s215
          %s217 = sand.u32 %s92, 1
          %s218 = smul.addr %s217, 8
          %s219 = scalar_lea.vmem [#allocation5], %s218
          %s220 = smul.u32 8, %s23
          %s222 = ssub.s32 128, 128
          %223 = vsyncadd %s216, %s222
          %s224 = smul.addr %s220, 16
          %s225 = scalar_lea.hbm %s2, %s224
          %s227 = sshll.u32 %s219, 4
          %s228 = int_to_ptr.vmem [resolvable:$true] %s227
          %230 = dma.hbm_to_vmem [thread:$0]  %s225, 128, %s228, %s216
        $region28: #{classify_layer.2} parent=15 // pred_fallthru
          _
        // Predicated region
        $region29: #{classify_layer.2} parent=15 // pred_check
          %p231 = pneg %p128
        $region30: #{classify_layer.2} parent=15 // pred_check_branch
          %233 = sbr.rel (%p231) target = $region32
        $region31: #{classify_layer.2} parent=15 // pred_region
          %s234 = sand.u32 %s16, 1
          %s235 = scalar_lea.sflag [#allocation6], %s234
          %s236 = sand.u32 %s118, 1
          %s237 = smul.addr %s236, 1024
          %s238 = scalar_lea.vmem [#allocation7], %s237
          %s239 = smul.u32 128, %s23
          %s241 = ssub.s32 16384, 16384
          %242 = vsyncadd %s235, %s241
          %s243 = smul.addr %s239, 2
          %s244 = smul.addr %s243, 64
          %s245 = scalar_lea.hbm %s3, %s244
          %s246 = sshll.u32 %s238, 4
          %s247 = int_to_ptr.vmem [resolvable:$true] %s246
          %252 = dma.hbm_to_vmem [thread:$0]  %s245, 16384, %s247, %s235, 128, 128, 8
        $region32: #{classify_layer.2} parent=15 // pred_fallthru
          _
      $region16: #{classify_layer.2} parent=5 // pred_fallthru
        _
      %p253 = scmp.le.s32.totalorder 1, %s16
      %p254 = scmp.lt.s32.totalorder %s16, 17
      %p255 = pnand %p253, %p254
      %p256 = pneg %p255
      // Predicated region
      $region33: #{classify_layer.2} parent=5 // pred_check
        _
      $region34: #{classify_layer.2} parent=5 // pred_check_branch
        %258 = sbr.rel (%p255) target = $region36
      $region35: #{classify_layer.2} parent=5 // pred_region
        %s259 = ssub.s32 %s16, 1
        %s260 = sand.u32 %s69, 1
        %s261 = scalar_lea.sflag [#allocation4], %s260
        %s262 = sand.u32 %s69, 1
        %s263 = smul.addr %s262, 4096
        %s264 = scalar_lea.vmem [#allocation3], %s263
        // Predicated region
        $region37: #{classify_layer.2} parent=35 // pred_check
          %p265 = pneg %p82
        $region38: #{classify_layer.2} parent=35 // pred_check_branch
          %267 = sbr.rel (%p265) target = $region40
        $region39: #{classify_layer.2} parent=35 // pred_region
          %268 = dma.done %s261, 65536
        $region40: #{classify_layer.2} parent=35 // pred_fallthru
          _
        %s269 = sand.u32 %s21, 1
        %s270 = scalar_lea.sflag [#allocation6], %s269
        %s271 = sand.u32 %s95, 1
        %s272 = smul.addr %s271, 8
        %s273 = scalar_lea.vmem [#allocation5], %s272
        // Predicated region
        $region41: #{classify_layer.2} parent=35 // pred_check
          %p274 = pneg %p108
        $region42: #{classify_layer.2} parent=35 // pred_check_branch
          %276 = sbr.rel (%p274) target = $region44
        $region43: #{classify_layer.2} parent=35 // pred_region
          %277 = dma.done %s270, 128
        $region44: #{classify_layer.2} parent=35 // pred_fallthru
          _
        %s278 = sand.u32 %s21, 1
        %s279 = scalar_lea.sflag [#allocation6], %s278
        %s280 = sand.u32 %s121, 1
        %s281 = smul.addr %s280, 1024
        %s282 = scalar_lea.vmem [#allocation7], %s281
        // Predicated region
        $region45: #{classify_layer.2} parent=35 // pred_check
          %p283 = pneg %p134
        $region46: #{classify_layer.2} parent=35 // pred_check_branch
          %285 = sbr.rel (%p283) target = $region48
        $region47: #{classify_layer.2} parent=35 // pred_region
          %286 = dma.done %s279, 16384
        $region48: #{classify_layer.2} parent=35 // pred_fallthru
          _
        %s287 = smul.u32 8, %s26
        %p288 = scmp.lt.s32.totalorder %s287, 63
        %s289 = scalar_select %p288, %s287, 63
        %s290 = smul.addr %s289, 2
        %s291 = scalar_lea.vmem %s0, %s290
        %p292 = pneg %p54
        %p293 = pneg %p51
        %s294 = sand.u32 %s69, 1
        %s295 = scalar_lea.sflag [#allocation4], %s294
        %s296 = sand.u32 %s69, 1
        %s297 = smul.addr %s296, 4096
        %s298 = scalar_lea.vmem [#allocation3], %s297
        %p299 = pneg %p82
        %p300 = pneg %p79
        %s301 = sand.u32 %s21, 1
        %s302 = scalar_lea.sflag [#allocation6], %s301
        %s303 = sand.u32 %s95, 1
        %s304 = smul.addr %s303, 8
        %s305 = scalar_lea.vmem [#allocation5], %s304
        %p306 = pneg %p108
        %p307 = pneg %p105
        %s308 = sand.u32 %s21, 1
        %s309 = scalar_lea.sflag [#allocation6], %s308
        %s310 = sand.u32 %s121, 1
        %s311 = smul.addr %s310, 1024
        %s312 = scalar_lea.vmem [#allocation7], %s311
        %p313 = pneg %p134
        %p314 = pneg %p131
        %p315 = pneg %p160
        %p316 = pneg %p157
        %p317 = scmp.lt.s32.totalorder %s25, 1
        %s318 = scalar_select %p317, %s25, 1
        %s319 = smul.addr %s318, 2
        %s320 = smul.addr %s319, 2
        %s321 = scalar_lea.vmem %s4, %s320
        %s322 = smul.u32 8, %s26
        %p323 = scmp.lt.s32.totalorder %s322, 63
        %s324 = scalar_select %p323, %s322, 63
        %s325 = smul.addr %s324, 2
        %s326 = scalar_lea.vmem %s0, %s325
        %s327 = smul.u32 8, %s26
        %s328 = smul.u32 128, %s26
        %s329 = smul.u32 8, %s25
        %s330 = smul.u32 8, %s25
        %s331 = smul.u32 128, %s25
        %p332 = scmp.lt.s32.totalorder %s25, 1
        %s333 = scalar_select %p332, %s25, 1
        %s334 = smul.addr %s333, 2
        %s335 = smul.addr %s334, 2
        %s336 = scalar_lea.vmem %s4, %s335
        %p337 = scmp.eq.s32.totalorder %s26, 0
        // Predicated region
        $region49: #{classify_layer.2} parent=35 // pred_check
          %p338 = pneg %p337
        $region50: #{classify_layer.2} parent=35 // pred_check_branch
          %340 = sbr.rel (%p338) target = $region52
        $region51: #{classify_layer.2} parent=35 // pred_region
          %341 = vst [vmem:[#allocation2] sm:$0xff] 0.0
          %342 = vst [vmem:[#allocation2 + $0x8] sm:$0xff] 0.0
        $region52: #{classify_layer.2} parent=35 // pred_fallthru
          _
        %v343 = vld [vmem:[%s326] sm:$0xff]
        %v344 = vld [vmem:[%s326 + $0x8] sm:$0xff]
        %v345 = vmax.f32 %v343, 0.0
        %v346 = vmax.f32 %v344, 0.0
        %v349 = vcombine.high %v345, %v345
        %v351 = vunpack.c.l.s4 1983009808
        %v352 = vunpack.c.0.s8 %v351
        %v353 = vlaneseq
        %v354 = vshrl.u32 %v353, 7
        %v355 = vsub.s32 %v352, %v354
        %v356 = vrot.slane %v345, %v355
        %v358 = vunpack.c.l.s4 1983009808
        %v359 = vunpack.c.0.s8 %v358
        %v360 = vlaneseq
        %v361 = vshrl.u32 %v360, 7
        %v362 = vsub.s32 %v359, %v361
        %v363 = vrot.slane %v349, %v362
        %v364 = vcombine.high %v356, %v356
        %v365 = vcombine.high %v363, %v363
        %v366 = vcombine.high %v346, %v346
        %v368 = vunpack.c.l.s4 1983009808
        %v369 = vunpack.c.0.s8 %v368
        %v370 = vlaneseq
        %v371 = vshrl.u32 %v370, 7
        %v372 = vsub.s32 %v369, %v371
        %v373 = vrot.slane %v346, %v372
        %v375 = vunpack.c.l.s4 1983009808
        %v376 = vunpack.c.0.s8 %v375
        %v377 = vlaneseq
        %v378 = vshrl.u32 %v377, 7
        %v379 = vsub.s32 %v376, %v378
        %v380 = vrot.slane %v366, %v379
        %v381 = vcombine.high %v373, %v373
        %v382 = vcombine.high %v380, %v380
        %v391 = vpack.c.bf16 %v356, %v356
        %v392 = vpack.c.bf16 %v364, %v364
        %v393 = vpack.c.bf16 %v363, %v363
        %v394 = vpack.c.bf16 %v365, %v365
        %v395 = vpack.c.bf16 %v373, %v373
        %v396 = vpack.c.bf16 %v381, %v381
        %v397 = vpack.c.bf16 %v380, %v380
        %v398 = vpack.c.bf16 %v382, %v382
        %v399 = vld [vmem:[#allocation2] sm:$0xff]
        %v400 = vld [vmem:[#allocation2 + $0x8] sm:$0xff]
        %v401 = vld [vmem:[%s264] sm:$0xff]
        %v402 = vld [vmem:[%s264 + $0x8] sm:$0xff]
        %v403 = vld [vmem:[%s264 + $0x10] sm:$0xff]
        %v404 = vld [vmem:[%s264 + $0x18] sm:$0xff]
        %v405 = vld [vmem:[%s264 + $0x20] sm:$0xff]
        %v406 = vld [vmem:[%s264 + $0x28] sm:$0xff]
        %v407 = vld [vmem:[%s264 + $0x30] sm:$0xff]
        %v408 = vld [vmem:[%s264 + $0x38] sm:$0xff]
        %v409 = vld [vmem:[%s264 + $0x40] sm:$0xff]
        %v410 = vld [vmem:[%s264 + $0x48] sm:$0xff]
        %v411 = vld [vmem:[%s264 + $0x50] sm:$0xff]
        %v412 = vld [vmem:[%s264 + $0x58] sm:$0xff]
        %v413 = vld [vmem:[%s264 + $0x60] sm:$0xff]
        %v414 = vld [vmem:[%s264 + $0x68] sm:$0xff]
        %v415 = vld [vmem:[%s264 + $0x70] sm:$0xff]
        %v416 = vld [vmem:[%s264 + $0x78] sm:$0xff]
        %v417 = vld [vmem:[%s264 + $0x80] sm:$0xff]
        %v418 = vld [vmem:[%s264 + $0x88] sm:$0xff]
        %v419 = vld [vmem:[%s264 + $0x90] sm:$0xff]
        %v420 = vld [vmem:[%s264 + $0x98] sm:$0xff]
        %v421 = vld [vmem:[%s264 + $0xa0] sm:$0xff]
        %v422 = vld [vmem:[%s264 + $0xa8] sm:$0xff]
        %v423 = vld [vmem:[%s264 + $0xb0] sm:$0xff]
        %v424 = vld [vmem:[%s264 + $0xb8] sm:$0xff]
        %v425 = vld [vmem:[%s264 + $0xc0] sm:$0xff]
        %v426 = vld [vmem:[%s264 + $0xc8] sm:$0xff]
        %v427 = vld [vmem:[%s264 + $0xd0] sm:$0xff]
        %v428 = vld [vmem:[%s264 + $0xd8] sm:$0xff]
        %v429 = vld [vmem:[%s264 + $0xe0] sm:$0xff]
        %v430 = vld [vmem:[%s264 + $0xe8] sm:$0xff]
        %v431 = vld [vmem:[%s264 + $0xf0] sm:$0xff]
        %v432 = vld [vmem:[%s264 + $0xf8] sm:$0xff]
        %v433 = vld [vmem:[%s264 + $0x100] sm:$0xff]
        %v434 = vld [vmem:[%s264 + $0x108] sm:$0xff]
        %v435 = vld [vmem:[%s264 + $0x110] sm:$0xff]
        %v436 = vld [vmem:[%s264 + $0x118] sm:$0xff]
        %v437 = vld [vmem:[%s264 + $0x120] sm:$0xff]
        %v438 = vld [vmem:[%s264 + $0x128] sm:$0xff]
        %v439 = vld [vmem:[%s264 + $0x130] sm:$0xff]
        %v440 = vld [vmem:[%s264 + $0x138] sm:$0xff]
        %v441 = vld [vmem:[%s264 + $0x140] sm:$0xff]
        %v442 = vld [vmem:[%s264 + $0x148] sm:$0xff]
        %v443 = vld [vmem:[%s264 + $0x150] sm:$0xff]
        %v444 = vld [vmem:[%s264 + $0x158] sm:$0xff]
        %v445 = vld [vmem:[%s264 + $0x160] sm:$0xff]
        %v446 = vld [vmem:[%s264 + $0x168] sm:$0xff]
        %v447 = vld [vmem:[%s264 + $0x170] sm:$0xff]
        %v448 = vld [vmem:[%s264 + $0x178] sm:$0xff]
        %v449 = vld [vmem:[%s264 + $0x180] sm:$0xff]
        %v450 = vld [vmem:[%s264 + $0x188] sm:$0xff]
        %v451 = vld [vmem:[%s264 + $0x190] sm:$0xff]
        %v452 = vld [vmem:[%s264 + $0x198] sm:$0xff]
        %v453 = vld [vmem:[%s264 + $0x1a0] sm:$0xff]
        %v454 = vld [vmem:[%s264 + $0x1a8] sm:$0xff]
        %v455 = vld [vmem:[%s264 + $0x1b0] sm:$0xff]
        %v456 = vld [vmem:[%s264 + $0x1b8] sm:$0xff]
        %v457 = vld [vmem:[%s264 + $0x1c0] sm:$0xff]
        %v458 = vld [vmem:[%s264 + $0x1c8] sm:$0xff]
        %v459 = vld [vmem:[%s264 + $0x1d0] sm:$0xff]
        %v460 = vld [vmem:[%s264 + $0x1d8] sm:$0xff]
        %v461 = vld [vmem:[%s264 + $0x1e0] sm:$0xff]
        %v462 = vld [vmem:[%s264 + $0x1e8] sm:$0xff]
        %v463 = vld [vmem:[%s264 + $0x1f0] sm:$0xff]
        %v464 = vld [vmem:[%s264 + $0x1f8] sm:$0xff]
        %v465 = vld [vmem:[%s264 + $0x200] sm:$0xff]
        %v466 = vld [vmem:[%s264 + $0x208] sm:$0xff]
        %v467 = vld [vmem:[%s264 + $0x210] sm:$0xff]
        %v468 = vld [vmem:[%s264 + $0x218] sm:$0xff]
        %v469 = vld [vmem:[%s264 + $0x220] sm:$0xff]
        %v470 = vld [vmem:[%s264 + $0x228] sm:$0xff]
        %v471 = vld [vmem:[%s264 + $0x230] sm:$0xff]
        %v472 = vld [vmem:[%s264 + $0x238] sm:$0xff]
        %v473 = vld [vmem:[%s264 + $0x240] sm:$0xff]
        %v474 = vld [vmem:[%s264 + $0x248] sm:$0xff]
        %v475 = vld [vmem:[%s264 + $0x250] sm:$0xff]
        %v476 = vld [vmem:[%s264 + $0x258] sm:$0xff]
        %v477 = vld [vmem:[%s264 + $0x260] sm:$0xff]
        %v478 = vld [vmem:[%s264 + $0x268] sm:$0xff]
        %v479 = vld [vmem:[%s264 + $0x270] sm:$0xff]
        %v480 = vld [vmem:[%s264 + $0x278] sm:$0xff]
        %v481 = vld [vmem:[%s264 + $0x280] sm:$0xff]
        %v482 = vld [vmem:[%s264 + $0x288] sm:$0xff]
        %v483 = vld [vmem:[%s264 + $0x290] sm:$0xff]
        %v484 = vld [vmem:[%s264 + $0x298] sm:$0xff]
        %v485 = vld [vmem:[%s264 + $0x2a0] sm:$0xff]
        %v486 = vld [vmem:[%s264 + $0x2a8] sm:$0xff]
        %v487 = vld [vmem:[%s264 + $0x2b0] sm:$0xff]
        %v488 = vld [vmem:[%s264 + $0x2b8] sm:$0xff]
        %v489 = vld [vmem:[%s264 + $0x2c0] sm:$0xff]
        %v490 = vld [vmem:[%s264 + $0x2c8] sm:$0xff]
        %v491 = vld [vmem:[%s264 + $0x2d0] sm:$0xff]
        %v492 = vld [vmem:[%s264 + $0x2d8] sm:$0xff]
        %v493 = vld [vmem:[%s264 + $0x2e0] sm:$0xff]
        %v494 = vld [vmem:[%s264 + $0x2e8] sm:$0xff]
        %v495 = vld [vmem:[%s264 + $0x2f0] sm:$0xff]
        %v496 = vld [vmem:[%s264 + $0x2f8] sm:$0xff]
        %v497 = vld [vmem:[%s264 + $0x300] sm:$0xff]
        %v498 = vld [vmem:[%s264 + $0x308] sm:$0xff]
        %v499 = vld [vmem:[%s264 + $0x310] sm:$0xff]
        %v500 = vld [vmem:[%s264 + $0x318] sm:$0xff]
        %v501 = vld [vmem:[%s264 + $0x320] sm:$0xff]
        %v502 = vld [vmem:[%s264 + $0x328] sm:$0xff]
        %v503 = vld [vmem:[%s264 + $0x330] sm:$0xff]
        %v504 = vld [vmem:[%s264 + $0x338] sm:$0xff]
        %v505 = vld [vmem:[%s264 + $0x340] sm:$0xff]
        %v506 = vld [vmem:[%s264 + $0x348] sm:$0xff]
        %v507 = vld [vmem:[%s264 + $0x350] sm:$0xff]
        %v508 = vld [vmem:[%s264 + $0x358] sm:$0xff]
        %v509 = vld [vmem:[%s264 + $0x360] sm:$0xff]
        %v510 = vld [vmem:[%s264 + $0x368] sm:$0xff]
        %v511 = vld [vmem:[%s264 + $0x370] sm:$0xff]
        %v512 = vld [vmem:[%s264 + $0x378] sm:$0xff]
        %v513 = vld [vmem:[%s264 + $0x380] sm:$0xff]
        %v514 = vld [vmem:[%s264 + $0x388] sm:$0xff]
        %v515 = vld [vmem:[%s264 + $0x390] sm:$0xff]
        %v516 = vld [vmem:[%s264 + $0x398] sm:$0xff]
        %v517 = vld [vmem:[%s264 + $0x3a0] sm:$0xff]
        %v518 = vld [vmem:[%s264 + $0x3a8] sm:$0xff]
        %v519 = vld [vmem:[%s264 + $0x3b0] sm:$0xff]
        %v520 = vld [vmem:[%s264 + $0x3b8] sm:$0xff]
        %v521 = vld [vmem:[%s264 + $0x3c0] sm:$0xff]
        %v522 = vld [vmem:[%s264 + $0x3c8] sm:$0xff]
        %v523 = vld [vmem:[%s264 + $0x3d0] sm:$0xff]
        %v524 = vld [vmem:[%s264 + $0x3d8] sm:$0xff]
        %v525 = vld [vmem:[%s264 + $0x3e0] sm:$0xff]
        %v526 = vld [vmem:[%s264 + $0x3e8] sm:$0xff]
        %v527 = vld [vmem:[%s264 + $0x3f0] sm:$0xff]
        %v528 = vld [vmem:[%s264 + $0x3f8] sm:$0xff]
        %v529 = vld [vmem:[%s264 + $0x400] sm:$0xff]
        %v530 = vld [vmem:[%s264 + $0x408] sm:$0xff]
        %v531 = vld [vmem:[%s264 + $0x410] sm:$0xff]
        %v532 = vld [vmem:[%s264 + $0x418] sm:$0xff]
        %v533 = vld [vmem:[%s264 + $0x420] sm:$0xff]
        %v534 = vld [vmem:[%s264 + $0x428] sm:$0xff]
        %v535 = vld [vmem:[%s264 + $0x430] sm:$0xff]
        %v536 = vld [vmem:[%s264 + $0x438] sm:$0xff]
        %v537 = vld [vmem:[%s264 + $0x440] sm:$0xff]
        %v538 = vld [vmem:[%s264 + $0x448] sm:$0xff]
        %v539 = vld [vmem:[%s264 + $0x450] sm:$0xff]
        %v540 = vld [vmem:[%s264 + $0x458] sm:$0xff]
        %v541 = vld [vmem:[%s264 + $0x460] sm:$0xff]
        %v542 = vld [vmem:[%s264 + $0x468] sm:$0xff]
        %v543 = vld [vmem:[%s264 + $0x470] sm:$0xff]
        %v544 = vld [vmem:[%s264 + $0x478] sm:$0xff]
        %v545 = vld [vmem:[%s264 + $0x480] sm:$0xff]
        %v546 = vld [vmem:[%s264 + $0x488] sm:$0xff]
        %v547 = vld [vmem:[%s264 + $0x490] sm:$0xff]
        %v548 = vld [vmem:[%s264 + $0x498] sm:$0xff]
        %v549 = vld [vmem:[%s264 + $0x4a0] sm:$0xff]
        %v550 = vld [vmem:[%s264 + $0x4a8] sm:$0xff]
        %v551 = vld [vmem:[%s264 + $0x4b0] sm:$0xff]
        %v552 = vld [vmem:[%s264 + $0x4b8] sm:$0xff]
        %v553 = vld [vmem:[%s264 + $0x4c0] sm:$0xff]
        %v554 = vld [vmem:[%s264 + $0x4c8] sm:$0xff]
        %v555 = vld [vmem:[%s264 + $0x4d0] sm:$0xff]
        %v556 = vld [vmem:[%s264 + $0x4d8] sm:$0xff]
        %v557 = vld [vmem:[%s264 + $0x4e0] sm:$0xff]
        %v558 = vld [vmem:[%s264 + $0x4e8] sm:$0xff]
        %v559 = vld [vmem:[%s264 + $0x4f0] sm:$0xff]
        %v560 = vld [vmem:[%s264 + $0x4f8] sm:$0xff]
        %v561 = vld [vmem:[%s264 + $0x500] sm:$0xff]
        %v562 = vld [vmem:[%s264 + $0x508] sm:$0xff]
        %v563 = vld [vmem:[%s264 + $0x510] sm:$0xff]
        %v564 = vld [vmem:[%s264 + $0x518] sm:$0xff]
        %v565 = vld [vmem:[%s264 + $0x520] sm:$0xff]
        %v566 = vld [vmem:[%s264 + $0x528] sm:$0xff]
        %v567 = vld [vmem:[%s264 + $0x530] sm:$0xff]
        %v568 = vld [vmem:[%s264 + $0x538] sm:$0xff]
        %v569 = vld [vmem:[%s264 + $0x540] sm:$0xff]
        %v570 = vld [vmem:[%s264 + $0x548] sm:$0xff]
        %v571 = vld [vmem:[%s264 + $0x550] sm:$0xff]
        %v572 = vld [vmem:[%s264 + $0x558] sm:$0xff]
        %v573 = vld [vmem:[%s264 + $0x560] sm:$0xff]
        %v574 = vld [vmem:[%s264 + $0x568] sm:$0xff]
        %v575 = vld [vmem:[%s264 + $0x570] sm:$0xff]
        %v576 = vld [vmem:[%s264 + $0x578] sm:$0xff]
        %v577 = vld [vmem:[%s264 + $0x580] sm:$0xff]
        %v578 = vld [vmem:[%s264 + $0x588] sm:$0xff]
        %v579 = vld [vmem:[%s264 + $0x590] sm:$0xff]
        %v580 = vld [vmem:[%s264 + $0x598] sm:$0xff]
        %v581 = vld [vmem:[%s264 + $0x5a0] sm:$0xff]
        %v582 = vld [vmem:[%s264 + $0x5a8] sm:$0xff]
        %v583 = vld [vmem:[%s264 + $0x5b0] sm:$0xff]
        %v584 = vld [vmem:[%s264 + $0x5b8] sm:$0xff]
        %v585 = vld [vmem:[%s264 + $0x5c0] sm:$0xff]
        %v586 = vld [vmem:[%s264 + $0x5c8] sm:$0xff]
        %v587 = vld [vmem:[%s264 + $0x5d0] sm:$0xff]
        %v588 = vld [vmem:[%s264 + $0x5d8] sm:$0xff]
        %v589 = vld [vmem:[%s264 + $0x5e0] sm:$0xff]
        %v590 = vld [vmem:[%s264 + $0x5e8] sm:$0xff]
        %v591 = vld [vmem:[%s264 + $0x5f0] sm:$0xff]
        %v592 = vld [vmem:[%s264 + $0x5f8] sm:$0xff]
        %v593 = vld [vmem:[%s264 + $0x600] sm:$0xff]
        %v594 = vld [vmem:[%s264 + $0x608] sm:$0xff]
        %v595 = vld [vmem:[%s264 + $0x610] sm:$0xff]
        %v596 = vld [vmem:[%s264 + $0x618] sm:$0xff]
        %v597 = vld [vmem:[%s264 + $0x620] sm:$0xff]
        %v598 = vld [vmem:[%s264 + $0x628] sm:$0xff]
        %v599 = vld [vmem:[%s264 + $0x630] sm:$0xff]
        %v600 = vld [vmem:[%s264 + $0x638] sm:$0xff]
        %v601 = vld [vmem:[%s264 + $0x640] sm:$0xff]
        %v602 = vld [vmem:[%s264 + $0x648] sm:$0xff]
        %v603 = vld [vmem:[%s264 + $0x650] sm:$0xff]
        %v604 = vld [vmem:[%s264 + $0x658] sm:$0xff]
        %v605 = vld [vmem:[%s264 + $0x660] sm:$0xff]
        %v606 = vld [vmem:[%s264 + $0x668] sm:$0xff]
        %v607 = vld [vmem:[%s264 + $0x670] sm:$0xff]
        %v608 = vld [vmem:[%s264 + $0x678] sm:$0xff]
        %v609 = vld [vmem:[%s264 + $0x680] sm:$0xff]
        %v610 = vld [vmem:[%s264 + $0x688] sm:$0xff]
        %v611 = vld [vmem:[%s264 + $0x690] sm:$0xff]
        %v612 = vld [vmem:[%s264 + $0x698] sm:$0xff]
        %v613 = vld [vmem:[%s264 + $0x6a0] sm:$0xff]
        %v614 = vld [vmem:[%s264 + $0x6a8] sm:$0xff]
        %v615 = vld [vmem:[%s264 + $0x6b0] sm:$0xff]
        %v616 = vld [vmem:[%s264 + $0x6b8] sm:$0xff]
        %v617 = vld [vmem:[%s264 + $0x6c0] sm:$0xff]
        %v618 = vld [vmem:[%s264 + $0x6c8] sm:$0xff]
        %v619 = vld [vmem:[%s264 + $0x6d0] sm:$0xff]
        %v620 = vld [vmem:[%s264 + $0x6d8] sm:$0xff]
        %v621 = vld [vmem:[%s264 + $0x6e0] sm:$0xff]
        %v622 = vld [vmem:[%s264 + $0x6e8] sm:$0xff]
        %v623 = vld [vmem:[%s264 + $0x6f0] sm:$0xff]
        %v624 = vld [vmem:[%s264 + $0x6f8] sm:$0xff]
        %v625 = vld [vmem:[%s264 + $0x700] sm:$0xff]
        %v626 = vld [vmem:[%s264 + $0x708] sm:$0xff]
        %v627 = vld [vmem:[%s264 + $0x710] sm:$0xff]
        %v628 = vld [vmem:[%s264 + $0x718] sm:$0xff]
        %v629 = vld [vmem:[%s264 + $0x720] sm:$0xff]
        %v630 = vld [vmem:[%s264 + $0x728] sm:$0xff]
        %v631 = vld [vmem:[%s264 + $0x730] sm:$0xff]
        %v632 = vld [vmem:[%s264 + $0x738] sm:$0xff]
        %v633 = vld [vmem:[%s264 + $0x740] sm:$0xff]
        %v634 = vld [vmem:[%s264 + $0x748] sm:$0xff]
        %v635 = vld [vmem:[%s264 + $0x750] sm:$0xff]
        %v636 = vld [vmem:[%s264 + $0x758] sm:$0xff]
        %v637 = vld [vmem:[%s264 + $0x760] sm:$0xff]
        %v638 = vld [vmem:[%s264 + $0x768] sm:$0xff]
        %v639 = vld [vmem:[%s264 + $0x770] sm:$0xff]
        %v640 = vld [vmem:[%s264 + $0x778] sm:$0xff]
        %v641 = vld [vmem:[%s264 + $0x780] sm:$0xff]
        %v642 = vld [vmem:[%s264 + $0x788] sm:$0xff]
        %v643 = vld [vmem:[%s264 + $0x790] sm:$0xff]
        %v644 = vld [vmem:[%s264 + $0x798] sm:$0xff]
        %v645 = vld [vmem:[%s264 + $0x7a0] sm:$0xff]
        %v646 = vld [vmem:[%s264 + $0x7a8] sm:$0xff]
        %v647 = vld [vmem:[%s264 + $0x7b0] sm:$0xff]
        %v648 = vld [vmem:[%s264 + $0x7b8] sm:$0xff]
        %v649 = vld [vmem:[%s264 + $0x7c0] sm:$0xff]
        %v650 = vld [vmem:[%s264 + $0x7c8] sm:$0xff]
        %v651 = vld [vmem:[%s264 + $0x7d0] sm:$0xff]
        %v652 = vld [vmem:[%s264 + $0x7d8] sm:$0xff]
        %v653 = vld [vmem:[%s264 + $0x7e0] sm:$0xff]
        %v654 = vld [vmem:[%s264 + $0x7e8] sm:$0xff]
        %v655 = vld [vmem:[%s264 + $0x7f0] sm:$0xff]
        %v656 = vld [vmem:[%s264 + $0x7f8] sm:$0xff]
        %v657 = vld [vmem:[%s264 + $0x800] sm:$0xff]
        %v658 = vld [vmem:[%s264 + $0x808] sm:$0xff]
        %v659 = vld [vmem:[%s264 + $0x810] sm:$0xff]
        %v660 = vld [vmem:[%s264 + $0x818] sm:$0xff]
        %v661 = vld [vmem:[%s264 + $0x820] sm:$0xff]
        %v662 = vld [vmem:[%s264 + $0x828] sm:$0xff]
        %v663 = vld [vmem:[%s264 + $0x830] sm:$0xff]
        %v664 = vld [vmem:[%s264 + $0x838] sm:$0xff]
        %v665 = vld [vmem:[%s264 + $0x840] sm:$0xff]
        %v666 = vld [vmem:[%s264 + $0x848] sm:$0xff]
        %v667 = vld [vmem:[%s264 + $0x850] sm:$0xff]
        %v668 = vld [vmem:[%s264 + $0x858] sm:$0xff]
        %v669 = vld [vmem:[%s264 + $0x860] sm:$0xff]
        %v670 = vld [vmem:[%s264 + $0x868] sm:$0xff]
        %v671 = vld [vmem:[%s264 + $0x870] sm:$0xff]
        %v672 = vld [vmem:[%s264 + $0x878] sm:$0xff]
        %v673 = vld [vmem:[%s264 + $0x880] sm:$0xff]
        %v674 = vld [vmem:[%s264 + $0x888] sm:$0xff]
        %v675 = vld [vmem:[%s264 + $0x890] sm:$0xff]
        %v676 = vld [vmem:[%s264 + $0x898] sm:$0xff]
        %v677 = vld [vmem:[%s264 + $0x8a0] sm:$0xff]
        %v678 = vld [vmem:[%s264 + $0x8a8] sm:$0xff]
        %v679 = vld [vmem:[%s264 + $0x8b0] sm:$0xff]
        %v680 = vld [vmem:[%s264 + $0x8b8] sm:$0xff]
        %v681 = vld [vmem:[%s264 + $0x8c0] sm:$0xff]
        %v682 = vld [vmem:[%s264 + $0x8c8] sm:$0xff]
        %v683 = vld [vmem:[%s264 + $0x8d0] sm:$0xff]
        %v684 = vld [vmem:[%s264 + $0x8d8] sm:$0xff]
        %v685 = vld [vmem:[%s264 + $0x8e0] sm:$0xff]
        %v686 = vld [vmem:[%s264 + $0x8e8] sm:$0xff]
        %v687 = vld [vmem:[%s264 + $0x8f0] sm:$0xff]
        %v688 = vld [vmem:[%s264 + $0x8f8] sm:$0xff]
        %v689 = vld [vmem:[%s264 + $0x900] sm:$0xff]
        %v690 = vld [vmem:[%s264 + $0x908] sm:$0xff]
        %v691 = vld [vmem:[%s264 + $0x910] sm:$0xff]
        %v692 = vld [vmem:[%s264 + $0x918] sm:$0xff]
        %v693 = vld [vmem:[%s264 + $0x920] sm:$0xff]
        %v694 = vld [vmem:[%s264 + $0x928] sm:$0xff]
        %v695 = vld [vmem:[%s264 + $0x930] sm:$0xff]
        %v696 = vld [vmem:[%s264 + $0x938] sm:$0xff]
        %v697 = vld [vmem:[%s264 + $0x940] sm:$0xff]
        %v698 = vld [vmem:[%s264 + $0x948] sm:$0xff]
        %v699 = vld [vmem:[%s264 + $0x950] sm:$0xff]
        %v700 = vld [vmem:[%s264 + $0x958] sm:$0xff]
        %v701 = vld [vmem:[%s264 + $0x960] sm:$0xff]
        %v702 = vld [vmem:[%s264 + $0x968] sm:$0xff]
        %v703 = vld [vmem:[%s264 + $0x970] sm:$0xff]
        %v704 = vld [vmem:[%s264 + $0x978] sm:$0xff]
        %v705 = vld [vmem:[%s264 + $0x980] sm:$0xff]
        %v706 = vld [vmem:[%s264 + $0x988] sm:$0xff]
        %v707 = vld [vmem:[%s264 + $0x990] sm:$0xff]
        %v708 = vld [vmem:[%s264 + $0x998] sm:$0xff]
        %v709 = vld [vmem:[%s264 + $0x9a0] sm:$0xff]
        %v710 = vld [vmem:[%s264 + $0x9a8] sm:$0xff]
        %v711 = vld [vmem:[%s264 + $0x9b0] sm:$0xff]
        %v712 = vld [vmem:[%s264 + $0x9b8] sm:$0xff]
        %v713 = vld [vmem:[%s264 + $0x9c0] sm:$0xff]
        %v714 = vld [vmem:[%s264 + $0x9c8] sm:$0xff]
        %v715 = vld [vmem:[%s264 + $0x9d0] sm:$0xff]
        %v716 = vld [vmem:[%s264 + $0x9d8] sm:$0xff]
        %v717 = vld [vmem:[%s264 + $0x9e0] sm:$0xff]
        %v718 = vld [vmem:[%s264 + $0x9e8] sm:$0xff]
        %v719 = vld [vmem:[%s264 + $0x9f0] sm:$0xff]
        %v720 = vld [vmem:[%s264 + $0x9f8] sm:$0xff]
        %v721 = vld [vmem:[%s264 + $0xa00] sm:$0xff]
        %v722 = vld [vmem:[%s264 + $0xa08] sm:$0xff]
        %v723 = vld [vmem:[%s264 + $0xa10] sm:$0xff]
        %v724 = vld [vmem:[%s264 + $0xa18] sm:$0xff]
        %v725 = vld [vmem:[%s264 + $0xa20] sm:$0xff]
        %v726 = vld [vmem:[%s264 + $0xa28] sm:$0xff]
        %v727 = vld [vmem:[%s264 + $0xa30] sm:$0xff]
        %v728 = vld [vmem:[%s264 + $0xa38] sm:$0xff]
        %v729 = vld [vmem:[%s264 + $0xa40] sm:$0xff]
        %v730 = vld [vmem:[%s264 + $0xa48] sm:$0xff]
        %v731 = vld [vmem:[%s264 + $0xa50] sm:$0xff]
        %v732 = vld [vmem:[%s264 + $0xa58] sm:$0xff]
        %v733 = vld [vmem:[%s264 + $0xa60] sm:$0xff]
        %v734 = vld [vmem:[%s264 + $0xa68] sm:$0xff]
        %v735 = vld [vmem:[%s264 + $0xa70] sm:$0xff]
        %v736 = vld [vmem:[%s264 + $0xa78] sm:$0xff]
        %v737 = vld [vmem:[%s264 + $0xa80] sm:$0xff]
        %v738 = vld [vmem:[%s264 + $0xa88] sm:$0xff]
        %v739 = vld [vmem:[%s264 + $0xa90] sm:$0xff]
        %v740 = vld [vmem:[%s264 + $0xa98] sm:$0xff]
        %v741 = vld [vmem:[%s264 + $0xaa0] sm:$0xff]
        %v742 = vld [vmem:[%s264 + $0xaa8] sm:$0xff]
        %v743 = vld [vmem:[%s264 + $0xab0] sm:$0xff]
        %v744 = vld [vmem:[%s264 + $0xab8] sm:$0xff]
        %v745 = vld [vmem:[%s264 + $0xac0] sm:$0xff]
        %v746 = vld [vmem:[%s264 + $0xac8] sm:$0xff]
        %v747 = vld [vmem:[%s264 + $0xad0] sm:$0xff]
        %v748 = vld [vmem:[%s264 + $0xad8] sm:$0xff]
        %v749 = vld [vmem:[%s264 + $0xae0] sm:$0xff]
        %v750 = vld [vmem:[%s264 + $0xae8] sm:$0xff]
        %v751 = vld [vmem:[%s264 + $0xaf0] sm:$0xff]
        %v752 = vld [vmem:[%s264 + $0xaf8] sm:$0xff]
        %v753 = vld [vmem:[%s264 + $0xb00] sm:$0xff]
        %v754 = vld [vmem:[%s264 + $0xb08] sm:$0xff]
        %v755 = vld [vmem:[%s264 + $0xb10] sm:$0xff]
        %v756 = vld [vmem:[%s264 + $0xb18] sm:$0xff]
        %v757 = vld [vmem:[%s264 + $0xb20] sm:$0xff]
        %v758 = vld [vmem:[%s264 + $0xb28] sm:$0xff]
        %v759 = vld [vmem:[%s264 + $0xb30] sm:$0xff]
        %v760 = vld [vmem:[%s264 + $0xb38] sm:$0xff]
        %v761 = vld [vmem:[%s264 + $0xb40] sm:$0xff]
        %v762 = vld [vmem:[%s264 + $0xb48] sm:$0xff]
        %v763 = vld [vmem:[%s264 + $0xb50] sm:$0xff]
        %v764 = vld [vmem:[%s264 + $0xb58] sm:$0xff]
        %v765 = vld [vmem:[%s264 + $0xb60] sm:$0xff]
        %v766 = vld [vmem:[%s264 + $0xb68] sm:$0xff]
        %v767 = vld [vmem:[%s264 + $0xb70] sm:$0xff]
        %v768 = vld [vmem:[%s264 + $0xb78] sm:$0xff]
        %v769 = vld [vmem:[%s264 + $0xb80] sm:$0xff]
        %v770 = vld [vmem:[%s264 + $0xb88] sm:$0xff]
        %v771 = vld [vmem:[%s264 + $0xb90] sm:$0xff]
        %v772 = vld [vmem:[%s264 + $0xb98] sm:$0xff]
        %v773 = vld [vmem:[%s264 + $0xba0] sm:$0xff]
        %v774 = vld [vmem:[%s264 + $0xba8] sm:$0xff]
        %v775 = vld [vmem:[%s264 + $0xbb0] sm:$0xff]
        %v776 = vld [vmem:[%s264 + $0xbb8] sm:$0xff]
        %v777 = vld [vmem:[%s264 + $0xbc0] sm:$0xff]
        %v778 = vld [vmem:[%s264 + $0xbc8] sm:$0xff]
        %v779 = vld [vmem:[%s264 + $0xbd0] sm:$0xff]
        %v780 = vld [vmem:[%s264 + $0xbd8] sm:$0xff]
        %v781 = vld [vmem:[%s264 + $0xbe0] sm:$0xff]
        %v782 = vld [vmem:[%s264 + $0xbe8] sm:$0xff]
        %v783 = vld [vmem:[%s264 + $0xbf0] sm:$0xff]
        %v784 = vld [vmem:[%s264 + $0xbf8] sm:$0xff]
        %v785 = vld [vmem:[%s264 + $0xc00] sm:$0xff]
        %v786 = vld [vmem:[%s264 + $0xc08] sm:$0xff]
        %v787 = vld [vmem:[%s264 + $0xc10] sm:$0xff]
        %v788 = vld [vmem:[%s264 + $0xc18] sm:$0xff]
        %v789 = vld [vmem:[%s264 + $0xc20] sm:$0xff]
        %v790 = vld [vmem:[%s264 + $0xc28] sm:$0xff]
        %v791 = vld [vmem:[%s264 + $0xc30] sm:$0xff]
        %v792 = vld [vmem:[%s264 + $0xc38] sm:$0xff]
        %v793 = vld [vmem:[%s264 + $0xc40] sm:$0xff]
        %v794 = vld [vmem:[%s264 + $0xc48] sm:$0xff]
        %v795 = vld [vmem:[%s264 + $0xc50] sm:$0xff]
        %v796 = vld [vmem:[%s264 + $0xc58] sm:$0xff]
        %v797 = vld [vmem:[%s264 + $0xc60] sm:$0xff]
        %v798 = vld [vmem:[%s264 + $0xc68] sm:$0xff]
        %v799 = vld [vmem:[%s264 + $0xc70] sm:$0xff]
        %v800 = vld [vmem:[%s264 + $0xc78] sm:$0xff]
        %v801 = vld [vmem:[%s264 + $0xc80] sm:$0xff]
        %v802 = vld [vmem:[%s264 + $0xc88] sm:$0xff]
        %v803 = vld [vmem:[%s264 + $0xc90] sm:$0xff]
        %v804 = vld [vmem:[%s264 + $0xc98] sm:$0xff]
        %v805 = vld [vmem:[%s264 + $0xca0] sm:$0xff]
        %v806 = vld [vmem:[%s264 + $0xca8] sm:$0xff]
        %v807 = vld [vmem:[%s264 + $0xcb0] sm:$0xff]
        %v808 = vld [vmem:[%s264 + $0xcb8] sm:$0xff]
        %v809 = vld [vmem:[%s264 + $0xcc0] sm:$0xff]
        %v810 = vld [vmem:[%s264 + $0xcc8] sm:$0xff]
        %v811 = vld [vmem:[%s264 + $0xcd0] sm:$0xff]
        %v812 = vld [vmem:[%s264 + $0xcd8] sm:$0xff]
        %v813 = vld [vmem:[%s264 + $0xce0] sm:$0xff]
        %v814 = vld [vmem:[%s264 + $0xce8] sm:$0xff]
        %v815 = vld [vmem:[%s264 + $0xcf0] sm:$0xff]
        %v816 = vld [vmem:[%s264 + $0xcf8] sm:$0xff]
        %v817 = vld [vmem:[%s264 + $0xd00] sm:$0xff]
        %v818 = vld [vmem:[%s264 + $0xd08] sm:$0xff]
        %v819 = vld [vmem:[%s264 + $0xd10] sm:$0xff]
        %v820 = vld [vmem:[%s264 + $0xd18] sm:$0xff]
        %v821 = vld [vmem:[%s264 + $0xd20] sm:$0xff]
        %v822 = vld [vmem:[%s264 + $0xd28] sm:$0xff]
        %v823 = vld [vmem:[%s264 + $0xd30] sm:$0xff]
        %v824 = vld [vmem:[%s264 + $0xd38] sm:$0xff]
        %v825 = vld [vmem:[%s264 + $0xd40] sm:$0xff]
        %v826 = vld [vmem:[%s264 + $0xd48] sm:$0xff]
        %v827 = vld [vmem:[%s264 + $0xd50] sm:$0xff]
        %v828 = vld [vmem:[%s264 + $0xd58] sm:$0xff]
        %v829 = vld [vmem:[%s264 + $0xd60] sm:$0xff]
        %v830 = vld [vmem:[%s264 + $0xd68] sm:$0xff]
        %v831 = vld [vmem:[%s264 + $0xd70] sm:$0xff]
        %v832 = vld [vmem:[%s264 + $0xd78] sm:$0xff]
        %v833 = vld [vmem:[%s264 + $0xd80] sm:$0xff]
        %v834 = vld [vmem:[%s264 + $0xd88] sm:$0xff]
        %v835 = vld [vmem:[%s264 + $0xd90] sm:$0xff]
        %v836 = vld [vmem:[%s264 + $0xd98] sm:$0xff]
        %v837 = vld [vmem:[%s264 + $0xda0] sm:$0xff]
        %v838 = vld [vmem:[%s264 + $0xda8] sm:$0xff]
        %v839 = vld [vmem:[%s264 + $0xdb0] sm:$0xff]
        %v840 = vld [vmem:[%s264 + $0xdb8] sm:$0xff]
        %v841 = vld [vmem:[%s264 + $0xdc0] sm:$0xff]
        %v842 = vld [vmem:[%s264 + $0xdc8] sm:$0xff]
        %v843 = vld [vmem:[%s264 + $0xdd0] sm:$0xff]
        %v844 = vld [vmem:[%s264 + $0xdd8] sm:$0xff]
        %v845 = vld [vmem:[%s264 + $0xde0] sm:$0xff]
        %v846 = vld [vmem:[%s264 + $0xde8] sm:$0xff]
        %v847 = vld [vmem:[%s264 + $0xdf0] sm:$0xff]
        %v848 = vld [vmem:[%s264 + $0xdf8] sm:$0xff]
        %v849 = vld [vmem:[%s264 + $0xe00] sm:$0xff]
        %v850 = vld [vmem:[%s264 + $0xe08] sm:$0xff]
        %v851 = vld [vmem:[%s264 + $0xe10] sm:$0xff]
        %v852 = vld [vmem:[%s264 + $0xe18] sm:$0xff]
        %v853 = vld [vmem:[%s264 + $0xe20] sm:$0xff]
        %v854 = vld [vmem:[%s264 + $0xe28] sm:$0xff]
        %v855 = vld [vmem:[%s264 + $0xe30] sm:$0xff]
        %v856 = vld [vmem:[%s264 + $0xe38] sm:$0xff]
        %v857 = vld [vmem:[%s264 + $0xe40] sm:$0xff]
        %v858 = vld [vmem:[%s264 + $0xe48] sm:$0xff]
        %v859 = vld [vmem:[%s264 + $0xe50] sm:$0xff]
        %v860 = vld [vmem:[%s264 + $0xe58] sm:$0xff]
        %v861 = vld [vmem:[%s264 + $0xe60] sm:$0xff]
        %v862 = vld [vmem:[%s264 + $0xe68] sm:$0xff]
        %v863 = vld [vmem:[%s264 + $0xe70] sm:$0xff]
        %v864 = vld [vmem:[%s264 + $0xe78] sm:$0xff]
        %v865 = vld [vmem:[%s264 + $0xe80] sm:$0xff]
        %v866 = vld [vmem:[%s264 + $0xe88] sm:$0xff]
        %v867 = vld [vmem:[%s264 + $0xe90] sm:$0xff]
        %v868 = vld [vmem:[%s264 + $0xe98] sm:$0xff]
        %v869 = vld [vmem:[%s264 + $0xea0] sm:$0xff]
        %v870 = vld [vmem:[%s264 + $0xea8] sm:$0xff]
        %v871 = vld [vmem:[%s264 + $0xeb0] sm:$0xff]
        %v872 = vld [vmem:[%s264 + $0xeb8] sm:$0xff]
        %v873 = vld [vmem:[%s264 + $0xec0] sm:$0xff]
        %v874 = vld [vmem:[%s264 + $0xec8] sm:$0xff]
        %v875 = vld [vmem:[%s264 + $0xed0] sm:$0xff]
        %v876 = vld [vmem:[%s264 + $0xed8] sm:$0xff]
        %v877 = vld [vmem:[%s264 + $0xee0] sm:$0xff]
        %v878 = vld [vmem:[%s264 + $0xee8] sm:$0xff]
        %v879 = vld [vmem:[%s264 + $0xef0] sm:$0xff]
        %v880 = vld [vmem:[%s264 + $0xef8] sm:$0xff]
        %v881 = vld [vmem:[%s264 + $0xf00] sm:$0xff]
        %v882 = vld [vmem:[%s264 + $0xf08] sm:$0xff]
        %v883 = vld [vmem:[%s264 + $0xf10] sm:$0xff]
        %v884 = vld [vmem:[%s264 + $0xf18] sm:$0xff]
        %v885 = vld [vmem:[%s264 + $0xf20] sm:$0xff]
        %v886 = vld [vmem:[%s264 + $0xf28] sm:$0xff]
        %v887 = vld [vmem:[%s264 + $0xf30] sm:$0xff]
        %v888 = vld [vmem:[%s264 + $0xf38] sm:$0xff]
        %v889 = vld [vmem:[%s264 + $0xf40] sm:$0xff]
        %v890 = vld [vmem:[%s264 + $0xf48] sm:$0xff]
        %v891 = vld [vmem:[%s264 + $0xf50] sm:$0xff]
        %v892 = vld [vmem:[%s264 + $0xf58] sm:$0xff]
        %v893 = vld [vmem:[%s264 + $0xf60] sm:$0xff]
        %v894 = vld [vmem:[%s264 + $0xf68] sm:$0xff]
        %v895 = vld [vmem:[%s264 + $0xf70] sm:$0xff]
        %v896 = vld [vmem:[%s264 + $0xf78] sm:$0xff]
        %v897 = vld [vmem:[%s264 + $0xf80] sm:$0xff]
        %v898 = vld [vmem:[%s264 + $0xf88] sm:$0xff]
        %v899 = vld [vmem:[%s264 + $0xf90] sm:$0xff]
        %v900 = vld [vmem:[%s264 + $0xf98] sm:$0xff]
        %v901 = vld [vmem:[%s264 + $0xfa0] sm:$0xff]
        %v902 = vld [vmem:[%s264 + $0xfa8] sm:$0xff]
        %v903 = vld [vmem:[%s264 + $0xfb0] sm:$0xff]
        %v904 = vld [vmem:[%s264 + $0xfb8] sm:$0xff]
        %v905 = vld [vmem:[%s264 + $0xfc0] sm:$0xff]
        %v906 = vld [vmem:[%s264 + $0xfc8] sm:$0xff]
        %v907 = vld [vmem:[%s264 + $0xfd0] sm:$0xff]
        %v908 = vld [vmem:[%s264 + $0xfd8] sm:$0xff]
        %v909 = vld [vmem:[%s264 + $0xfe0] sm:$0xff]
        %v910 = vld [vmem:[%s264 + $0xfe8] sm:$0xff]
        %v911 = vld [vmem:[%s264 + $0xff0] sm:$0xff]
        %v912 = vld [vmem:[%s264 + $0xff8] sm:$0xff]
        %v1425 = vunpack.c.l.b16 %v401
        %v1426 = vunpack.c.h.b16 %v401
        %v1427 = vunpack.c.l.b16 %v402
        %v1428 = vunpack.c.h.b16 %v402
        %v1429 = vunpack.c.l.b16 %v403
        %v1430 = vunpack.c.h.b16 %v403
        %v1431 = vunpack.c.l.b16 %v404
        %v1432 = vunpack.c.h.b16 %v404
        %v1433 = vunpack.c.l.b16 %v405
        %v1434 = vunpack.c.h.b16 %v405
        %v1435 = vunpack.c.l.b16 %v406
        %v1436 = vunpack.c.h.b16 %v406
        %v1437 = vunpack.c.l.b16 %v407
        %v1438 = vunpack.c.h.b16 %v407
        %v1439 = vunpack.c.l.b16 %v408
        %v1440 = vunpack.c.h.b16 %v408
        %v1441 = vunpack.c.l.b16 %v409
        %v1442 = vunpack.c.h.b16 %v409
        %v1443 = vunpack.c.l.b16 %v410
        %v1444 = vunpack.c.h.b16 %v410
        %v1445 = vunpack.c.l.b16 %v411
        %v1446 = vunpack.c.h.b16 %v411
        %v1447 = vunpack.c.l.b16 %v412
        %v1448 = vunpack.c.h.b16 %v412
        %v1449 = vunpack.c.l.b16 %v413
        %v1450 = vunpack.c.h.b16 %v413
        %v1451 = vunpack.c.l.b16 %v414
        %v1452 = vunpack.c.h.b16 %v414
        %v1453 = vunpack.c.l.b16 %v415
        %v1454 = vunpack.c.h.b16 %v415
        %v1455 = vunpack.c.l.b16 %v416
        %v1456 = vunpack.c.h.b16 %v416
        %v1457 = vunpack.c.l.b16 %v417
        %v1458 = vunpack.c.h.b16 %v417
        %v1459 = vunpack.c.l.b16 %v418
        %v1460 = vunpack.c.h.b16 %v418
        %v1461 = vunpack.c.l.b16 %v419
        %v1462 = vunpack.c.h.b16 %v419
        %v1463 = vunpack.c.l.b16 %v420
        %v1464 = vunpack.c.h.b16 %v420
        %v1465 = vunpack.c.l.b16 %v421
        %v1466 = vunpack.c.h.b16 %v421
        %v1467 = vunpack.c.l.b16 %v422
        %v1468 = vunpack.c.h.b16 %v422
        %v1469 = vunpack.c.l.b16 %v423
        %v1470 = vunpack.c.h.b16 %v423
        %v1471 = vunpack.c.l.b16 %v424
        %v1472 = vunpack.c.h.b16 %v424
        %v1473 = vunpack.c.l.b16 %v425
        %v1474 = vunpack.c.h.b16 %v425
        %v1475 = vunpack.c.l.b16 %v426
        %v1476 = vunpack.c.h.b16 %v426
        %v1477 = vunpack.c.l.b16 %v427
        %v1478 = vunpack.c.h.b16 %v427
        %v1479 = vunpack.c.l.b16 %v428
        %v1480 = vunpack.c.h.b16 %v428
        %v1481 = vunpack.c.l.b16 %v429
        %v1482 = vunpack.c.h.b16 %v429
        %v1483 = vunpack.c.l.b16 %v430
        %v1484 = vunpack.c.h.b16 %v430
        %v1485 = vunpack.c.l.b16 %v431
        %v1486 = vunpack.c.h.b16 %v431
        %v1487 = vunpack.c.l.b16 %v432
        %v1488 = vunpack.c.h.b16 %v432
        %v1489 = vunpack.c.l.b16 %v433
        %v1490 = vunpack.c.h.b16 %v433
        %v1491 = vunpack.c.l.b16 %v434
        %v1492 = vunpack.c.h.b16 %v434
        %v1493 = vunpack.c.l.b16 %v435
        %v1494 = vunpack.c.h.b16 %v435
        %v1495 = vunpack.c.l.b16 %v436
        %v1496 = vunpack.c.h.b16 %v436
        %v1497 = vunpack.c.l.b16 %v437
        %v1498 = vunpack.c.h.b16 %v437
        %v1499 = vunpack.c.l.b16 %v438
        %v1500 = vunpack.c.h.b16 %v438
        %v1501 = vunpack.c.l.b16 %v439
        %v1502 = vunpack.c.h.b16 %v439
        %v1503 = vunpack.c.l.b16 %v440
        %v1504 = vunpack.c.h.b16 %v440
        %v1505 = vunpack.c.l.b16 %v441
        %v1506 = vunpack.c.h.b16 %v441
        %v1507 = vunpack.c.l.b16 %v442
        %v1508 = vunpack.c.h.b16 %v442
        %v1509 = vunpack.c.l.b16 %v443
        %v1510 = vunpack.c.h.b16 %v443
        %v1511 = vunpack.c.l.b16 %v444
        %v1512 = vunpack.c.h.b16 %v444
        %v1513 = vunpack.c.l.b16 %v445
        %v1514 = vunpack.c.h.b16 %v445
        %v1515 = vunpack.c.l.b16 %v446
        %v1516 = vunpack.c.h.b16 %v446
        %v1517 = vunpack.c.l.b16 %v447
        %v1518 = vunpack.c.h.b16 %v447
        %v1519 = vunpack.c.l.b16 %v448
        %v1520 = vunpack.c.h.b16 %v448
        %v1521 = vunpack.c.l.b16 %v449
        %v1522 = vunpack.c.h.b16 %v449
        %v1523 = vunpack.c.l.b16 %v450
        %v1524 = vunpack.c.h.b16 %v450
        %v1525 = vunpack.c.l.b16 %v451
        %v1526 = vunpack.c.h.b16 %v451
        %v1527 = vunpack.c.l.b16 %v452
        %v1528 = vunpack.c.h.b16 %v452
        %v1529 = vunpack.c.l.b16 %v453
        %v1530 = vunpack.c.h.b16 %v453
        %v1531 = vunpack.c.l.b16 %v454
        %v1532 = vunpack.c.h.b16 %v454
        %v1533 = vunpack.c.l.b16 %v455
        %v1534 = vunpack.c.h.b16 %v455
        %v1535 = vunpack.c.l.b16 %v456
        %v1536 = vunpack.c.h.b16 %v456
        %v1537 = vunpack.c.l.b16 %v457
        %v1538 = vunpack.c.h.b16 %v457
        %v1539 = vunpack.c.l.b16 %v458
        %v1540 = vunpack.c.h.b16 %v458
        %v1541 = vunpack.c.l.b16 %v459
        %v1542 = vunpack.c.h.b16 %v459
        %v1543 = vunpack.c.l.b16 %v460
        %v1544 = vunpack.c.h.b16 %v460
        %v1545 = vunpack.c.l.b16 %v461
        %v1546 = vunpack.c.h.b16 %v461
        %v1547 = vunpack.c.l.b16 %v462
        %v1548 = vunpack.c.h.b16 %v462
        %v1549 = vunpack.c.l.b16 %v463
        %v1550 = vunpack.c.h.b16 %v463
        %v1551 = vunpack.c.l.b16 %v464
        %v1552 = vunpack.c.h.b16 %v464
        %v1553 = vunpack.c.l.b16 %v465
        %v1554 = vunpack.c.h.b16 %v465
        %v1555 = vunpack.c.l.b16 %v466
        %v1556 = vunpack.c.h.b16 %v466
        %v1557 = vunpack.c.l.b16 %v467
        %v1558 = vunpack.c.h.b16 %v467
        %v1559 = vunpack.c.l.b16 %v468
        %v1560 = vunpack.c.h.b16 %v468
        %v1561 = vunpack.c.l.b16 %v469
        %v1562 = vunpack.c.h.b16 %v469
        %v1563 = vunpack.c.l.b16 %v470
        %v1564 = vunpack.c.h.b16 %v470
        %v1565 = vunpack.c.l.b16 %v471
        %v1566 = vunpack.c.h.b16 %v471
        %v1567 = vunpack.c.l.b16 %v472
        %v1568 = vunpack.c.h.b16 %v472
        %v1569 = vunpack.c.l.b16 %v473
        %v1570 = vunpack.c.h.b16 %v473
        %v1571 = vunpack.c.l.b16 %v474
        %v1572 = vunpack.c.h.b16 %v474
        %v1573 = vunpack.c.l.b16 %v475
        %v1574 = vunpack.c.h.b16 %v475
        %v1575 = vunpack.c.l.b16 %v476
        %v1576 = vunpack.c.h.b16 %v476
        %v1577 = vunpack.c.l.b16 %v477
        %v1578 = vunpack.c.h.b16 %v477
        %v1579 = vunpack.c.l.b16 %v478
        %v1580 = vunpack.c.h.b16 %v478
        %v1581 = vunpack.c.l.b16 %v479
        %v1582 = vunpack.c.h.b16 %v479
        %v1583 = vunpack.c.l.b16 %v480
        %v1584 = vunpack.c.h.b16 %v480
        %v1585 = vunpack.c.l.b16 %v481
        %v1586 = vunpack.c.h.b16 %v481
        %v1587 = vunpack.c.l.b16 %v482
        %v1588 = vunpack.c.h.b16 %v482
        %v1589 = vunpack.c.l.b16 %v483
        %v1590 = vunpack.c.h.b16 %v483
        %v1591 = vunpack.c.l.b16 %v484
        %v1592 = vunpack.c.h.b16 %v484
        %v1593 = vunpack.c.l.b16 %v485
        %v1594 = vunpack.c.h.b16 %v485
        %v1595 = vunpack.c.l.b16 %v486
        %v1596 = vunpack.c.h.b16 %v486
        %v1597 = vunpack.c.l.b16 %v487
        %v1598 = vunpack.c.h.b16 %v487
        %v1599 = vunpack.c.l.b16 %v488
        %v1600 = vunpack.c.h.b16 %v488
        %v1601 = vunpack.c.l.b16 %v489
        %v1602 = vunpack.c.h.b16 %v489
        %v1603 = vunpack.c.l.b16 %v490
        %v1604 = vunpack.c.h.b16 %v490
        %v1605 = vunpack.c.l.b16 %v491
        %v1606 = vunpack.c.h.b16 %v491
        %v1607 = vunpack.c.l.b16 %v492
        %v1608 = vunpack.c.h.b16 %v492
        %v1609 = vunpack.c.l.b16 %v493
        %v1610 = vunpack.c.h.b16 %v493
        %v1611 = vunpack.c.l.b16 %v494
        %v1612 = vunpack.c.h.b16 %v494
        %v1613 = vunpack.c.l.b16 %v495
        %v1614 = vunpack.c.h.b16 %v495
        %v1615 = vunpack.c.l.b16 %v496
        %v1616 = vunpack.c.h.b16 %v496
        %v1617 = vunpack.c.l.b16 %v497
        %v1618 = vunpack.c.h.b16 %v497
        %v1619 = vunpack.c.l.b16 %v498
        %v1620 = vunpack.c.h.b16 %v498
        %v1621 = vunpack.c.l.b16 %v499
        %v1622 = vunpack.c.h.b16 %v499
        %v1623 = vunpack.c.l.b16 %v500
        %v1624 = vunpack.c.h.b16 %v500
        %v1625 = vunpack.c.l.b16 %v501
        %v1626 = vunpack.c.h.b16 %v501
        %v1627 = vunpack.c.l.b16 %v502
        %v1628 = vunpack.c.h.b16 %v502
        %v1629 = vunpack.c.l.b16 %v503
        %v1630 = vunpack.c.h.b16 %v503
        %v1631 = vunpack.c.l.b16 %v504
        %v1632 = vunpack.c.h.b16 %v504
        %v1633 = vunpack.c.l.b16 %v505
        %v1634 = vunpack.c.h.b16 %v505
        %v1635 = vunpack.c.l.b16 %v506
        %v1636 = vunpack.c.h.b16 %v506
        %v1637 = vunpack.c.l.b16 %v507
        %v1638 = vunpack.c.h.b16 %v507
        %v1639 = vunpack.c.l.b16 %v508
        %v1640 = vunpack.c.h.b16 %v508
        %v1641 = vunpack.c.l.b16 %v509
        %v1642 = vunpack.c.h.b16 %v509
        %v1643 = vunpack.c.l.b16 %v510
        %v1644 = vunpack.c.h.b16 %v510
        %v1645 = vunpack.c.l.b16 %v511
        %v1646 = vunpack.c.h.b16 %v511
        %v1647 = vunpack.c.l.b16 %v512
        %v1648 = vunpack.c.h.b16 %v512
        %v1649 = vunpack.c.l.b16 %v513
        %v1650 = vunpack.c.h.b16 %v513
        %v1651 = vunpack.c.l.b16 %v514
        %v1652 = vunpack.c.h.b16 %v514
        %v1653 = vunpack.c.l.b16 %v515
        %v1654 = vunpack.c.h.b16 %v515
        %v1655 = vunpack.c.l.b16 %v516
        %v1656 = vunpack.c.h.b16 %v516
        %v1657 = vunpack.c.l.b16 %v517
        %v1658 = vunpack.c.h.b16 %v517
        %v1659 = vunpack.c.l.b16 %v518
        %v1660 = vunpack.c.h.b16 %v518
        %v1661 = vunpack.c.l.b16 %v519
        %v1662 = vunpack.c.h.b16 %v519
        %v1663 = vunpack.c.l.b16 %v520
        %v1664 = vunpack.c.h.b16 %v520
        %v1665 = vunpack.c.l.b16 %v521
        %v1666 = vunpack.c.h.b16 %v521
        %v1667 = vunpack.c.l.b16 %v522
        %v1668 = vunpack.c.h.b16 %v522
        %v1669 = vunpack.c.l.b16 %v523
        %v1670 = vunpack.c.h.b16 %v523
        %v1671 = vunpack.c.l.b16 %v524
        %v1672 = vunpack.c.h.b16 %v524
        %v1673 = vunpack.c.l.b16 %v525
        %v1674 = vunpack.c.h.b16 %v525
        %v1675 = vunpack.c.l.b16 %v526
        %v1676 = vunpack.c.h.b16 %v526
        %v1677 = vunpack.c.l.b16 %v527
        %v1678 = vunpack.c.h.b16 %v527
        %v1679 = vunpack.c.l.b16 %v528
        %v1680 = vunpack.c.h.b16 %v528
        %v1681 = vunpack.c.l.b16 %v529
        %v1682 = vunpack.c.h.b16 %v529
        %v1683 = vunpack.c.l.b16 %v530
        %v1684 = vunpack.c.h.b16 %v530
        %v1685 = vunpack.c.l.b16 %v531
        %v1686 = vunpack.c.h.b16 %v531
        %v1687 = vunpack.c.l.b16 %v532
        %v1688 = vunpack.c.h.b16 %v532
        %v1689 = vunpack.c.l.b16 %v533
        %v1690 = vunpack.c.h.b16 %v533
        %v1691 = vunpack.c.l.b16 %v534
        %v1692 = vunpack.c.h.b16 %v534
        %v1693 = vunpack.c.l.b16 %v535
        %v1694 = vunpack.c.h.b16 %v535
        %v1695 = vunpack.c.l.b16 %v536
        %v1696 = vunpack.c.h.b16 %v536
        %v1697 = vunpack.c.l.b16 %v537
        %v1698 = vunpack.c.h.b16 %v537
        %v1699 = vunpack.c.l.b16 %v538
        %v1700 = vunpack.c.h.b16 %v538
        %v1701 = vunpack.c.l.b16 %v539
        %v1702 = vunpack.c.h.b16 %v539
        %v1703 = vunpack.c.l.b16 %v540
        %v1704 = vunpack.c.h.b16 %v540
        %v1705 = vunpack.c.l.b16 %v541
        %v1706 = vunpack.c.h.b16 %v541
        %v1707 = vunpack.c.l.b16 %v542
        %v1708 = vunpack.c.h.b16 %v542
        %v1709 = vunpack.c.l.b16 %v543
        %v1710 = vunpack.c.h.b16 %v543
        %v1711 = vunpack.c.l.b16 %v544
        %v1712 = vunpack.c.h.b16 %v544
        %v1713 = vunpack.c.l.b16 %v545
        %v1714 = vunpack.c.h.b16 %v545
        %v1715 = vunpack.c.l.b16 %v546
        %v1716 = vunpack.c.h.b16 %v546
        %v1717 = vunpack.c.l.b16 %v547
        %v1718 = vunpack.c.h.b16 %v547
        %v1719 = vunpack.c.l.b16 %v548
        %v1720 = vunpack.c.h.b16 %v548
        %v1721 = vunpack.c.l.b16 %v549
        %v1722 = vunpack.c.h.b16 %v549
        %v1723 = vunpack.c.l.b16 %v550
        %v1724 = vunpack.c.h.b16 %v550
        %v1725 = vunpack.c.l.b16 %v551
        %v1726 = vunpack.c.h.b16 %v551
        %v1727 = vunpack.c.l.b16 %v552
        %v1728 = vunpack.c.h.b16 %v552
        %v1729 = vunpack.c.l.b16 %v553
        %v1730 = vunpack.c.h.b16 %v553
        %v1731 = vunpack.c.l.b16 %v554
        %v1732 = vunpack.c.h.b16 %v554
        %v1733 = vunpack.c.l.b16 %v555
        %v1734 = vunpack.c.h.b16 %v555
        %v1735 = vunpack.c.l.b16 %v556
        %v1736 = vunpack.c.h.b16 %v556
        %v1737 = vunpack.c.l.b16 %v557
        %v1738 = vunpack.c.h.b16 %v557
        %v1739 = vunpack.c.l.b16 %v558
        %v1740 = vunpack.c.h.b16 %v558
        %v1741 = vunpack.c.l.b16 %v559
        %v1742 = vunpack.c.h.b16 %v559
        %v1743 = vunpack.c.l.b16 %v560
        %v1744 = vunpack.c.h.b16 %v560
        %v1745 = vunpack.c.l.b16 %v561
        %v1746 = vunpack.c.h.b16 %v561
        %v1747 = vunpack.c.l.b16 %v562
        %v1748 = vunpack.c.h.b16 %v562
        %v1749 = vunpack.c.l.b16 %v563
        %v1750 = vunpack.c.h.b16 %v563
        %v1751 = vunpack.c.l.b16 %v564
        %v1752 = vunpack.c.h.b16 %v564
        %v1753 = vunpack.c.l.b16 %v565
        %v1754 = vunpack.c.h.b16 %v565
        %v1755 = vunpack.c.l.b16 %v566
        %v1756 = vunpack.c.h.b16 %v566
        %v1757 = vunpack.c.l.b16 %v567
        %v1758 = vunpack.c.h.b16 %v567
        %v1759 = vunpack.c.l.b16 %v568
        %v1760 = vunpack.c.h.b16 %v568
        %v1761 = vunpack.c.l.b16 %v569
        %v1762 = vunpack.c.h.b16 %v569
        %v1763 = vunpack.c.l.b16 %v570
        %v1764 = vunpack.c.h.b16 %v570
        %v1765 = vunpack.c.l.b16 %v571
        %v1766 = vunpack.c.h.b16 %v571
        %v1767 = vunpack.c.l.b16 %v572
        %v1768 = vunpack.c.h.b16 %v572
        %v1769 = vunpack.c.l.b16 %v573
        %v1770 = vunpack.c.h.b16 %v573
        %v1771 = vunpack.c.l.b16 %v574
        %v1772 = vunpack.c.h.b16 %v574
        %v1773 = vunpack.c.l.b16 %v575
        %v1774 = vunpack.c.h.b16 %v575
        %v1775 = vunpack.c.l.b16 %v576
        %v1776 = vunpack.c.h.b16 %v576
        %v1777 = vunpack.c.l.b16 %v577
        %v1778 = vunpack.c.h.b16 %v577
        %v1779 = vunpack.c.l.b16 %v578
        %v1780 = vunpack.c.h.b16 %v578
        %v1781 = vunpack.c.l.b16 %v579
        %v1782 = vunpack.c.h.b16 %v579
        %v1783 = vunpack.c.l.b16 %v580
        %v1784 = vunpack.c.h.b16 %v580
        %v1785 = vunpack.c.l.b16 %v581
        %v1786 = vunpack.c.h.b16 %v581
        %v1787 = vunpack.c.l.b16 %v582
        %v1788 = vunpack.c.h.b16 %v582
        %v1789 = vunpack.c.l.b16 %v583
        %v1790 = vunpack.c.h.b16 %v583
        %v1791 = vunpack.c.l.b16 %v584
        %v1792 = vunpack.c.h.b16 %v584
        %v1793 = vunpack.c.l.b16 %v585
        %v1794 = vunpack.c.h.b16 %v585
        %v1795 = vunpack.c.l.b16 %v586
        %v1796 = vunpack.c.h.b16 %v586
        %v1797 = vunpack.c.l.b16 %v587
        %v1798 = vunpack.c.h.b16 %v587
        %v1799 = vunpack.c.l.b16 %v588
        %v1800 = vunpack.c.h.b16 %v588
        %v1801 = vunpack.c.l.b16 %v589
        %v1802 = vunpack.c.h.b16 %v589
        %v1803 = vunpack.c.l.b16 %v590
        %v1804 = vunpack.c.h.b16 %v590
        %v1805 = vunpack.c.l.b16 %v591
        %v1806 = vunpack.c.h.b16 %v591
        %v1807 = vunpack.c.l.b16 %v592
        %v1808 = vunpack.c.h.b16 %v592
        %v1809 = vunpack.c.l.b16 %v593
        %v1810 = vunpack.c.h.b16 %v593
        %v1811 = vunpack.c.l.b16 %v594
        %v1812 = vunpack.c.h.b16 %v594
        %v1813 = vunpack.c.l.b16 %v595
        %v1814 = vunpack.c.h.b16 %v595
        %v1815 = vunpack.c.l.b16 %v596
        %v1816 = vunpack.c.h.b16 %v596
        %v1817 = vunpack.c.l.b16 %v597
        %v1818 = vunpack.c.h.b16 %v597
        %v1819 = vunpack.c.l.b16 %v598
        %v1820 = vunpack.c.h.b16 %v598
        %v1821 = vunpack.c.l.b16 %v599
        %v1822 = vunpack.c.h.b16 %v599
        %v1823 = vunpack.c.l.b16 %v600
        %v1824 = vunpack.c.h.b16 %v600
        %v1825 = vunpack.c.l.b16 %v601
        %v1826 = vunpack.c.h.b16 %v601
        %v1827 = vunpack.c.l.b16 %v602
        %v1828 = vunpack.c.h.b16 %v602
        %v1829 = vunpack.c.l.b16 %v603
        %v1830 = vunpack.c.h.b16 %v603
        %v1831 = vunpack.c.l.b16 %v604
        %v1832 = vunpack.c.h.b16 %v604
        %v1833 = vunpack.c.l.b16 %v605
        %v1834 = vunpack.c.h.b16 %v605
        %v1835 = vunpack.c.l.b16 %v606
        %v1836 = vunpack.c.h.b16 %v606
        %v1837 = vunpack.c.l.b16 %v607
        %v1838 = vunpack.c.h.b16 %v607
        %v1839 = vunpack.c.l.b16 %v608
        %v1840 = vunpack.c.h.b16 %v608
        %v1841 = vunpack.c.l.b16 %v609
        %v1842 = vunpack.c.h.b16 %v609
        %v1843 = vunpack.c.l.b16 %v610
        %v1844 = vunpack.c.h.b16 %v610
        %v1845 = vunpack.c.l.b16 %v611
        %v1846 = vunpack.c.h.b16 %v611
        %v1847 = vunpack.c.l.b16 %v612
        %v1848 = vunpack.c.h.b16 %v612
        %v1849 = vunpack.c.l.b16 %v613
        %v1850 = vunpack.c.h.b16 %v613
        %v1851 = vunpack.c.l.b16 %v614
        %v1852 = vunpack.c.h.b16 %v614
        %v1853 = vunpack.c.l.b16 %v615
        %v1854 = vunpack.c.h.b16 %v615
        %v1855 = vunpack.c.l.b16 %v616
        %v1856 = vunpack.c.h.b16 %v616
        %v1857 = vunpack.c.l.b16 %v617
        %v1858 = vunpack.c.h.b16 %v617
        %v1859 = vunpack.c.l.b16 %v618
        %v1860 = vunpack.c.h.b16 %v618
        %v1861 = vunpack.c.l.b16 %v619
        %v1862 = vunpack.c.h.b16 %v619
        %v1863 = vunpack.c.l.b16 %v620
        %v1864 = vunpack.c.h.b16 %v620
        %v1865 = vunpack.c.l.b16 %v621
        %v1866 = vunpack.c.h.b16 %v621
        %v1867 = vunpack.c.l.b16 %v622
        %v1868 = vunpack.c.h.b16 %v622
        %v1869 = vunpack.c.l.b16 %v623
        %v1870 = vunpack.c.h.b16 %v623
        %v1871 = vunpack.c.l.b16 %v624
        %v1872 = vunpack.c.h.b16 %v624
        %v1873 = vunpack.c.l.b16 %v625
        %v1874 = vunpack.c.h.b16 %v625
        %v1875 = vunpack.c.l.b16 %v626
        %v1876 = vunpack.c.h.b16 %v626
        %v1877 = vunpack.c.l.b16 %v627
        %v1878 = vunpack.c.h.b16 %v627
        %v1879 = vunpack.c.l.b16 %v628
        %v1880 = vunpack.c.h.b16 %v628
        %v1881 = vunpack.c.l.b16 %v629
        %v1882 = vunpack.c.h.b16 %v629
        %v1883 = vunpack.c.l.b16 %v630
        %v1884 = vunpack.c.h.b16 %v630
        %v1885 = vunpack.c.l.b16 %v631
        %v1886 = vunpack.c.h.b16 %v631
        %v1887 = vunpack.c.l.b16 %v632
        %v1888 = vunpack.c.h.b16 %v632
        %v1889 = vunpack.c.l.b16 %v633
        %v1890 = vunpack.c.h.b16 %v633
        %v1891 = vunpack.c.l.b16 %v634
        %v1892 = vunpack.c.h.b16 %v634
        %v1893 = vunpack.c.l.b16 %v635
        %v1894 = vunpack.c.h.b16 %v635
        %v1895 = vunpack.c.l.b16 %v636
        %v1896 = vunpack.c.h.b16 %v636
        %v1897 = vunpack.c.l.b16 %v637
        %v1898 = vunpack.c.h.b16 %v637
        %v1899 = vunpack.c.l.b16 %v638
        %v1900 = vunpack.c.h.b16 %v638
        %v1901 = vunpack.c.l.b16 %v639
        %v1902 = vunpack.c.h.b16 %v639
        %v1903 = vunpack.c.l.b16 %v640
        %v1904 = vunpack.c.h.b16 %v640
        %v1905 = vunpack.c.l.b16 %v641
        %v1906 = vunpack.c.h.b16 %v641
        %v1907 = vunpack.c.l.b16 %v642
        %v1908 = vunpack.c.h.b16 %v642
        %v1909 = vunpack.c.l.b16 %v643
        %v1910 = vunpack.c.h.b16 %v643
        %v1911 = vunpack.c.l.b16 %v644
        %v1912 = vunpack.c.h.b16 %v644
        %v1913 = vunpack.c.l.b16 %v645
        %v1914 = vunpack.c.h.b16 %v645
        %v1915 = vunpack.c.l.b16 %v646
        %v1916 = vunpack.c.h.b16 %v646
        %v1917 = vunpack.c.l.b16 %v647
        %v1918 = vunpack.c.h.b16 %v647
        %v1919 = vunpack.c.l.b16 %v648
        %v1920 = vunpack.c.h.b16 %v648
        %v1921 = vunpack.c.l.b16 %v649
        %v1922 = vunpack.c.h.b16 %v649
        %v1923 = vunpack.c.l.b16 %v650
        %v1924 = vunpack.c.h.b16 %v650
        %v1925 = vunpack.c.l.b16 %v651
        %v1926 = vunpack.c.h.b16 %v651
        %v1927 = vunpack.c.l.b16 %v652
        %v1928 = vunpack.c.h.b16 %v652
        %v1929 = vunpack.c.l.b16 %v653
        %v1930 = vunpack.c.h.b16 %v653
        %v1931 = vunpack.c.l.b16 %v654
        %v1932 = vunpack.c.h.b16 %v654
        %v1933 = vunpack.c.l.b16 %v655
        %v1934 = vunpack.c.h.b16 %v655
        %v1935 = vunpack.c.l.b16 %v656
        %v1936 = vunpack.c.h.b16 %v656
        %v1937 = vunpack.c.l.b16 %v657
        %v1938 = vunpack.c.h.b16 %v657
        %v1939 = vunpack.c.l.b16 %v658
        %v1940 = vunpack.c.h.b16 %v658
        %v1941 = vunpack.c.l.b16 %v659
        %v1942 = vunpack.c.h.b16 %v659
        %v1943 = vunpack.c.l.b16 %v660
        %v1944 = vunpack.c.h.b16 %v660
        %v1945 = vunpack.c.l.b16 %v661
        %v1946 = vunpack.c.h.b16 %v661
        %v1947 = vunpack.c.l.b16 %v662
        %v1948 = vunpack.c.h.b16 %v662
        %v1949 = vunpack.c.l.b16 %v663
        %v1950 = vunpack.c.h.b16 %v663
        %v1951 = vunpack.c.l.b16 %v664
        %v1952 = vunpack.c.h.b16 %v664
        %v1953 = vunpack.c.l.b16 %v665
        %v1954 = vunpack.c.h.b16 %v665
        %v1955 = vunpack.c.l.b16 %v666
        %v1956 = vunpack.c.h.b16 %v666
        %v1957 = vunpack.c.l.b16 %v667
        %v1958 = vunpack.c.h.b16 %v667
        %v1959 = vunpack.c.l.b16 %v668
        %v1960 = vunpack.c.h.b16 %v668
        %v1961 = vunpack.c.l.b16 %v669
        %v1962 = vunpack.c.h.b16 %v669
        %v1963 = vunpack.c.l.b16 %v670
        %v1964 = vunpack.c.h.b16 %v670
        %v1965 = vunpack.c.l.b16 %v671
        %v1966 = vunpack.c.h.b16 %v671
        %v1967 = vunpack.c.l.b16 %v672
        %v1968 = vunpack.c.h.b16 %v672
        %v1969 = vunpack.c.l.b16 %v673
        %v1970 = vunpack.c.h.b16 %v673
        %v1971 = vunpack.c.l.b16 %v674
        %v1972 = vunpack.c.h.b16 %v674
        %v1973 = vunpack.c.l.b16 %v675
        %v1974 = vunpack.c.h.b16 %v675
        %v1975 = vunpack.c.l.b16 %v676
        %v1976 = vunpack.c.h.b16 %v676
        %v1977 = vunpack.c.l.b16 %v677
        %v1978 = vunpack.c.h.b16 %v677
        %v1979 = vunpack.c.l.b16 %v678
        %v1980 = vunpack.c.h.b16 %v678
        %v1981 = vunpack.c.l.b16 %v679
        %v1982 = vunpack.c.h.b16 %v679
        %v1983 = vunpack.c.l.b16 %v680
        %v1984 = vunpack.c.h.b16 %v680
        %v1985 = vunpack.c.l.b16 %v681
        %v1986 = vunpack.c.h.b16 %v681
        %v1987 = vunpack.c.l.b16 %v682
        %v1988 = vunpack.c.h.b16 %v682
        %v1989 = vunpack.c.l.b16 %v683
        %v1990 = vunpack.c.h.b16 %v683
        %v1991 = vunpack.c.l.b16 %v684
        %v1992 = vunpack.c.h.b16 %v684
        %v1993 = vunpack.c.l.b16 %v685
        %v1994 = vunpack.c.h.b16 %v685
        %v1995 = vunpack.c.l.b16 %v686
        %v1996 = vunpack.c.h.b16 %v686
        %v1997 = vunpack.c.l.b16 %v687
        %v1998 = vunpack.c.h.b16 %v687
        %v1999 = vunpack.c.l.b16 %v688
        %v2000 = vunpack.c.h.b16 %v688
        %v2001 = vunpack.c.l.b16 %v689
        %v2002 = vunpack.c.h.b16 %v689
        %v2003 = vunpack.c.l.b16 %v690
        %v2004 = vunpack.c.h.b16 %v690
        %v2005 = vunpack.c.l.b16 %v691
        %v2006 = vunpack.c.h.b16 %v691
        %v2007 = vunpack.c.l.b16 %v692
        %v2008 = vunpack.c.h.b16 %v692
        %v2009 = vunpack.c.l.b16 %v693
        %v2010 = vunpack.c.h.b16 %v693
        %v2011 = vunpack.c.l.b16 %v694
        %v2012 = vunpack.c.h.b16 %v694
        %v2013 = vunpack.c.l.b16 %v695
        %v2014 = vunpack.c.h.b16 %v695
        %v2015 = vunpack.c.l.b16 %v696
        %v2016 = vunpack.c.h.b16 %v696
        %v2017 = vunpack.c.l.b16 %v697
        %v2018 = vunpack.c.h.b16 %v697
        %v2019 = vunpack.c.l.b16 %v698
        %v2020 = vunpack.c.h.b16 %v698
        %v2021 = vunpack.c.l.b16 %v699
        %v2022 = vunpack.c.h.b16 %v699
        %v2023 = vunpack.c.l.b16 %v700
        %v2024 = vunpack.c.h.b16 %v700
        %v2025 = vunpack.c.l.b16 %v701
        %v2026 = vunpack.c.h.b16 %v701
        %v2027 = vunpack.c.l.b16 %v702
        %v2028 = vunpack.c.h.b16 %v702
        %v2029 = vunpack.c.l.b16 %v703
        %v2030 = vunpack.c.h.b16 %v703
        %v2031 = vunpack.c.l.b16 %v704
        %v2032 = vunpack.c.h.b16 %v704
        %v2033 = vunpack.c.l.b16 %v705
        %v2034 = vunpack.c.h.b16 %v705
        %v2035 = vunpack.c.l.b16 %v706
        %v2036 = vunpack.c.h.b16 %v706
        %v2037 = vunpack.c.l.b16 %v707
        %v2038 = vunpack.c.h.b16 %v707
        %v2039 = vunpack.c.l.b16 %v708
        %v2040 = vunpack.c.h.b16 %v708
        %v2041 = vunpack.c.l.b16 %v709
        %v2042 = vunpack.c.h.b16 %v709
        %v2043 = vunpack.c.l.b16 %v710
        %v2044 = vunpack.c.h.b16 %v710
        %v2045 = vunpack.c.l.b16 %v711
        %v2046 = vunpack.c.h.b16 %v711
        %v2047 = vunpack.c.l.b16 %v712
        %v2048 = vunpack.c.h.b16 %v712
        %v2049 = vunpack.c.l.b16 %v713
        %v2050 = vunpack.c.h.b16 %v713
        %v2051 = vunpack.c.l.b16 %v714
        %v2052 = vunpack.c.h.b16 %v714
        %v2053 = vunpack.c.l.b16 %v715
        %v2054 = vunpack.c.h.b16 %v715
        %v2055 = vunpack.c.l.b16 %v716
        %v2056 = vunpack.c.h.b16 %v716
        %v2057 = vunpack.c.l.b16 %v717
        %v2058 = vunpack.c.h.b16 %v717
        %v2059 = vunpack.c.l.b16 %v718
        %v2060 = vunpack.c.h.b16 %v718
        %v2061 = vunpack.c.l.b16 %v719
        %v2062 = vunpack.c.h.b16 %v719
        %v2063 = vunpack.c.l.b16 %v720
        %v2064 = vunpack.c.h.b16 %v720
        %v2065 = vunpack.c.l.b16 %v721
        %v2066 = vunpack.c.h.b16 %v721
        %v2067 = vunpack.c.l.b16 %v722
        %v2068 = vunpack.c.h.b16 %v722
        %v2069 = vunpack.c.l.b16 %v723
        %v2070 = vunpack.c.h.b16 %v723
        %v2071 = vunpack.c.l.b16 %v724
        %v2072 = vunpack.c.h.b16 %v724
        %v2073 = vunpack.c.l.b16 %v725
        %v2074 = vunpack.c.h.b16 %v725
        %v2075 = vunpack.c.l.b16 %v726
        %v2076 = vunpack.c.h.b16 %v726
        %v2077 = vunpack.c.l.b16 %v727
        %v2078 = vunpack.c.h.b16 %v727
        %v2079 = vunpack.c.l.b16 %v728
        %v2080 = vunpack.c.h.b16 %v728
        %v2081 = vunpack.c.l.b16 %v729
        %v2082 = vunpack.c.h.b16 %v729
        %v2083 = vunpack.c.l.b16 %v730
        %v2084 = vunpack.c.h.b16 %v730
        %v2085 = vunpack.c.l.b16 %v731
        %v2086 = vunpack.c.h.b16 %v731
        %v2087 = vunpack.c.l.b16 %v732
        %v2088 = vunpack.c.h.b16 %v732
        %v2089 = vunpack.c.l.b16 %v733
        %v2090 = vunpack.c.h.b16 %v733
        %v2091 = vunpack.c.l.b16 %v734
        %v2092 = vunpack.c.h.b16 %v734
        %v2093 = vunpack.c.l.b16 %v735
        %v2094 = vunpack.c.h.b16 %v735
        %v2095 = vunpack.c.l.b16 %v736
        %v2096 = vunpack.c.h.b16 %v736
        %v2097 = vunpack.c.l.b16 %v737
        %v2098 = vunpack.c.h.b16 %v737
        %v2099 = vunpack.c.l.b16 %v738
        %v2100 = vunpack.c.h.b16 %v738
        %v2101 = vunpack.c.l.b16 %v739
        %v2102 = vunpack.c.h.b16 %v739
        %v2103 = vunpack.c.l.b16 %v740
        %v2104 = vunpack.c.h.b16 %v740
        %v2105 = vunpack.c.l.b16 %v741
        %v2106 = vunpack.c.h.b16 %v741
        %v2107 = vunpack.c.l.b16 %v742
        %v2108 = vunpack.c.h.b16 %v742
        %v2109 = vunpack.c.l.b16 %v743
        %v2110 = vunpack.c.h.b16 %v743
        %v2111 = vunpack.c.l.b16 %v744
        %v2112 = vunpack.c.h.b16 %v744
        %v2113 = vunpack.c.l.b16 %v745
        %v2114 = vunpack.c.h.b16 %v745
        %v2115 = vunpack.c.l.b16 %v746
        %v2116 = vunpack.c.h.b16 %v746
        %v2117 = vunpack.c.l.b16 %v747
        %v2118 = vunpack.c.h.b16 %v747
        %v2119 = vunpack.c.l.b16 %v748
        %v2120 = vunpack.c.h.b16 %v748
        %v2121 = vunpack.c.l.b16 %v749
        %v2122 = vunpack.c.h.b16 %v749
        %v2123 = vunpack.c.l.b16 %v750
        %v2124 = vunpack.c.h.b16 %v750
        %v2125 = vunpack.c.l.b16 %v751
        %v2126 = vunpack.c.h.b16 %v751
        %v2127 = vunpack.c.l.b16 %v752
        %v2128 = vunpack.c.h.b16 %v752
        %v2129 = vunpack.c.l.b16 %v753
        %v2130 = vunpack.c.h.b16 %v753
        %v2131 = vunpack.c.l.b16 %v754
        %v2132 = vunpack.c.h.b16 %v754
        %v2133 = vunpack.c.l.b16 %v755
        %v2134 = vunpack.c.h.b16 %v755
        %v2135 = vunpack.c.l.b16 %v756
        %v2136 = vunpack.c.h.b16 %v756
        %v2137 = vunpack.c.l.b16 %v757
        %v2138 = vunpack.c.h.b16 %v757
        %v2139 = vunpack.c.l.b16 %v758
        %v2140 = vunpack.c.h.b16 %v758
        %v2141 = vunpack.c.l.b16 %v759
        %v2142 = vunpack.c.h.b16 %v759
        %v2143 = vunpack.c.l.b16 %v760
        %v2144 = vunpack.c.h.b16 %v760
        %v2145 = vunpack.c.l.b16 %v761
        %v2146 = vunpack.c.h.b16 %v761
        %v2147 = vunpack.c.l.b16 %v762
        %v2148 = vunpack.c.h.b16 %v762
        %v2149 = vunpack.c.l.b16 %v763
        %v2150 = vunpack.c.h.b16 %v763
        %v2151 = vunpack.c.l.b16 %v764
        %v2152 = vunpack.c.h.b16 %v764
        %v2153 = vunpack.c.l.b16 %v765
        %v2154 = vunpack.c.h.b16 %v765
        %v2155 = vunpack.c.l.b16 %v766
        %v2156 = vunpack.c.h.b16 %v766
        %v2157 = vunpack.c.l.b16 %v767
        %v2158 = vunpack.c.h.b16 %v767
        %v2159 = vunpack.c.l.b16 %v768
        %v2160 = vunpack.c.h.b16 %v768
        %v2161 = vunpack.c.l.b16 %v769
        %v2162 = vunpack.c.h.b16 %v769
        %v2163 = vunpack.c.l.b16 %v770
        %v2164 = vunpack.c.h.b16 %v770
        %v2165 = vunpack.c.l.b16 %v771
        %v2166 = vunpack.c.h.b16 %v771
        %v2167 = vunpack.c.l.b16 %v772
        %v2168 = vunpack.c.h.b16 %v772
        %v2169 = vunpack.c.l.b16 %v773
        %v2170 = vunpack.c.h.b16 %v773
        %v2171 = vunpack.c.l.b16 %v774
        %v2172 = vunpack.c.h.b16 %v774
        %v2173 = vunpack.c.l.b16 %v775
        %v2174 = vunpack.c.h.b16 %v775
        %v2175 = vunpack.c.l.b16 %v776
        %v2176 = vunpack.c.h.b16 %v776
        %v2177 = vunpack.c.l.b16 %v777
        %v2178 = vunpack.c.h.b16 %v777
        %v2179 = vunpack.c.l.b16 %v778
        %v2180 = vunpack.c.h.b16 %v778
        %v2181 = vunpack.c.l.b16 %v779
        %v2182 = vunpack.c.h.b16 %v779
        %v2183 = vunpack.c.l.b16 %v780
        %v2184 = vunpack.c.h.b16 %v780
        %v2185 = vunpack.c.l.b16 %v781
        %v2186 = vunpack.c.h.b16 %v781
        %v2187 = vunpack.c.l.b16 %v782
        %v2188 = vunpack.c.h.b16 %v782
        %v2189 = vunpack.c.l.b16 %v783
        %v2190 = vunpack.c.h.b16 %v783
        %v2191 = vunpack.c.l.b16 %v784
        %v2192 = vunpack.c.h.b16 %v784
        %v2193 = vunpack.c.l.b16 %v785
        %v2194 = vunpack.c.h.b16 %v785
        %v2195 = vunpack.c.l.b16 %v786
        %v2196 = vunpack.c.h.b16 %v786
        %v2197 = vunpack.c.l.b16 %v787
        %v2198 = vunpack.c.h.b16 %v787
        %v2199 = vunpack.c.l.b16 %v788
        %v2200 = vunpack.c.h.b16 %v788
        %v2201 = vunpack.c.l.b16 %v789
        %v2202 = vunpack.c.h.b16 %v789
        %v2203 = vunpack.c.l.b16 %v790
        %v2204 = vunpack.c.h.b16 %v790
        %v2205 = vunpack.c.l.b16 %v791
        %v2206 = vunpack.c.h.b16 %v791
        %v2207 = vunpack.c.l.b16 %v792
        %v2208 = vunpack.c.h.b16 %v792
        %v2209 = vunpack.c.l.b16 %v793
        %v2210 = vunpack.c.h.b16 %v793
        %v2211 = vunpack.c.l.b16 %v794
        %v2212 = vunpack.c.h.b16 %v794
        %v2213 = vunpack.c.l.b16 %v795
        %v2214 = vunpack.c.h.b16 %v795
        %v2215 = vunpack.c.l.b16 %v796
        %v2216 = vunpack.c.h.b16 %v796
        %v2217 = vunpack.c.l.b16 %v797
        %v2218 = vunpack.c.h.b16 %v797
        %v2219 = vunpack.c.l.b16 %v798
        %v2220 = vunpack.c.h.b16 %v798
        %v2221 = vunpack.c.l.b16 %v799
        %v2222 = vunpack.c.h.b16 %v799
        %v2223 = vunpack.c.l.b16 %v800
        %v2224 = vunpack.c.h.b16 %v800
        %v2225 = vunpack.c.l.b16 %v801
        %v2226 = vunpack.c.h.b16 %v801
        %v2227 = vunpack.c.l.b16 %v802
        %v2228 = vunpack.c.h.b16 %v802
        %v2229 = vunpack.c.l.b16 %v803
        %v2230 = vunpack.c.h.b16 %v803
        %v2231 = vunpack.c.l.b16 %v804
        %v2232 = vunpack.c.h.b16 %v804
        %v2233 = vunpack.c.l.b16 %v805
        %v2234 = vunpack.c.h.b16 %v805
        %v2235 = vunpack.c.l.b16 %v806
        %v2236 = vunpack.c.h.b16 %v806
        %v2237 = vunpack.c.l.b16 %v807
        %v2238 = vunpack.c.h.b16 %v807
        %v2239 = vunpack.c.l.b16 %v808
        %v2240 = vunpack.c.h.b16 %v808
        %v2241 = vunpack.c.l.b16 %v809
        %v2242 = vunpack.c.h.b16 %v809
        %v2243 = vunpack.c.l.b16 %v810
        %v2244 = vunpack.c.h.b16 %v810
        %v2245 = vunpack.c.l.b16 %v811
        %v2246 = vunpack.c.h.b16 %v811
        %v2247 = vunpack.c.l.b16 %v812
        %v2248 = vunpack.c.h.b16 %v812
        %v2249 = vunpack.c.l.b16 %v813
        %v2250 = vunpack.c.h.b16 %v813
        %v2251 = vunpack.c.l.b16 %v814
        %v2252 = vunpack.c.h.b16 %v814
        %v2253 = vunpack.c.l.b16 %v815
        %v2254 = vunpack.c.h.b16 %v815
        %v2255 = vunpack.c.l.b16 %v816
        %v2256 = vunpack.c.h.b16 %v816
        %v2257 = vunpack.c.l.b16 %v817
        %v2258 = vunpack.c.h.b16 %v817
        %v2259 = vunpack.c.l.b16 %v818
        %v2260 = vunpack.c.h.b16 %v818
        %v2261 = vunpack.c.l.b16 %v819
        %v2262 = vunpack.c.h.b16 %v819
        %v2263 = vunpack.c.l.b16 %v820
        %v2264 = vunpack.c.h.b16 %v820
        %v2265 = vunpack.c.l.b16 %v821
        %v2266 = vunpack.c.h.b16 %v821
        %v2267 = vunpack.c.l.b16 %v822
        %v2268 = vunpack.c.h.b16 %v822
        %v2269 = vunpack.c.l.b16 %v823
        %v2270 = vunpack.c.h.b16 %v823
        %v2271 = vunpack.c.l.b16 %v824
        %v2272 = vunpack.c.h.b16 %v824
        %v2273 = vunpack.c.l.b16 %v825
        %v2274 = vunpack.c.h.b16 %v825
        %v2275 = vunpack.c.l.b16 %v826
        %v2276 = vunpack.c.h.b16 %v826
        %v2277 = vunpack.c.l.b16 %v827
        %v2278 = vunpack.c.h.b16 %v827
        %v2279 = vunpack.c.l.b16 %v828
        %v2280 = vunpack.c.h.b16 %v828
        %v2281 = vunpack.c.l.b16 %v829
        %v2282 = vunpack.c.h.b16 %v829
        %v2283 = vunpack.c.l.b16 %v830
        %v2284 = vunpack.c.h.b16 %v830
        %v2285 = vunpack.c.l.b16 %v831
        %v2286 = vunpack.c.h.b16 %v831
        %v2287 = vunpack.c.l.b16 %v832
        %v2288 = vunpack.c.h.b16 %v832
        %v2289 = vunpack.c.l.b16 %v833
        %v2290 = vunpack.c.h.b16 %v833
        %v2291 = vunpack.c.l.b16 %v834
        %v2292 = vunpack.c.h.b16 %v834
        %v2293 = vunpack.c.l.b16 %v835
        %v2294 = vunpack.c.h.b16 %v835
        %v2295 = vunpack.c.l.b16 %v836
        %v2296 = vunpack.c.h.b16 %v836
        %v2297 = vunpack.c.l.b16 %v837
        %v2298 = vunpack.c.h.b16 %v837
        %v2299 = vunpack.c.l.b16 %v838
        %v2300 = vunpack.c.h.b16 %v838
        %v2301 = vunpack.c.l.b16 %v839
        %v2302 = vunpack.c.h.b16 %v839
        %v2303 = vunpack.c.l.b16 %v840
        %v2304 = vunpack.c.h.b16 %v840
        %v2305 = vunpack.c.l.b16 %v841
        %v2306 = vunpack.c.h.b16 %v841
        %v2307 = vunpack.c.l.b16 %v842
        %v2308 = vunpack.c.h.b16 %v842
        %v2309 = vunpack.c.l.b16 %v843
        %v2310 = vunpack.c.h.b16 %v843
        %v2311 = vunpack.c.l.b16 %v844
        %v2312 = vunpack.c.h.b16 %v844
        %v2313 = vunpack.c.l.b16 %v845
        %v2314 = vunpack.c.h.b16 %v845
        %v2315 = vunpack.c.l.b16 %v846
        %v2316 = vunpack.c.h.b16 %v846
        %v2317 = vunpack.c.l.b16 %v847
        %v2318 = vunpack.c.h.b16 %v847
        %v2319 = vunpack.c.l.b16 %v848
        %v2320 = vunpack.c.h.b16 %v848
        %v2321 = vunpack.c.l.b16 %v849
        %v2322 = vunpack.c.h.b16 %v849
        %v2323 = vunpack.c.l.b16 %v850
        %v2324 = vunpack.c.h.b16 %v850
        %v2325 = vunpack.c.l.b16 %v851
        %v2326 = vunpack.c.h.b16 %v851
        %v2327 = vunpack.c.l.b16 %v852
        %v2328 = vunpack.c.h.b16 %v852
        %v2329 = vunpack.c.l.b16 %v853
        %v2330 = vunpack.c.h.b16 %v853
        %v2331 = vunpack.c.l.b16 %v854
        %v2332 = vunpack.c.h.b16 %v854
        %v2333 = vunpack.c.l.b16 %v855
        %v2334 = vunpack.c.h.b16 %v855
        %v2335 = vunpack.c.l.b16 %v856
        %v2336 = vunpack.c.h.b16 %v856
        %v2337 = vunpack.c.l.b16 %v857
        %v2338 = vunpack.c.h.b16 %v857
        %v2339 = vunpack.c.l.b16 %v858
        %v2340 = vunpack.c.h.b16 %v858
        %v2341 = vunpack.c.l.b16 %v859
        %v2342 = vunpack.c.h.b16 %v859
        %v2343 = vunpack.c.l.b16 %v860
        %v2344 = vunpack.c.h.b16 %v860
        %v2345 = vunpack.c.l.b16 %v861
        %v2346 = vunpack.c.h.b16 %v861
        %v2347 = vunpack.c.l.b16 %v862
        %v2348 = vunpack.c.h.b16 %v862
        %v2349 = vunpack.c.l.b16 %v863
        %v2350 = vunpack.c.h.b16 %v863
        %v2351 = vunpack.c.l.b16 %v864
        %v2352 = vunpack.c.h.b16 %v864
        %v2353 = vunpack.c.l.b16 %v865
        %v2354 = vunpack.c.h.b16 %v865
        %v2355 = vunpack.c.l.b16 %v866
        %v2356 = vunpack.c.h.b16 %v866
        %v2357 = vunpack.c.l.b16 %v867
        %v2358 = vunpack.c.h.b16 %v867
        %v2359 = vunpack.c.l.b16 %v868
        %v2360 = vunpack.c.h.b16 %v868
        %v2361 = vunpack.c.l.b16 %v869
        %v2362 = vunpack.c.h.b16 %v869
        %v2363 = vunpack.c.l.b16 %v870
        %v2364 = vunpack.c.h.b16 %v870
        %v2365 = vunpack.c.l.b16 %v871
        %v2366 = vunpack.c.h.b16 %v871
        %v2367 = vunpack.c.l.b16 %v872
        %v2368 = vunpack.c.h.b16 %v872
        %v2369 = vunpack.c.l.b16 %v873
        %v2370 = vunpack.c.h.b16 %v873
        %v2371 = vunpack.c.l.b16 %v874
        %v2372 = vunpack.c.h.b16 %v874
        %v2373 = vunpack.c.l.b16 %v875
        %v2374 = vunpack.c.h.b16 %v875
        %v2375 = vunpack.c.l.b16 %v876
        %v2376 = vunpack.c.h.b16 %v876
        %v2377 = vunpack.c.l.b16 %v877
        %v2378 = vunpack.c.h.b16 %v877
        %v2379 = vunpack.c.l.b16 %v878
        %v2380 = vunpack.c.h.b16 %v878
        %v2381 = vunpack.c.l.b16 %v879
        %v2382 = vunpack.c.h.b16 %v879
        %v2383 = vunpack.c.l.b16 %v880
        %v2384 = vunpack.c.h.b16 %v880
        %v2385 = vunpack.c.l.b16 %v881
        %v2386 = vunpack.c.h.b16 %v881
        %v2387 = vunpack.c.l.b16 %v882
        %v2388 = vunpack.c.h.b16 %v882
        %v2389 = vunpack.c.l.b16 %v883
        %v2390 = vunpack.c.h.b16 %v883
        %v2391 = vunpack.c.l.b16 %v884
        %v2392 = vunpack.c.h.b16 %v884
        %v2393 = vunpack.c.l.b16 %v885
        %v2394 = vunpack.c.h.b16 %v885
        %v2395 = vunpack.c.l.b16 %v886
        %v2396 = vunpack.c.h.b16 %v886
        %v2397 = vunpack.c.l.b16 %v887
        %v2398 = vunpack.c.h.b16 %v887
        %v2399 = vunpack.c.l.b16 %v888
        %v2400 = vunpack.c.h.b16 %v888
        %v2401 = vunpack.c.l.b16 %v889
        %v2402 = vunpack.c.h.b16 %v889
        %v2403 = vunpack.c.l.b16 %v890
        %v2404 = vunpack.c.h.b16 %v890
        %v2405 = vunpack.c.l.b16 %v891
        %v2406 = vunpack.c.h.b16 %v891
        %v2407 = vunpack.c.l.b16 %v892
        %v2408 = vunpack.c.h.b16 %v892
        %v2409 = vunpack.c.l.b16 %v893
        %v2410 = vunpack.c.h.b16 %v893
        %v2411 = vunpack.c.l.b16 %v894
        %v2412 = vunpack.c.h.b16 %v894
        %v2413 = vunpack.c.l.b16 %v895
        %v2414 = vunpack.c.h.b16 %v895
        %v2415 = vunpack.c.l.b16 %v896
        %v2416 = vunpack.c.h.b16 %v896
        %v2417 = vunpack.c.l.b16 %v897
        %v2418 = vunpack.c.h.b16 %v897
        %v2419 = vunpack.c.l.b16 %v898
        %v2420 = vunpack.c.h.b16 %v898
        %v2421 = vunpack.c.l.b16 %v899
        %v2422 = vunpack.c.h.b16 %v899
        %v2423 = vunpack.c.l.b16 %v900
        %v2424 = vunpack.c.h.b16 %v900
        %v2425 = vunpack.c.l.b16 %v901
        %v2426 = vunpack.c.h.b16 %v901
        %v2427 = vunpack.c.l.b16 %v902
        %v2428 = vunpack.c.h.b16 %v902
        %v2429 = vunpack.c.l.b16 %v903
        %v2430 = vunpack.c.h.b16 %v903
        %v2431 = vunpack.c.l.b16 %v904
        %v2432 = vunpack.c.h.b16 %v904
        %v2433 = vunpack.c.l.b16 %v905
        %v2434 = vunpack.c.h.b16 %v905
        %v2435 = vunpack.c.l.b16 %v906
        %v2436 = vunpack.c.h.b16 %v906
        %v2437 = vunpack.c.l.b16 %v907
        %v2438 = vunpack.c.h.b16 %v907
        %v2439 = vunpack.c.l.b16 %v908
        %v2440 = vunpack.c.h.b16 %v908
        %v2441 = vunpack.c.l.b16 %v909
        %v2442 = vunpack.c.h.b16 %v909
        %v2443 = vunpack.c.l.b16 %v910
        %v2444 = vunpack.c.h.b16 %v910
        %v2445 = vunpack.c.l.b16 %v911
        %v2446 = vunpack.c.h.b16 %v911
        %v2447 = vunpack.c.l.b16 %v912
        %v2448 = vunpack.c.h.b16 %v912
        %v2449 = vpack.c.b16 %v1433, %v1425
        %v2450 = vpack.c.b16 %v1434, %v1426
        %v2451 = vpack.c.b16 %v1435, %v1427
        %v2452 = vpack.c.b16 %v1436, %v1428
        %v2453 = vpack.c.b16 %v1437, %v1429
        %v2454 = vpack.c.b16 %v1438, %v1430
        %v2455 = vpack.c.b16 %v1439, %v1431
        %v2456 = vpack.c.b16 %v1440, %v1432
        %v2457 = vpack.c.b16 %v1449, %v1441
        %v2458 = vpack.c.b16 %v1450, %v1442
        %v2459 = vpack.c.b16 %v1451, %v1443
        %v2460 = vpack.c.b16 %v1452, %v1444
        %v2461 = vpack.c.b16 %v1453, %v1445
        %v2462 = vpack.c.b16 %v1454, %v1446
        %v2463 = vpack.c.b16 %v1455, %v1447
        %v2464 = vpack.c.b16 %v1456, %v1448
        %v2465 = vpack.c.b16 %v1465, %v1457
        %v2466 = vpack.c.b16 %v1466, %v1458
        %v2467 = vpack.c.b16 %v1467, %v1459
        %v2468 = vpack.c.b16 %v1468, %v1460
        %v2469 = vpack.c.b16 %v1469, %v1461
        %v2470 = vpack.c.b16 %v1470, %v1462
        %v2471 = vpack.c.b16 %v1471, %v1463
        %v2472 = vpack.c.b16 %v1472, %v1464
        %v2473 = vpack.c.b16 %v1481, %v1473
        %v2474 = vpack.c.b16 %v1482, %v1474
        %v2475 = vpack.c.b16 %v1483, %v1475
        %v2476 = vpack.c.b16 %v1484, %v1476
        %v2477 = vpack.c.b16 %v1485, %v1477
        %v2478 = vpack.c.b16 %v1486, %v1478
        %v2479 = vpack.c.b16 %v1487, %v1479
        %v2480 = vpack.c.b16 %v1488, %v1480
        %v2481 = vpack.c.b16 %v1497, %v1489
        %v2482 = vpack.c.b16 %v1498, %v1490
        %v2483 = vpack.c.b16 %v1499, %v1491
        %v2484 = vpack.c.b16 %v1500, %v1492
        %v2485 = vpack.c.b16 %v1501, %v1493
        %v2486 = vpack.c.b16 %v1502, %v1494
        %v2487 = vpack.c.b16 %v1503, %v1495
        %v2488 = vpack.c.b16 %v1504, %v1496
        %v2489 = vpack.c.b16 %v1513, %v1505
        %v2490 = vpack.c.b16 %v1514, %v1506
        %v2491 = vpack.c.b16 %v1515, %v1507
        %v2492 = vpack.c.b16 %v1516, %v1508
        %v2493 = vpack.c.b16 %v1517, %v1509
        %v2494 = vpack.c.b16 %v1518, %v1510
        %v2495 = vpack.c.b16 %v1519, %v1511
        %v2496 = vpack.c.b16 %v1520, %v1512
        %v2497 = vpack.c.b16 %v1529, %v1521
        %v2498 = vpack.c.b16 %v1530, %v1522
        %v2499 = vpack.c.b16 %v1531, %v1523
        %v2500 = vpack.c.b16 %v1532, %v1524
        %v2501 = vpack.c.b16 %v1533, %v1525
        %v2502 = vpack.c.b16 %v1534, %v1526
        %v2503 = vpack.c.b16 %v1535, %v1527
        %v2504 = vpack.c.b16 %v1536, %v1528
        %v2505 = vpack.c.b16 %v1545, %v1537
        %v2506 = vpack.c.b16 %v1546, %v1538
        %v2507 = vpack.c.b16 %v1547, %v1539
        %v2508 = vpack.c.b16 %v1548, %v1540
        %v2509 = vpack.c.b16 %v1549, %v1541
        %v2510 = vpack.c.b16 %v1550, %v1542
        %v2511 = vpack.c.b16 %v1551, %v1543
        %v2512 = vpack.c.b16 %v1552, %v1544
        %v2513 = vpack.c.b16 %v1561, %v1553
        %v2514 = vpack.c.b16 %v1562, %v1554
        %v2515 = vpack.c.b16 %v1563, %v1555
        %v2516 = vpack.c.b16 %v1564, %v1556
        %v2517 = vpack.c.b16 %v1565, %v1557
        %v2518 = vpack.c.b16 %v1566, %v1558
        %v2519 = vpack.c.b16 %v1567, %v1559
        %v2520 = vpack.c.b16 %v1568, %v1560
        %v2521 = vpack.c.b16 %v1577, %v1569
        %v2522 = vpack.c.b16 %v1578, %v1570
        %v2523 = vpack.c.b16 %v1579, %v1571
        %v2524 = vpack.c.b16 %v1580, %v1572
        %v2525 = vpack.c.b16 %v1581, %v1573
        %v2526 = vpack.c.b16 %v1582, %v1574
        %v2527 = vpack.c.b16 %v1583, %v1575
        %v2528 = vpack.c.b16 %v1584, %v1576
        %v2529 = vpack.c.b16 %v1593, %v1585
        %v2530 = vpack.c.b16 %v1594, %v1586
        %v2531 = vpack.c.b16 %v1595, %v1587
        %v2532 = vpack.c.b16 %v1596, %v1588
        %v2533 = vpack.c.b16 %v1597, %v1589
        %v2534 = vpack.c.b16 %v1598, %v1590
        %v2535 = vpack.c.b16 %v1599, %v1591
        %v2536 = vpack.c.b16 %v1600, %v1592
        %v2537 = vpack.c.b16 %v1609, %v1601
        %v2538 = vpack.c.b16 %v1610, %v1602
        %v2539 = vpack.c.b16 %v1611, %v1603
        %v2540 = vpack.c.b16 %v1612, %v1604
        %v2541 = vpack.c.b16 %v1613, %v1605
        %v2542 = vpack.c.b16 %v1614, %v1606
        %v2543 = vpack.c.b16 %v1615, %v1607
        %v2544 = vpack.c.b16 %v1616, %v1608
        %v2545 = vpack.c.b16 %v1625, %v1617
        %v2546 = vpack.c.b16 %v1626, %v1618
        %v2547 = vpack.c.b16 %v1627, %v1619
        %v2548 = vpack.c.b16 %v1628, %v1620
        %v2549 = vpack.c.b16 %v1629, %v1621
        %v2550 = vpack.c.b16 %v1630, %v1622
        %v2551 = vpack.c.b16 %v1631, %v1623
        %v2552 = vpack.c.b16 %v1632, %v1624
        %v2553 = vpack.c.b16 %v1641, %v1633
        %v2554 = vpack.c.b16 %v1642, %v1634
        %v2555 = vpack.c.b16 %v1643, %v1635
        %v2556 = vpack.c.b16 %v1644, %v1636
        %v2557 = vpack.c.b16 %v1645, %v1637
        %v2558 = vpack.c.b16 %v1646, %v1638
        %v2559 = vpack.c.b16 %v1647, %v1639
        %v2560 = vpack.c.b16 %v1648, %v1640
        %v2561 = vpack.c.b16 %v1657, %v1649
        %v2562 = vpack.c.b16 %v1658, %v1650
        %v2563 = vpack.c.b16 %v1659, %v1651
        %v2564 = vpack.c.b16 %v1660, %v1652
        %v2565 = vpack.c.b16 %v1661, %v1653
        %v2566 = vpack.c.b16 %v1662, %v1654
        %v2567 = vpack.c.b16 %v1663, %v1655
        %v2568 = vpack.c.b16 %v1664, %v1656
        %v2569 = vpack.c.b16 %v1673, %v1665
        %v2570 = vpack.c.b16 %v1674, %v1666
        %v2571 = vpack.c.b16 %v1675, %v1667
        %v2572 = vpack.c.b16 %v1676, %v1668
        %v2573 = vpack.c.b16 %v1677, %v1669
        %v2574 = vpack.c.b16 %v1678, %v1670
        %v2575 = vpack.c.b16 %v1679, %v1671
        %v2576 = vpack.c.b16 %v1680, %v1672
        %v2577 = vpack.c.b16 %v1689, %v1681
        %v2578 = vpack.c.b16 %v1690, %v1682
        %v2579 = vpack.c.b16 %v1691, %v1683
        %v2580 = vpack.c.b16 %v1692, %v1684
        %v2581 = vpack.c.b16 %v1693, %v1685
        %v2582 = vpack.c.b16 %v1694, %v1686
        %v2583 = vpack.c.b16 %v1695, %v1687
        %v2584 = vpack.c.b16 %v1696, %v1688
        %v2585 = vpack.c.b16 %v1705, %v1697
        %v2586 = vpack.c.b16 %v1706, %v1698
        %v2587 = vpack.c.b16 %v1707, %v1699
        %v2588 = vpack.c.b16 %v1708, %v1700
        %v2589 = vpack.c.b16 %v1709, %v1701
        %v2590 = vpack.c.b16 %v1710, %v1702
        %v2591 = vpack.c.b16 %v1711, %v1703
        %v2592 = vpack.c.b16 %v1712, %v1704
        %v2593 = vpack.c.b16 %v1721, %v1713
        %v2594 = vpack.c.b16 %v1722, %v1714
        %v2595 = vpack.c.b16 %v1723, %v1715
        %v2596 = vpack.c.b16 %v1724, %v1716
        %v2597 = vpack.c.b16 %v1725, %v1717
        %v2598 = vpack.c.b16 %v1726, %v1718
        %v2599 = vpack.c.b16 %v1727, %v1719
        %v2600 = vpack.c.b16 %v1728, %v1720
        %v2601 = vpack.c.b16 %v1737, %v1729
        %v2602 = vpack.c.b16 %v1738, %v1730
        %v2603 = vpack.c.b16 %v1739, %v1731
        %v2604 = vpack.c.b16 %v1740, %v1732
        %v2605 = vpack.c.b16 %v1741, %v1733
        %v2606 = vpack.c.b16 %v1742, %v1734
        %v2607 = vpack.c.b16 %v1743, %v1735
        %v2608 = vpack.c.b16 %v1744, %v1736
        %v2609 = vpack.c.b16 %v1753, %v1745
        %v2610 = vpack.c.b16 %v1754, %v1746
        %v2611 = vpack.c.b16 %v1755, %v1747
        %v2612 = vpack.c.b16 %v1756, %v1748
        %v2613 = vpack.c.b16 %v1757, %v1749
        %v2614 = vpack.c.b16 %v1758, %v1750
        %v2615 = vpack.c.b16 %v1759, %v1751
        %v2616 = vpack.c.b16 %v1760, %v1752
        %v2617 = vpack.c.b16 %v1769, %v1761
        %v2618 = vpack.c.b16 %v1770, %v1762
        %v2619 = vpack.c.b16 %v1771, %v1763
        %v2620 = vpack.c.b16 %v1772, %v1764
        %v2621 = vpack.c.b16 %v1773, %v1765
        %v2622 = vpack.c.b16 %v1774, %v1766
        %v2623 = vpack.c.b16 %v1775, %v1767
        %v2624 = vpack.c.b16 %v1776, %v1768
        %v2625 = vpack.c.b16 %v1785, %v1777
        %v2626 = vpack.c.b16 %v1786, %v1778
        %v2627 = vpack.c.b16 %v1787, %v1779
        %v2628 = vpack.c.b16 %v1788, %v1780
        %v2629 = vpack.c.b16 %v1789, %v1781
        %v2630 = vpack.c.b16 %v1790, %v1782
        %v2631 = vpack.c.b16 %v1791, %v1783
        %v2632 = vpack.c.b16 %v1792, %v1784
        %v2633 = vpack.c.b16 %v1801, %v1793
        %v2634 = vpack.c.b16 %v1802, %v1794
        %v2635 = vpack.c.b16 %v1803, %v1795
        %v2636 = vpack.c.b16 %v1804, %v1796
        %v2637 = vpack.c.b16 %v1805, %v1797
        %v2638 = vpack.c.b16 %v1806, %v1798
        %v2639 = vpack.c.b16 %v1807, %v1799
        %v2640 = vpack.c.b16 %v1808, %v1800
        %v2641 = vpack.c.b16 %v1817, %v1809
        %v2642 = vpack.c.b16 %v1818, %v1810
        %v2643 = vpack.c.b16 %v1819, %v1811
        %v2644 = vpack.c.b16 %v1820, %v1812
        %v2645 = vpack.c.b16 %v1821, %v1813
        %v2646 = vpack.c.b16 %v1822, %v1814
        %v2647 = vpack.c.b16 %v1823, %v1815
        %v2648 = vpack.c.b16 %v1824, %v1816
        %v2649 = vpack.c.b16 %v1833, %v1825
        %v2650 = vpack.c.b16 %v1834, %v1826
        %v2651 = vpack.c.b16 %v1835, %v1827
        %v2652 = vpack.c.b16 %v1836, %v1828
        %v2653 = vpack.c.b16 %v1837, %v1829
        %v2654 = vpack.c.b16 %v1838, %v1830
        %v2655 = vpack.c.b16 %v1839, %v1831
        %v2656 = vpack.c.b16 %v1840, %v1832
        %v2657 = vpack.c.b16 %v1849, %v1841
        %v2658 = vpack.c.b16 %v1850, %v1842
        %v2659 = vpack.c.b16 %v1851, %v1843
        %v2660 = vpack.c.b16 %v1852, %v1844
        %v2661 = vpack.c.b16 %v1853, %v1845
        %v2662 = vpack.c.b16 %v1854, %v1846
        %v2663 = vpack.c.b16 %v1855, %v1847
        %v2664 = vpack.c.b16 %v1856, %v1848
        %v2665 = vpack.c.b16 %v1865, %v1857
        %v2666 = vpack.c.b16 %v1866, %v1858
        %v2667 = vpack.c.b16 %v1867, %v1859
        %v2668 = vpack.c.b16 %v1868, %v1860
        %v2669 = vpack.c.b16 %v1869, %v1861
        %v2670 = vpack.c.b16 %v1870, %v1862
        %v2671 = vpack.c.b16 %v1871, %v1863
        %v2672 = vpack.c.b16 %v1872, %v1864
        %v2673 = vpack.c.b16 %v1881, %v1873
        %v2674 = vpack.c.b16 %v1882, %v1874
        %v2675 = vpack.c.b16 %v1883, %v1875
        %v2676 = vpack.c.b16 %v1884, %v1876
        %v2677 = vpack.c.b16 %v1885, %v1877
        %v2678 = vpack.c.b16 %v1886, %v1878
        %v2679 = vpack.c.b16 %v1887, %v1879
        %v2680 = vpack.c.b16 %v1888, %v1880
        %v2681 = vpack.c.b16 %v1897, %v1889
        %v2682 = vpack.c.b16 %v1898, %v1890
        %v2683 = vpack.c.b16 %v1899, %v1891
        %v2684 = vpack.c.b16 %v1900, %v1892
        %v2685 = vpack.c.b16 %v1901, %v1893
        %v2686 = vpack.c.b16 %v1902, %v1894
        %v2687 = vpack.c.b16 %v1903, %v1895
        %v2688 = vpack.c.b16 %v1904, %v1896
        %v2689 = vpack.c.b16 %v1913, %v1905
        %v2690 = vpack.c.b16 %v1914, %v1906
        %v2691 = vpack.c.b16 %v1915, %v1907
        %v2692 = vpack.c.b16 %v1916, %v1908
        %v2693 = vpack.c.b16 %v1917, %v1909
        %v2694 = vpack.c.b16 %v1918, %v1910
        %v2695 = vpack.c.b16 %v1919, %v1911
        %v2696 = vpack.c.b16 %v1920, %v1912
        %v2697 = vpack.c.b16 %v1929, %v1921
        %v2698 = vpack.c.b16 %v1930, %v1922
        %v2699 = vpack.c.b16 %v1931, %v1923
        %v2700 = vpack.c.b16 %v1932, %v1924
        %v2701 = vpack.c.b16 %v1933, %v1925
        %v2702 = vpack.c.b16 %v1934, %v1926
        %v2703 = vpack.c.b16 %v1935, %v1927
        %v2704 = vpack.c.b16 %v1936, %v1928
        %v2705 = vpack.c.b16 %v1945, %v1937
        %v2706 = vpack.c.b16 %v1946, %v1938
        %v2707 = vpack.c.b16 %v1947, %v1939
        %v2708 = vpack.c.b16 %v1948, %v1940
        %v2709 = vpack.c.b16 %v1949, %v1941
        %v2710 = vpack.c.b16 %v1950, %v1942
        %v2711 = vpack.c.b16 %v1951, %v1943
        %v2712 = vpack.c.b16 %v1952, %v1944
        %v2713 = vpack.c.b16 %v1961, %v1953
        %v2714 = vpack.c.b16 %v1962, %v1954
        %v2715 = vpack.c.b16 %v1963, %v1955
        %v2716 = vpack.c.b16 %v1964, %v1956
        %v2717 = vpack.c.b16 %v1965, %v1957
        %v2718 = vpack.c.b16 %v1966, %v1958
        %v2719 = vpack.c.b16 %v1967, %v1959
        %v2720 = vpack.c.b16 %v1968, %v1960
        %v2721 = vpack.c.b16 %v1977, %v1969
        %v2722 = vpack.c.b16 %v1978, %v1970
        %v2723 = vpack.c.b16 %v1979, %v1971
        %v2724 = vpack.c.b16 %v1980, %v1972
        %v2725 = vpack.c.b16 %v1981, %v1973
        %v2726 = vpack.c.b16 %v1982, %v1974
        %v2727 = vpack.c.b16 %v1983, %v1975
        %v2728 = vpack.c.b16 %v1984, %v1976
        %v2729 = vpack.c.b16 %v1993, %v1985
        %v2730 = vpack.c.b16 %v1994, %v1986
        %v2731 = vpack.c.b16 %v1995, %v1987
        %v2732 = vpack.c.b16 %v1996, %v1988
        %v2733 = vpack.c.b16 %v1997, %v1989
        %v2734 = vpack.c.b16 %v1998, %v1990
        %v2735 = vpack.c.b16 %v1999, %v1991
        %v2736 = vpack.c.b16 %v2000, %v1992
        %v2737 = vpack.c.b16 %v2009, %v2001
        %v2738 = vpack.c.b16 %v2010, %v2002
        %v2739 = vpack.c.b16 %v2011, %v2003
        %v2740 = vpack.c.b16 %v2012, %v2004
        %v2741 = vpack.c.b16 %v2013, %v2005
        %v2742 = vpack.c.b16 %v2014, %v2006
        %v2743 = vpack.c.b16 %v2015, %v2007
        %v2744 = vpack.c.b16 %v2016, %v2008
        %v2745 = vpack.c.b16 %v2025, %v2017
        %v2746 = vpack.c.b16 %v2026, %v2018
        %v2747 = vpack.c.b16 %v2027, %v2019
        %v2748 = vpack.c.b16 %v2028, %v2020
        %v2749 = vpack.c.b16 %v2029, %v2021
        %v2750 = vpack.c.b16 %v2030, %v2022
        %v2751 = vpack.c.b16 %v2031, %v2023
        %v2752 = vpack.c.b16 %v2032, %v2024
        %v2753 = vpack.c.b16 %v2041, %v2033
        %v2754 = vpack.c.b16 %v2042, %v2034
        %v2755 = vpack.c.b16 %v2043, %v2035
        %v2756 = vpack.c.b16 %v2044, %v2036
        %v2757 = vpack.c.b16 %v2045, %v2037
        %v2758 = vpack.c.b16 %v2046, %v2038
        %v2759 = vpack.c.b16 %v2047, %v2039
        %v2760 = vpack.c.b16 %v2048, %v2040
        %v2761 = vpack.c.b16 %v2057, %v2049
        %v2762 = vpack.c.b16 %v2058, %v2050
        %v2763 = vpack.c.b16 %v2059, %v2051
        %v2764 = vpack.c.b16 %v2060, %v2052
        %v2765 = vpack.c.b16 %v2061, %v2053
        %v2766 = vpack.c.b16 %v2062, %v2054
        %v2767 = vpack.c.b16 %v2063, %v2055
        %v2768 = vpack.c.b16 %v2064, %v2056
        %v2769 = vpack.c.b16 %v2073, %v2065
        %v2770 = vpack.c.b16 %v2074, %v2066
        %v2771 = vpack.c.b16 %v2075, %v2067
        %v2772 = vpack.c.b16 %v2076, %v2068
        %v2773 = vpack.c.b16 %v2077, %v2069
        %v2774 = vpack.c.b16 %v2078, %v2070
        %v2775 = vpack.c.b16 %v2079, %v2071
        %v2776 = vpack.c.b16 %v2080, %v2072
        %v2777 = vpack.c.b16 %v2089, %v2081
        %v2778 = vpack.c.b16 %v2090, %v2082
        %v2779 = vpack.c.b16 %v2091, %v2083
        %v2780 = vpack.c.b16 %v2092, %v2084
        %v2781 = vpack.c.b16 %v2093, %v2085
        %v2782 = vpack.c.b16 %v2094, %v2086
        %v2783 = vpack.c.b16 %v2095, %v2087
        %v2784 = vpack.c.b16 %v2096, %v2088
        %v2785 = vpack.c.b16 %v2105, %v2097
        %v2786 = vpack.c.b16 %v2106, %v2098
        %v2787 = vpack.c.b16 %v2107, %v2099
        %v2788 = vpack.c.b16 %v2108, %v2100
        %v2789 = vpack.c.b16 %v2109, %v2101
        %v2790 = vpack.c.b16 %v2110, %v2102
        %v2791 = vpack.c.b16 %v2111, %v2103
        %v2792 = vpack.c.b16 %v2112, %v2104
        %v2793 = vpack.c.b16 %v2121, %v2113
        %v2794 = vpack.c.b16 %v2122, %v2114
        %v2795 = vpack.c.b16 %v2123, %v2115
        %v2796 = vpack.c.b16 %v2124, %v2116
        %v2797 = vpack.c.b16 %v2125, %v2117
        %v2798 = vpack.c.b16 %v2126, %v2118
        %v2799 = vpack.c.b16 %v2127, %v2119
        %v2800 = vpack.c.b16 %v2128, %v2120
        %v2801 = vpack.c.b16 %v2137, %v2129
        %v2802 = vpack.c.b16 %v2138, %v2130
        %v2803 = vpack.c.b16 %v2139, %v2131
        %v2804 = vpack.c.b16 %v2140, %v2132
        %v2805 = vpack.c.b16 %v2141, %v2133
        %v2806 = vpack.c.b16 %v2142, %v2134
        %v2807 = vpack.c.b16 %v2143, %v2135
        %v2808 = vpack.c.b16 %v2144, %v2136
        %v2809 = vpack.c.b16 %v2153, %v2145
        %v2810 = vpack.c.b16 %v2154, %v2146
        %v2811 = vpack.c.b16 %v2155, %v2147
        %v2812 = vpack.c.b16 %v2156, %v2148
        %v2813 = vpack.c.b16 %v2157, %v2149
        %v2814 = vpack.c.b16 %v2158, %v2150
        %v2815 = vpack.c.b16 %v2159, %v2151
        %v2816 = vpack.c.b16 %v2160, %v2152
        %v2817 = vpack.c.b16 %v2169, %v2161
        %v2818 = vpack.c.b16 %v2170, %v2162
        %v2819 = vpack.c.b16 %v2171, %v2163
        %v2820 = vpack.c.b16 %v2172, %v2164
        %v2821 = vpack.c.b16 %v2173, %v2165
        %v2822 = vpack.c.b16 %v2174, %v2166
        %v2823 = vpack.c.b16 %v2175, %v2167
        %v2824 = vpack.c.b16 %v2176, %v2168
        %v2825 = vpack.c.b16 %v2185, %v2177
        %v2826 = vpack.c.b16 %v2186, %v2178
        %v2827 = vpack.c.b16 %v2187, %v2179
        %v2828 = vpack.c.b16 %v2188, %v2180
        %v2829 = vpack.c.b16 %v2189, %v2181
        %v2830 = vpack.c.b16 %v2190, %v2182
        %v2831 = vpack.c.b16 %v2191, %v2183
        %v2832 = vpack.c.b16 %v2192, %v2184
        %v2833 = vpack.c.b16 %v2201, %v2193
        %v2834 = vpack.c.b16 %v2202, %v2194
        %v2835 = vpack.c.b16 %v2203, %v2195
        %v2836 = vpack.c.b16 %v2204, %v2196
        %v2837 = vpack.c.b16 %v2205, %v2197
        %v2838 = vpack.c.b16 %v2206, %v2198
        %v2839 = vpack.c.b16 %v2207, %v2199
        %v2840 = vpack.c.b16 %v2208, %v2200
        %v2841 = vpack.c.b16 %v2217, %v2209
        %v2842 = vpack.c.b16 %v2218, %v2210
        %v2843 = vpack.c.b16 %v2219, %v2211
        %v2844 = vpack.c.b16 %v2220, %v2212
        %v2845 = vpack.c.b16 %v2221, %v2213
        %v2846 = vpack.c.b16 %v2222, %v2214
        %v2847 = vpack.c.b16 %v2223, %v2215
        %v2848 = vpack.c.b16 %v2224, %v2216
        %v2849 = vpack.c.b16 %v2233, %v2225
        %v2850 = vpack.c.b16 %v2234, %v2226
        %v2851 = vpack.c.b16 %v2235, %v2227
        %v2852 = vpack.c.b16 %v2236, %v2228
        %v2853 = vpack.c.b16 %v2237, %v2229
        %v2854 = vpack.c.b16 %v2238, %v2230
        %v2855 = vpack.c.b16 %v2239, %v2231
        %v2856 = vpack.c.b16 %v2240, %v2232
        %v2857 = vpack.c.b16 %v2249, %v2241
        %v2858 = vpack.c.b16 %v2250, %v2242
        %v2859 = vpack.c.b16 %v2251, %v2243
        %v2860 = vpack.c.b16 %v2252, %v2244
        %v2861 = vpack.c.b16 %v2253, %v2245
        %v2862 = vpack.c.b16 %v2254, %v2246
        %v2863 = vpack.c.b16 %v2255, %v2247
        %v2864 = vpack.c.b16 %v2256, %v2248
        %v2865 = vpack.c.b16 %v2265, %v2257
        %v2866 = vpack.c.b16 %v2266, %v2258
        %v2867 = vpack.c.b16 %v2267, %v2259
        %v2868 = vpack.c.b16 %v2268, %v2260
        %v2869 = vpack.c.b16 %v2269, %v2261
        %v2870 = vpack.c.b16 %v2270, %v2262
        %v2871 = vpack.c.b16 %v2271, %v2263
        %v2872 = vpack.c.b16 %v2272, %v2264
        %v2873 = vpack.c.b16 %v2281, %v2273
        %v2874 = vpack.c.b16 %v2282, %v2274
        %v2875 = vpack.c.b16 %v2283, %v2275
        %v2876 = vpack.c.b16 %v2284, %v2276
        %v2877 = vpack.c.b16 %v2285, %v2277
        %v2878 = vpack.c.b16 %v2286, %v2278
        %v2879 = vpack.c.b16 %v2287, %v2279
        %v2880 = vpack.c.b16 %v2288, %v2280
        %v2881 = vpack.c.b16 %v2297, %v2289
        %v2882 = vpack.c.b16 %v2298, %v2290
        %v2883 = vpack.c.b16 %v2299, %v2291
        %v2884 = vpack.c.b16 %v2300, %v2292
        %v2885 = vpack.c.b16 %v2301, %v2293
        %v2886 = vpack.c.b16 %v2302, %v2294
        %v2887 = vpack.c.b16 %v2303, %v2295
        %v2888 = vpack.c.b16 %v2304, %v2296
        %v2889 = vpack.c.b16 %v2313, %v2305
        %v2890 = vpack.c.b16 %v2314, %v2306
        %v2891 = vpack.c.b16 %v2315, %v2307
        %v2892 = vpack.c.b16 %v2316, %v2308
        %v2893 = vpack.c.b16 %v2317, %v2309
        %v2894 = vpack.c.b16 %v2318, %v2310
        %v2895 = vpack.c.b16 %v2319, %v2311
        %v2896 = vpack.c.b16 %v2320, %v2312
        %v2897 = vpack.c.b16 %v2329, %v2321
        %v2898 = vpack.c.b16 %v2330, %v2322
        %v2899 = vpack.c.b16 %v2331, %v2323
        %v2900 = vpack.c.b16 %v2332, %v2324
        %v2901 = vpack.c.b16 %v2333, %v2325
        %v2902 = vpack.c.b16 %v2334, %v2326
        %v2903 = vpack.c.b16 %v2335, %v2327
        %v2904 = vpack.c.b16 %v2336, %v2328
        %v2905 = vpack.c.b16 %v2345, %v2337
        %v2906 = vpack.c.b16 %v2346, %v2338
        %v2907 = vpack.c.b16 %v2347, %v2339
        %v2908 = vpack.c.b16 %v2348, %v2340
        %v2909 = vpack.c.b16 %v2349, %v2341
        %v2910 = vpack.c.b16 %v2350, %v2342
        %v2911 = vpack.c.b16 %v2351, %v2343
        %v2912 = vpack.c.b16 %v2352, %v2344
        %v2913 = vpack.c.b16 %v2361, %v2353
        %v2914 = vpack.c.b16 %v2362, %v2354
        %v2915 = vpack.c.b16 %v2363, %v2355
        %v2916 = vpack.c.b16 %v2364, %v2356
        %v2917 = vpack.c.b16 %v2365, %v2357
        %v2918 = vpack.c.b16 %v2366, %v2358
        %v2919 = vpack.c.b16 %v2367, %v2359
        %v2920 = vpack.c.b16 %v2368, %v2360
        %v2921 = vpack.c.b16 %v2377, %v2369
        %v2922 = vpack.c.b16 %v2378, %v2370
        %v2923 = vpack.c.b16 %v2379, %v2371
        %v2924 = vpack.c.b16 %v2380, %v2372
        %v2925 = vpack.c.b16 %v2381, %v2373
        %v2926 = vpack.c.b16 %v2382, %v2374
        %v2927 = vpack.c.b16 %v2383, %v2375
        %v2928 = vpack.c.b16 %v2384, %v2376
        %v2929 = vpack.c.b16 %v2393, %v2385
        %v2930 = vpack.c.b16 %v2394, %v2386
        %v2931 = vpack.c.b16 %v2395, %v2387
        %v2932 = vpack.c.b16 %v2396, %v2388
        %v2933 = vpack.c.b16 %v2397, %v2389
        %v2934 = vpack.c.b16 %v2398, %v2390
        %v2935 = vpack.c.b16 %v2399, %v2391
        %v2936 = vpack.c.b16 %v2400, %v2392
        %v2937 = vpack.c.b16 %v2409, %v2401
        %v2938 = vpack.c.b16 %v2410, %v2402
        %v2939 = vpack.c.b16 %v2411, %v2403
        %v2940 = vpack.c.b16 %v2412, %v2404
        %v2941 = vpack.c.b16 %v2413, %v2405
        %v2942 = vpack.c.b16 %v2414, %v2406
        %v2943 = vpack.c.b16 %v2415, %v2407
        %v2944 = vpack.c.b16 %v2416, %v2408
        %v2945 = vpack.c.b16 %v2425, %v2417
        %v2946 = vpack.c.b16 %v2426, %v2418
        %v2947 = vpack.c.b16 %v2427, %v2419
        %v2948 = vpack.c.b16 %v2428, %v2420
        %v2949 = vpack.c.b16 %v2429, %v2421
        %v2950 = vpack.c.b16 %v2430, %v2422
        %v2951 = vpack.c.b16 %v2431, %v2423
        %v2952 = vpack.c.b16 %v2432, %v2424
        %v2953 = vpack.c.b16 %v2441, %v2433
        %v2954 = vpack.c.b16 %v2442, %v2434
        %v2955 = vpack.c.b16 %v2443, %v2435
        %v2956 = vpack.c.b16 %v2444, %v2436
        %v2957 = vpack.c.b16 %v2445, %v2437
        %v2958 = vpack.c.b16 %v2446, %v2438
        %v2959 = vpack.c.b16 %v2447, %v2439
        %v2960 = vpack.c.b16 %v2448, %v2440
        %3473 = vmatprep.subr.bf16.mxu0 %v2450
        %3474 = vmatpush1.bf16.msra.mxu0 %v2449
        %3475 = vmatprep.subr.bf16.mxu0 %v2458
        %3476 = vmatpush1.bf16.msra.mxu0 %v2457
        %3477 = vmatprep.subr.bf16.mxu0 %v2466
        %3478 = vmatpush1.bf16.msra.mxu0 %v2465
        %3479 = vmatprep.subr.bf16.mxu0 %v2474
        %3480 = vmatpush1.bf16.msra.mxu0 %v2473
        %3481 = vmatprep.subr.bf16.mxu0 %v2482
        %3482 = vmatpush1.bf16.msra.mxu0 %v2481
        %3483 = vmatprep.subr.bf16.mxu0 %v2490
        %3484 = vmatpush1.bf16.msra.mxu0 %v2489
        %3485 = vmatprep.subr.bf16.mxu0 %v2498
        %3486 = vmatpush1.bf16.msra.mxu0 %v2497
        %3487 = vmatprep.subr.bf16.mxu0 %v2506
        %3488 = vmatpush1.bf16.msra.mxu0 %v2505
        %3489 = vmatprep.subr.bf16.mxu0 %v2514
        %3490 = vmatpush1.bf16.msra.mxu0 %v2513
        %3491 = vmatprep.subr.bf16.mxu0 %v2522
        %3492 = vmatpush1.bf16.msra.mxu0 %v2521
        %3493 = vmatprep.subr.bf16.mxu0 %v2530
        %3494 = vmatpush1.bf16.msra.mxu0 %v2529
        %3495 = vmatprep.subr.bf16.mxu0 %v2538
        %3496 = vmatpush1.bf16.msra.mxu0 %v2537
        %3497 = vmatprep.subr.bf16.mxu0 %v2546
        %3498 = vmatpush1.bf16.msra.mxu0 %v2545
        %3499 = vmatprep.subr.bf16.mxu0 %v2554
        %3500 = vmatpush1.bf16.msra.mxu0 %v2553
        %3501 = vmatprep.subr.bf16.mxu0 %v2562
        %3502 = vmatpush1.bf16.msra.mxu0 %v2561
        %3503 = vmatprep.subr.bf16.mxu0 %v2570
        %3504 = vmatpush1.bf16.msra.mxu0 %v2569
        %3505 = vmatprep.mubr.bf16.mxu0 %v392
        %3506 = vmatmul.mubr.bf16.gmra.mrb[0].mxu0 %v391
        %v3507 = vpop.f32.mrb[0].mxu0
        %v3508 = vadd.f32 0.0, %v3507
        %v3509 = vpop.f32.mrb[0].mxu0
        %v3510 = vadd.f32 0.0, %v3509
        %v3511 = vpop.f32.mrb[0].mxu0
        %v3512 = vpop.f32.mrb[0].mxu0
        %3513 = vdwg.mxu0
        %3514 = vmatprep.subr.bf16.mxu0 %v2578
        %3515 = vmatpush1.bf16.msra.mxu0 %v2577
        %3516 = vmatprep.subr.bf16.mxu0 %v2586
        %3517 = vmatpush1.bf16.msra.mxu0 %v2585
        %3518 = vmatprep.subr.bf16.mxu0 %v2594
        %3519 = vmatpush1.bf16.msra.mxu0 %v2593
        %3520 = vmatprep.subr.bf16.mxu0 %v2602
        %3521 = vmatpush1.bf16.msra.mxu0 %v2601
        %3522 = vmatprep.subr.bf16.mxu0 %v2610
        %3523 = vmatpush1.bf16.msra.mxu0 %v2609
        %3524 = vmatprep.subr.bf16.mxu0 %v2618
        %3525 = vmatpush1.bf16.msra.mxu0 %v2617
        %3526 = vmatprep.subr.bf16.mxu0 %v2626
        %3527 = vmatpush1.bf16.msra.mxu0 %v2625
        %3528 = vmatprep.subr.bf16.mxu0 %v2634
        %3529 = vmatpush1.bf16.msra.mxu0 %v2633
        %3530 = vmatprep.subr.bf16.mxu0 %v2642
        %3531 = vmatpush1.bf16.msra.mxu0 %v2641
        %3532 = vmatprep.subr.bf16.mxu0 %v2650
        %3533 = vmatpush1.bf16.msra.mxu0 %v2649
        %3534 = vmatprep.subr.bf16.mxu0 %v2658
        %3535 = vmatpush1.bf16.msra.mxu0 %v2657
        %3536 = vmatprep.subr.bf16.mxu0 %v2666
        %3537 = vmatpush1.bf16.msra.mxu0 %v2665
        %3538 = vmatprep.subr.bf16.mxu0 %v2674
        %3539 = vmatpush1.bf16.msra.mxu0 %v2673
        %3540 = vmatprep.subr.bf16.mxu0 %v2682
        %3541 = vmatpush1.bf16.msra.mxu0 %v2681
        %3542 = vmatprep.subr.bf16.mxu0 %v2690
        %3543 = vmatpush1.bf16.msra.mxu0 %v2689
        %3544 = vmatprep.subr.bf16.mxu0 %v2698
        %3545 = vmatpush1.bf16.msra.mxu0 %v2697
        %3546 = vmatprep.mubr.bf16.mxu0 %v394
        %3547 = vmatmul.mubr.bf16.gmra.mrb[0].mxu0 %v393
        %v3548 = vpop.f32.mrb[0].mxu0
        %v3549 = vadd.f32 %v3508, %v3548
        %v3550 = vpop.f32.mrb[0].mxu0
        %v3551 = vadd.f32 %v3510, %v3550
        %v3552 = vpop.f32.mrb[0].mxu0
        %v3553 = vpop.f32.mrb[0].mxu0
        %3554 = vdwg.mxu0
        %3555 = vmatprep.subr.bf16.mxu0 %v2706
        %3556 = vmatpush1.bf16.msra.mxu0 %v2705
        %3557 = vmatprep.subr.bf16.mxu0 %v2714
        %3558 = vmatpush1.bf16.msra.mxu0 %v2713
        %3559 = vmatprep.subr.bf16.mxu0 %v2722
        %3560 = vmatpush1.bf16.msra.mxu0 %v2721
        %3561 = vmatprep.subr.bf16.mxu0 %v2730
        %3562 = vmatpush1.bf16.msra.mxu0 %v2729
        %3563 = vmatprep.subr.bf16.mxu0 %v2738
        %3564 = vmatpush1.bf16.msra.mxu0 %v2737
        %3565 = vmatprep.subr.bf16.mxu0 %v2746
        %3566 = vmatpush1.bf16.msra.mxu0 %v2745
        %3567 = vmatprep.subr.bf16.mxu0 %v2754
        %3568 = vmatpush1.bf16.msra.mxu0 %v2753
        %3569 = vmatprep.subr.bf16.mxu0 %v2762
        %3570 = vmatpush1.bf16.msra.mxu0 %v2761
        %3571 = vmatprep.subr.bf16.mxu0 %v2770
        %3572 = vmatpush1.bf16.msra.mxu0 %v2769
        %3573 = vmatprep.subr.bf16.mxu0 %v2778
        %3574 = vmatpush1.bf16.msra.mxu0 %v2777
        %3575 = vmatprep.subr.bf16.mxu0 %v2786
        %3576 = vmatpush1.bf16.msra.mxu0 %v2785
        %3577 = vmatprep.subr.bf16.mxu0 %v2794
        %3578 = vmatpush1.bf16.msra.mxu0 %v2793
        %3579 = vmatprep.subr.bf16.mxu0 %v2802
        %3580 = vmatpush1.bf16.msra.mxu0 %v2801
        %3581 = vmatprep.subr.bf16.mxu0 %v2810
        %3582 = vmatpush1.bf16.msra.mxu0 %v2809
        %3583 = vmatprep.subr.bf16.mxu0 %v2818
        %3584 = vmatpush1.bf16.msra.mxu0 %v2817
        %3585 = vmatprep.subr.bf16.mxu0 %v2826
        %3586 = vmatpush1.bf16.msra.mxu0 %v2825
        %3587 = vmatprep.mubr.bf16.mxu0 %v396
        %3588 = vmatmul.mubr.bf16.gmra.mrb[0].mxu0 %v395
        %v3589 = vpop.f32.mrb[0].mxu0
        %v3590 = vadd.f32 %v3549, %v3589
        %v3591 = vpop.f32.mrb[0].mxu0
        %v3592 = vadd.f32 %v3551, %v3591
        %v3593 = vpop.f32.mrb[0].mxu0
        %v3594 = vpop.f32.mrb[0].mxu0
        %3595 = vdwg.mxu0
        %3596 = vmatprep.subr.bf16.mxu0 %v2834
        %3597 = vmatpush1.bf16.msra.mxu0 %v2833
        %3598 = vmatprep.subr.bf16.mxu0 %v2842
        %3599 = vmatpush1.bf16.msra.mxu0 %v2841
        %3600 = vmatprep.subr.bf16.mxu0 %v2850
        %3601 = vmatpush1.bf16.msra.mxu0 %v2849
        %3602 = vmatprep.subr.bf16.mxu0 %v2858
        %3603 = vmatpush1.bf16.msra.mxu0 %v2857
        %3604 = vmatprep.subr.bf16.mxu0 %v2866
        %3605 = vmatpush1.bf16.msra.mxu0 %v2865
        %3606 = vmatprep.subr.bf16.mxu0 %v2874
        %3607 = vmatpush1.bf16.msra.mxu0 %v2873
        %3608 = vmatprep.subr.bf16.mxu0 %v2882
        %3609 = vmatpush1.bf16.msra.mxu0 %v2881
        %3610 = vmatprep.subr.bf16.mxu0 %v2890
        %3611 = vmatpush1.bf16.msra.mxu0 %v2889
        %3612 = vmatprep.subr.bf16.mxu0 %v2898
        %3613 = vmatpush1.bf16.msra.mxu0 %v2897
        %3614 = vmatprep.subr.bf16.mxu0 %v2906
        %3615 = vmatpush1.bf16.msra.mxu0 %v2905
        %3616 = vmatprep.subr.bf16.mxu0 %v2914
        %3617 = vmatpush1.bf16.msra.mxu0 %v2913
        %3618 = vmatprep.subr.bf16.mxu0 %v2922
        %3619 = vmatpush1.bf16.msra.mxu0 %v2921
        %3620 = vmatprep.subr.bf16.mxu0 %v2930
        %3621 = vmatpush1.bf16.msra.mxu0 %v2929
        %3622 = vmatprep.subr.bf16.mxu0 %v2938
        %3623 = vmatpush1.bf16.msra.mxu0 %v2937
        %3624 = vmatprep.subr.bf16.mxu0 %v2946
        %3625 = vmatpush1.bf16.msra.mxu0 %v2945
        %3626 = vmatprep.subr.bf16.mxu0 %v2954
        %3627 = vmatpush1.bf16.msra.mxu0 %v2953
        %3628 = vmatprep.mubr.bf16.mxu0 %v398
        %3629 = vmatmul.mubr.bf16.gmra.mrb[0].mxu0 %v397
        %v3630 = vpop.f32.mrb[0].mxu0
        %v3631 = vadd.f32 %v3590, %v3630
        %v3632 = vpop.f32.mrb[0].mxu0
        %v3633 = vadd.f32 %v3592, %v3632
        %v3634 = vpop.f32.mrb[0].mxu0
        %v3635 = vpop.f32.mrb[0].mxu0
        %3636 = vdwg.mxu0
        %3637 = vmatprep.subr.bf16.mxu0 %v2452
        %3638 = vmatpush1.bf16.msra.mxu0 %v2451
        %3639 = vmatprep.subr.bf16.mxu0 %v2460
        %3640 = vmatpush1.bf16.msra.mxu0 %v2459
        %3641 = vmatprep.subr.bf16.mxu0 %v2468
        %3642 = vmatpush1.bf16.msra.mxu0 %v2467
        %3643 = vmatprep.subr.bf16.mxu0 %v2476
        %3644 = vmatpush1.bf16.msra.mxu0 %v2475
        %3645 = vmatprep.subr.bf16.mxu0 %v2484
        %3646 = vmatpush1.bf16.msra.mxu0 %v2483
        %3647 = vmatprep.subr.bf16.mxu0 %v2492
        %3648 = vmatpush1.bf16.msra.mxu0 %v2491
        %3649 = vmatprep.subr.bf16.mxu0 %v2500
        %3650 = vmatpush1.bf16.msra.mxu0 %v2499
        %3651 = vmatprep.subr.bf16.mxu0 %v2508
        %3652 = vmatpush1.bf16.msra.mxu0 %v2507
        %3653 = vmatprep.subr.bf16.mxu0 %v2516
        %3654 = vmatpush1.bf16.msra.mxu0 %v2515
        %3655 = vmatprep.subr.bf16.mxu0 %v2524
        %3656 = vmatpush1.bf16.msra.mxu0 %v2523
        %3657 = vmatprep.subr.bf16.mxu0 %v2532
        %3658 = vmatpush1.bf16.msra.mxu0 %v2531
        %3659 = vmatprep.subr.bf16.mxu0 %v2540
        %3660 = vmatpush1.bf16.msra.mxu0 %v2539
        %3661 = vmatprep.subr.bf16.mxu0 %v2548
        %3662 = vmatpush1.bf16.msra.mxu0 %v2547
        %3663 = vmatprep.subr.bf16.mxu0 %v2556
        %3664 = vmatpush1.bf16.msra.mxu0 %v2555
        %3665 = vmatprep.subr.bf16.mxu0 %v2564
        %3666 = vmatpush1.bf16.msra.mxu0 %v2563
        %3667 = vmatprep.subr.bf16.mxu0 %v2572
        %3668 = vmatpush1.bf16.msra.mxu0 %v2571
        %3669 = vmatprep.mubr.bf16.mxu0 %v392
        %3670 = vmatmul.mubr.bf16.gmra.mrb[0].mxu0 %v391
        %v3671 = vpop.f32.mrb[0].mxu0
        %v3672 = vadd.f32 0.0, %v3671
        %v3673 = vpop.f32.mrb[0].mxu0
        %v3674 = vadd.f32 0.0, %v3673
        %v3675 = vpop.f32.mrb[0].mxu0
        %v3676 = vpop.f32.mrb[0].mxu0
        %3677 = vdwg.mxu0
        %3678 = vmatprep.subr.bf16.mxu0 %v2580
        %3679 = vmatpush1.bf16.msra.mxu0 %v2579
        %3680 = vmatprep.subr.bf16.mxu0 %v2588
        %3681 = vmatpush1.bf16.msra.mxu0 %v2587
        %3682 = vmatprep.subr.bf16.mxu0 %v2596
        %3683 = vmatpush1.bf16.msra.mxu0 %v2595
        %3684 = vmatprep.subr.bf16.mxu0 %v2604
        %3685 = vmatpush1.bf16.msra.mxu0 %v2603
        %3686 = vmatprep.subr.bf16.mxu0 %v2612
        %3687 = vmatpush1.bf16.msra.mxu0 %v2611
        %3688 = vmatprep.subr.bf16.mxu0 %v2620
        %3689 = vmatpush1.bf16.msra.mxu0 %v2619
        %3690 = vmatprep.subr.bf16.mxu0 %v2628
        %3691 = vmatpush1.bf16.msra.mxu0 %v2627
        %3692 = vmatprep.subr.bf16.mxu0 %v2636
        %3693 = vmatpush1.bf16.msra.mxu0 %v2635
        %3694 = vmatprep.subr.bf16.mxu0 %v2644
        %3695 = vmatpush1.bf16.msra.mxu0 %v2643
        %3696 = vmatprep.subr.bf16.mxu0 %v2652
        %3697 = vmatpush1.bf16.msra.mxu0 %v2651
        %3698 = vmatprep.subr.bf16.mxu0 %v2660
        %3699 = vmatpush1.bf16.msra.mxu0 %v2659
        %3700 = vmatprep.subr.bf16.mxu0 %v2668
        %3701 = vmatpush1.bf16.msra.mxu0 %v2667
        %3702 = vmatprep.subr.bf16.mxu0 %v2676
        %3703 = vmatpush1.bf16.msra.mxu0 %v2675
        %3704 = vmatprep.subr.bf16.mxu0 %v2684
        %3705 = vmatpush1.bf16.msra.mxu0 %v2683
        %3706 = vmatprep.subr.bf16.mxu0 %v2692
        %3707 = vmatpush1.bf16.msra.mxu0 %v2691
        %3708 = vmatprep.subr.bf16.mxu0 %v2700
        %3709 = vmatpush1.bf16.msra.mxu0 %v2699
        %3710 = vmatprep.mubr.bf16.mxu0 %v394
        %3711 = vmatmul.mubr.bf16.gmra.mrb[0].mxu0 %v393
        %v3712 = vpop.f32.mrb[0].mxu0
        %v3713 = vadd.f32 %v3672, %v3712
        %v3714 = vpop.f32.mrb[0].mxu0
        %v3715 = vadd.f32 %v3674, %v3714
        %v3716 = vpop.f32.mrb[0].mxu0
        %v3717 = vpop.f32.mrb[0].mxu0
        %3718 = vdwg.mxu0
        %3719 = vmatprep.subr.bf16.mxu0 %v2708
        %3720 = vmatpush1.bf16.msra.mxu0 %v2707
        %3721 = vmatprep.subr.bf16.mxu0 %v2716
        %3722 = vmatpush1.bf16.msra.mxu0 %v2715
        %3723 = vmatprep.subr.bf16.mxu0 %v2724
        %3724 = vmatpush1.bf16.msra.mxu0 %v2723
        %3725 = vmatprep.subr.bf16.mxu0 %v2732
        %3726 = vmatpush1.bf16.msra.mxu0 %v2731
        %3727 = vmatprep.subr.bf16.mxu0 %v2740
        %3728 = vmatpush1.bf16.msra.mxu0 %v2739
        %3729 = vmatprep.subr.bf16.mxu0 %v2748
        %3730 = vmatpush1.bf16.msra.mxu0 %v2747
        %3731 = vmatprep.subr.bf16.mxu0 %v2756
        %3732 = vmatpush1.bf16.msra.mxu0 %v2755
        %3733 = vmatprep.subr.bf16.mxu0 %v2764
        %3734 = vmatpush1.bf16.msra.mxu0 %v2763
        %3735 = vmatprep.subr.bf16.mxu0 %v2772
        %3736 = vmatpush1.bf16.msra.mxu0 %v2771
        %3737 = vmatprep.subr.bf16.mxu0 %v2780
        %3738 = vmatpush1.bf16.msra.mxu0 %v2779
        %3739 = vmatprep.subr.bf16.mxu0 %v2788
        %3740 = vmatpush1.bf16.msra.mxu0 %v2787
        %3741 = vmatprep.subr.bf16.mxu0 %v2796
        %3742 = vmatpush1.bf16.msra.mxu0 %v2795
        %3743 = vmatprep.subr.bf16.mxu0 %v2804
        %3744 = vmatpush1.bf16.msra.mxu0 %v2803
        %3745 = vmatprep.subr.bf16.mxu0 %v2812
        %3746 = vmatpush1.bf16.msra.mxu0 %v2811
        %3747 = vmatprep.subr.bf16.mxu0 %v2820
        %3748 = vmatpush1.bf16.msra.mxu0 %v2819
        %3749 = vmatprep.subr.bf16.mxu0 %v2828
        %3750 = vmatpush1.bf16.msra.mxu0 %v2827
        %3751 = vmatprep.mubr.bf16.mxu0 %v396
        %3752 = vmatmul.mubr.bf16.gmra.mrb[0].mxu0 %v395
        %v3753 = vpop.f32.mrb[0].mxu0
        %v3754 = vadd.f32 %v3713, %v3753
        %v3755 = vpop.f32.mrb[0].mxu0
        %v3756 = vadd.f32 %v3715, %v3755
        %v3757 = vpop.f32.mrb[0].mxu0
        %v3758 = vpop.f32.mrb[0].mxu0
        %3759 = vdwg.mxu0
        %3760 = vmatprep.subr.bf16.mxu0 %v2836
        %3761 = vmatpush1.bf16.msra.mxu0 %v2835
        %3762 = vmatprep.subr.bf16.mxu0 %v2844
        %3763 = vmatpush1.bf16.msra.mxu0 %v2843
        %3764 = vmatprep.subr.bf16.mxu0 %v2852
        %3765 = vmatpush1.bf16.msra.mxu0 %v2851
        %3766 = vmatprep.subr.bf16.mxu0 %v2860
        %3767 = vmatpush1.bf16.msra.mxu0 %v2859
        %3768 = vmatprep.subr.bf16.mxu0 %v2868
        %3769 = vmatpush1.bf16.msra.mxu0 %v2867
        %3770 = vmatprep.subr.bf16.mxu0 %v2876
        %3771 = vmatpush1.bf16.msra.mxu0 %v2875
        %3772 = vmatprep.subr.bf16.mxu0 %v2884
        %3773 = vmatpush1.bf16.msra.mxu0 %v2883
        %3774 = vmatprep.subr.bf16.mxu0 %v2892
        %3775 = vmatpush1.bf16.msra.mxu0 %v2891
        %3776 = vmatprep.subr.bf16.mxu0 %v2900
        %3777 = vmatpush1.bf16.msra.mxu0 %v2899
        %3778 = vmatprep.subr.bf16.mxu0 %v2908
        %3779 = vmatpush1.bf16.msra.mxu0 %v2907
        %3780 = vmatprep.subr.bf16.mxu0 %v2916
        %3781 = vmatpush1.bf16.msra.mxu0 %v2915
        %3782 = vmatprep.subr.bf16.mxu0 %v2924
        %3783 = vmatpush1.bf16.msra.mxu0 %v2923
        %3784 = vmatprep.subr.bf16.mxu0 %v2932
        %3785 = vmatpush1.bf16.msra.mxu0 %v2931
        %3786 = vmatprep.subr.bf16.mxu0 %v2940
        %3787 = vmatpush1.bf16.msra.mxu0 %v2939
        %3788 = vmatprep.subr.bf16.mxu0 %v2948
        %3789 = vmatpush1.bf16.msra.mxu0 %v2947
        %3790 = vmatprep.subr.bf16.mxu0 %v2956
        %3791 = vmatpush1.bf16.msra.mxu0 %v2955
        %3792 = vmatprep.mubr.bf16.mxu0 %v398
        %3793 = vmatmul.mubr.bf16.gmra.mrb[0].mxu0 %v397
        %v3794 = vpop.f32.mrb[0].mxu0
        %v3795 = vadd.f32 %v3754, %v3794
        %v3796 = vpop.f32.mrb[0].mxu0
        %v3797 = vadd.f32 %v3756, %v3796
        %v3798 = vpop.f32.mrb[0].mxu0
        %v3799 = vpop.f32.mrb[0].mxu0
        %3800 = vdwg.mxu0
        %3801 = vmatprep.subr.bf16.mxu0 %v2454
        %3802 = vmatpush1.bf16.msra.mxu0 %v2453
        %3803 = vmatprep.subr.bf16.mxu0 %v2462
        %3804 = vmatpush1.bf16.msra.mxu0 %v2461
        %3805 = vmatprep.subr.bf16.mxu0 %v2470
        %3806 = vmatpush1.bf16.msra.mxu0 %v2469
        %3807 = vmatprep.subr.bf16.mxu0 %v2478
        %3808 = vmatpush1.bf16.msra.mxu0 %v2477
        %3809 = vmatprep.subr.bf16.mxu0 %v2486
        %3810 = vmatpush1.bf16.msra.mxu0 %v2485
        %3811 = vmatprep.subr.bf16.mxu0 %v2494
        %3812 = vmatpush1.bf16.msra.mxu0 %v2493
        %3813 = vmatprep.subr.bf16.mxu0 %v2502
        %3814 = vmatpush1.bf16.msra.mxu0 %v2501
        %3815 = vmatprep.subr.bf16.mxu0 %v2510
        %3816 = vmatpush1.bf16.msra.mxu0 %v2509
        %3817 = vmatprep.subr.bf16.mxu0 %v2518
        %3818 = vmatpush1.bf16.msra.mxu0 %v2517
        %3819 = vmatprep.subr.bf16.mxu0 %v2526
        %3820 = vmatpush1.bf16.msra.mxu0 %v2525
        %3821 = vmatprep.subr.bf16.mxu0 %v2534
        %3822 = vmatpush1.bf16.msra.mxu0 %v2533
        %3823 = vmatprep.subr.bf16.mxu0 %v2542
        %3824 = vmatpush1.bf16.msra.mxu0 %v2541
        %3825 = vmatprep.subr.bf16.mxu0 %v2550
        %3826 = vmatpush1.bf16.msra.mxu0 %v2549
        %3827 = vmatprep.subr.bf16.mxu0 %v2558
        %3828 = vmatpush1.bf16.msra.mxu0 %v2557
        %3829 = vmatprep.subr.bf16.mxu0 %v2566
        %3830 = vmatpush1.bf16.msra.mxu0 %v2565
        %3831 = vmatprep.subr.bf16.mxu0 %v2574
        %3832 = vmatpush1.bf16.msra.mxu0 %v2573
        %3833 = vmatprep.mubr.bf16.mxu0 %v392
        %3834 = vmatmul.mubr.bf16.gmra.mrb[0].mxu0 %v391
        %v3835 = vpop.f32.mrb[0].mxu0
        %v3836 = vadd.f32 0.0, %v3835
        %v3837 = vpop.f32.mrb[0].mxu0
        %v3838 = vadd.f32 0.0, %v3837
        %v3839 = vpop.f32.mrb[0].mxu0
        %v3840 = vpop.f32.mrb[0].mxu0
        %3841 = vdwg.mxu0
        %3842 = vmatprep.subr.bf16.mxu0 %v2582
        %3843 = vmatpush1.bf16.msra.mxu0 %v2581
        %3844 = vmatprep.subr.bf16.mxu0 %v2590
        %3845 = vmatpush1.bf16.msra.mxu0 %v2589
        %3846 = vmatprep.subr.bf16.mxu0 %v2598
        %3847 = vmatpush1.bf16.msra.mxu0 %v2597
        %3848 = vmatprep.subr.bf16.mxu0 %v2606
        %3849 = vmatpush1.bf16.msra.mxu0 %v2605
        %3850 = vmatprep.subr.bf16.mxu0 %v2614
        %3851 = vmatpush1.bf16.msra.mxu0 %v2613
        %3852 = vmatprep.subr.bf16.mxu0 %v2622
        %3853 = vmatpush1.bf16.msra.mxu0 %v2621
        %3854 = vmatprep.subr.bf16.mxu0 %v2630
        %3855 = vmatpush1.bf16.msra.mxu0 %v2629
        %3856 = vmatprep.subr.bf16.mxu0 %v2638
        %3857 = vmatpush1.bf16.msra.mxu0 %v2637
        %3858 = vmatprep.subr.bf16.mxu0 %v2646
        %3859 = vmatpush1.bf16.msra.mxu0 %v2645
        %3860 = vmatprep.subr.bf16.mxu0 %v2654
        %3861 = vmatpush1.bf16.msra.mxu0 %v2653
        %3862 = vmatprep.subr.bf16.mxu0 %v2662
        %3863 = vmatpush1.bf16.msra.mxu0 %v2661
        %3864 = vmatprep.subr.bf16.mxu0 %v2670
        %3865 = vmatpush1.bf16.msra.mxu0 %v2669
        %3866 = vmatprep.subr.bf16.mxu0 %v2678
        %3867 = vmatpush1.bf16.msra.mxu0 %v2677
        %3868 = vmatprep.subr.bf16.mxu0 %v2686
        %3869 = vmatpush1.bf16.msra.mxu0 %v2685
        %3870 = vmatprep.subr.bf16.mxu0 %v2694
        %3871 = vmatpush1.bf16.msra.mxu0 %v2693
        %3872 = vmatprep.subr.bf16.mxu0 %v2702
        %3873 = vmatpush1.bf16.msra.mxu0 %v2701
        %3874 = vmatprep.mubr.bf16.mxu0 %v394
        %3875 = vmatmul.mubr.bf16.gmra.mrb[0].mxu0 %v393
        %v3876 = vpop.f32.mrb[0].mxu0
        %v3877 = vadd.f32 %v3836, %v3876
        %v3878 = vpop.f32.mrb[0].mxu0
        %v3879 = vadd.f32 %v3838, %v3878
        %v3880 = vpop.f32.mrb[0].mxu0
        %v3881 = vpop.f32.mrb[0].mxu0
        %3882 = vdwg.mxu0
        %3883 = vmatprep.subr.bf16.mxu0 %v2710
        %3884 = vmatpush1.bf16.msra.mxu0 %v2709
        %3885 = vmatprep.subr.bf16.mxu0 %v2718
        %3886 = vmatpush1.bf16.msra.mxu0 %v2717
        %3887 = vmatprep.subr.bf16.mxu0 %v2726
        %3888 = vmatpush1.bf16.msra.mxu0 %v2725
        %3889 = vmatprep.subr.bf16.mxu0 %v2734
        %3890 = vmatpush1.bf16.msra.mxu0 %v2733
        %3891 = vmatprep.subr.bf16.mxu0 %v2742
        %3892 = vmatpush1.bf16.msra.mxu0 %v2741
        %3893 = vmatprep.subr.bf16.mxu0 %v2750
        %3894 = vmatpush1.bf16.msra.mxu0 %v2749
        %3895 = vmatprep.subr.bf16.mxu0 %v2758
        %3896 = vmatpush1.bf16.msra.mxu0 %v2757
        %3897 = vmatprep.subr.bf16.mxu0 %v2766
        %3898 = vmatpush1.bf16.msra.mxu0 %v2765
        %3899 = vmatprep.subr.bf16.mxu0 %v2774
        %3900 = vmatpush1.bf16.msra.mxu0 %v2773
        %3901 = vmatprep.subr.bf16.mxu0 %v2782
        %3902 = vmatpush1.bf16.msra.mxu0 %v2781
        %3903 = vmatprep.subr.bf16.mxu0 %v2790
        %3904 = vmatpush1.bf16.msra.mxu0 %v2789
        %3905 = vmatprep.subr.bf16.mxu0 %v2798
        %3906 = vmatpush1.bf16.msra.mxu0 %v2797
        %3907 = vmatprep.subr.bf16.mxu0 %v2806
        %3908 = vmatpush1.bf16.msra.mxu0 %v2805
        %3909 = vmatprep.subr.bf16.mxu0 %v2814
        %3910 = vmatpush1.bf16.msra.mxu0 %v2813
        %3911 = vmatprep.subr.bf16.mxu0 %v2822
        %3912 = vmatpush1.bf16.msra.mxu0 %v2821
        %3913 = vmatprep.subr.bf16.mxu0 %v2830
        %3914 = vmatpush1.bf16.msra.mxu0 %v2829
        %3915 = vmatprep.mubr.bf16.mxu0 %v396
        %3916 = vmatmul.mubr.bf16.gmra.mrb[0].mxu0 %v395
        %v3917 = vpop.f32.mrb[0].mxu0
        %v3918 = vadd.f32 %v3877, %v3917
        %v3919 = vpop.f32.mrb[0].mxu0
        %v3920 = vadd.f32 %v3879, %v3919
        %v3921 = vpop.f32.mrb[0].mxu0
        %v3922 = vpop.f32.mrb[0].mxu0
        %3923 = vdwg.mxu0
        %3924 = vmatprep.subr.bf16.mxu0 %v2838
        %3925 = vmatpush1.bf16.msra.mxu0 %v2837
        %3926 = vmatprep.subr.bf16.mxu0 %v2846
        %3927 = vmatpush1.bf16.msra.mxu0 %v2845
        %3928 = vmatprep.subr.bf16.mxu0 %v2854
        %3929 = vmatpush1.bf16.msra.mxu0 %v2853
        %3930 = vmatprep.subr.bf16.mxu0 %v2862
        %3931 = vmatpush1.bf16.msra.mxu0 %v2861
        %3932 = vmatprep.subr.bf16.mxu0 %v2870
        %3933 = vmatpush1.bf16.msra.mxu0 %v2869
        %3934 = vmatprep.subr.bf16.mxu0 %v2878
        %3935 = vmatpush1.bf16.msra.mxu0 %v2877
        %3936 = vmatprep.subr.bf16.mxu0 %v2886
        %3937 = vmatpush1.bf16.msra.mxu0 %v2885
        %3938 = vmatprep.subr.bf16.mxu0 %v2894
        %3939 = vmatpush1.bf16.msra.mxu0 %v2893
        %3940 = vmatprep.subr.bf16.mxu0 %v2902
        %3941 = vmatpush1.bf16.msra.mxu0 %v2901
        %3942 = vmatprep.subr.bf16.mxu0 %v2910
        %3943 = vmatpush1.bf16.msra.mxu0 %v2909
        %3944 = vmatprep.subr.bf16.mxu0 %v2918
        %3945 = vmatpush1.bf16.msra.mxu0 %v2917
        %3946 = vmatprep.subr.bf16.mxu0 %v2926
        %3947 = vmatpush1.bf16.msra.mxu0 %v2925
        %3948 = vmatprep.subr.bf16.mxu0 %v2934
        %3949 = vmatpush1.bf16.msra.mxu0 %v2933
        %3950 = vmatprep.subr.bf16.mxu0 %v2942
        %3951 = vmatpush1.bf16.msra.mxu0 %v2941
        %3952 = vmatprep.subr.bf16.mxu0 %v2950
        %3953 = vmatpush1.bf16.msra.mxu0 %v2949
        %3954 = vmatprep.subr.bf16.mxu0 %v2958
        %3955 = vmatpush1.bf16.msra.mxu0 %v2957
        %3956 = vmatprep.mubr.bf16.mxu0 %v398
        %3957 = vmatmul.mubr.bf16.gmra.mrb[0].mxu0 %v397
        %v3958 = vpop.f32.mrb[0].mxu0
        %v3959 = vadd.f32 %v3918, %v3958
        %v3960 = vpop.f32.mrb[0].mxu0
        %v3961 = vadd.f32 %v3920, %v3960
        %v3962 = vpop.f32.mrb[0].mxu0
        %v3963 = vpop.f32.mrb[0].mxu0
        %3964 = vdwg.mxu0
        %3965 = vmatprep.subr.bf16.mxu0 %v2456
        %3966 = vmatpush1.bf16.msra.mxu0 %v2455
        %3967 = vmatprep.subr.bf16.mxu0 %v2464
        %3968 = vmatpush1.bf16.msra.mxu0 %v2463
        %3969 = vmatprep.subr.bf16.mxu0 %v2472
        %3970 = vmatpush1.bf16.msra.mxu0 %v2471
        %3971 = vmatprep.subr.bf16.mxu0 %v2480
        %3972 = vmatpush1.bf16.msra.mxu0 %v2479
        %3973 = vmatprep.subr.bf16.mxu0 %v2488
        %3974 = vmatpush1.bf16.msra.mxu0 %v2487
        %3975 = vmatprep.subr.bf16.mxu0 %v2496
        %3976 = vmatpush1.bf16.msra.mxu0 %v2495
        %3977 = vmatprep.subr.bf16.mxu0 %v2504
        %3978 = vmatpush1.bf16.msra.mxu0 %v2503
        %3979 = vmatprep.subr.bf16.mxu0 %v2512
        %3980 = vmatpush1.bf16.msra.mxu0 %v2511
        %3981 = vmatprep.subr.bf16.mxu0 %v2520
        %3982 = vmatpush1.bf16.msra.mxu0 %v2519
        %3983 = vmatprep.subr.bf16.mxu0 %v2528
        %3984 = vmatpush1.bf16.msra.mxu0 %v2527
        %3985 = vmatprep.subr.bf16.mxu0 %v2536
        %3986 = vmatpush1.bf16.msra.mxu0 %v2535
        %3987 = vmatprep.subr.bf16.mxu0 %v2544
        %3988 = vmatpush1.bf16.msra.mxu0 %v2543
        %3989 = vmatprep.subr.bf16.mxu0 %v2552
        %3990 = vmatpush1.bf16.msra.mxu0 %v2551
        %3991 = vmatprep.subr.bf16.mxu0 %v2560
        %3992 = vmatpush1.bf16.msra.mxu0 %v2559
        %3993 = vmatprep.subr.bf16.mxu0 %v2568
        %3994 = vmatpush1.bf16.msra.mxu0 %v2567
        %3995 = vmatprep.subr.bf16.mxu0 %v2576
        %3996 = vmatpush1.bf16.msra.mxu0 %v2575
        %3997 = vmatprep.mubr.bf16.mxu0 %v392
        %3998 = vmatmul.mubr.bf16.gmra.mrb[0].mxu0 %v391
        %v3999 = vpop.f32.mrb[0].mxu0
        %v4000 = vadd.f32 0.0, %v3999
        %v4001 = vpop.f32.mrb[0].mxu0
        %v4002 = vadd.f32 0.0, %v4001
        %v4003 = vpop.f32.mrb[0].mxu0
        %v4004 = vpop.f32.mrb[0].mxu0
        %4005 = vdwg.mxu0
        %4006 = vmatprep.subr.bf16.mxu0 %v2584
        %4007 = vmatpush1.bf16.msra.mxu0 %v2583
        %4008 = vmatprep.subr.bf16.mxu0 %v2592
        %4009 = vmatpush1.bf16.msra.mxu0 %v2591
        %4010 = vmatprep.subr.bf16.mxu0 %v2600
        %4011 = vmatpush1.bf16.msra.mxu0 %v2599
        %4012 = vmatprep.subr.bf16.mxu0 %v2608
        %4013 = vmatpush1.bf16.msra.mxu0 %v2607
        %4014 = vmatprep.subr.bf16.mxu0 %v2616
        %4015 = vmatpush1.bf16.msra.mxu0 %v2615
        %4016 = vmatprep.subr.bf16.mxu0 %v2624
        %4017 = vmatpush1.bf16.msra.mxu0 %v2623
        %4018 = vmatprep.subr.bf16.mxu0 %v2632
        %4019 = vmatpush1.bf16.msra.mxu0 %v2631
        %4020 = vmatprep.subr.bf16.mxu0 %v2640
        %4021 = vmatpush1.bf16.msra.mxu0 %v2639
        %4022 = vmatprep.subr.bf16.mxu0 %v2648
        %4023 = vmatpush1.bf16.msra.mxu0 %v2647
        %4024 = vmatprep.subr.bf16.mxu0 %v2656
        %4025 = vmatpush1.bf16.msra.mxu0 %v2655
        %4026 = vmatprep.subr.bf16.mxu0 %v2664
        %4027 = vmatpush1.bf16.msra.mxu0 %v2663
        %4028 = vmatprep.subr.bf16.mxu0 %v2672
        %4029 = vmatpush1.bf16.msra.mxu0 %v2671
        %4030 = vmatprep.subr.bf16.mxu0 %v2680
        %4031 = vmatpush1.bf16.msra.mxu0 %v2679
        %4032 = vmatprep.subr.bf16.mxu0 %v2688
        %4033 = vmatpush1.bf16.msra.mxu0 %v2687
        %4034 = vmatprep.subr.bf16.mxu0 %v2696
        %4035 = vmatpush1.bf16.msra.mxu0 %v2695
        %4036 = vmatprep.subr.bf16.mxu0 %v2704
        %4037 = vmatpush1.bf16.msra.mxu0 %v2703
        %4038 = vmatprep.mubr.bf16.mxu0 %v394
        %4039 = vmatmul.mubr.bf16.gmra.mrb[0].mxu0 %v393
        %v4040 = vpop.f32.mrb[0].mxu0
        %v4041 = vadd.f32 %v4000, %v4040
        %v4042 = vpop.f32.mrb[0].mxu0
        %v4043 = vadd.f32 %v4002, %v4042
        %v4044 = vpop.f32.mrb[0].mxu0
        %v4045 = vpop.f32.mrb[0].mxu0
        %4046 = vdwg.mxu0
        %4047 = vmatprep.subr.bf16.mxu0 %v2712
        %4048 = vmatpush1.bf16.msra.mxu0 %v2711
        %4049 = vmatprep.subr.bf16.mxu0 %v2720
        %4050 = vmatpush1.bf16.msra.mxu0 %v2719
        %4051 = vmatprep.subr.bf16.mxu0 %v2728
        %4052 = vmatpush1.bf16.msra.mxu0 %v2727
        %4053 = vmatprep.subr.bf16.mxu0 %v2736
        %4054 = vmatpush1.bf16.msra.mxu0 %v2735
        %4055 = vmatprep.subr.bf16.mxu0 %v2744
        %4056 = vmatpush1.bf16.msra.mxu0 %v2743
        %4057 = vmatprep.subr.bf16.mxu0 %v2752
        %4058 = vmatpush1.bf16.msra.mxu0 %v2751
        %4059 = vmatprep.subr.bf16.mxu0 %v2760
        %4060 = vmatpush1.bf16.msra.mxu0 %v2759
        %4061 = vmatprep.subr.bf16.mxu0 %v2768
        %4062 = vmatpush1.bf16.msra.mxu0 %v2767
        %4063 = vmatprep.subr.bf16.mxu0 %v2776
        %4064 = vmatpush1.bf16.msra.mxu0 %v2775
        %4065 = vmatprep.subr.bf16.mxu0 %v2784
        %4066 = vmatpush1.bf16.msra.mxu0 %v2783
        %4067 = vmatprep.subr.bf16.mxu0 %v2792
        %4068 = vmatpush1.bf16.msra.mxu0 %v2791
        %4069 = vmatprep.subr.bf16.mxu0 %v2800
        %4070 = vmatpush1.bf16.msra.mxu0 %v2799
        %4071 = vmatprep.subr.bf16.mxu0 %v2808
        %4072 = vmatpush1.bf16.msra.mxu0 %v2807
        %4073 = vmatprep.subr.bf16.mxu0 %v2816
        %4074 = vmatpush1.bf16.msra.mxu0 %v2815
        %4075 = vmatprep.subr.bf16.mxu0 %v2824
        %4076 = vmatpush1.bf16.msra.mxu0 %v2823
        %4077 = vmatprep.subr.bf16.mxu0 %v2832
        %4078 = vmatpush1.bf16.msra.mxu0 %v2831
        %4079 = vmatprep.mubr.bf16.mxu0 %v396
        %4080 = vmatmul.mubr.bf16.gmra.mrb[0].mxu0 %v395
        %v4081 = vpop.f32.mrb[0].mxu0
        %v4082 = vadd.f32 %v4041, %v4081
        %v4083 = vpop.f32.mrb[0].mxu0
        %v4084 = vadd.f32 %v4043, %v4083
        %v4085 = vpop.f32.mrb[0].mxu0
        %v4086 = vpop.f32.mrb[0].mxu0
        %4087 = vdwg.mxu0
        %4088 = vmatprep.subr.bf16.mxu0 %v2840
        %4089 = vmatpush1.bf16.msra.mxu0 %v2839
        %4090 = vmatprep.subr.bf16.mxu0 %v2848
        %4091 = vmatpush1.bf16.msra.mxu0 %v2847
        %4092 = vmatprep.subr.bf16.mxu0 %v2856
        %4093 = vmatpush1.bf16.msra.mxu0 %v2855
        %4094 = vmatprep.subr.bf16.mxu0 %v2864
        %4095 = vmatpush1.bf16.msra.mxu0 %v2863
        %4096 = vmatprep.subr.bf16.mxu0 %v2872
        %4097 = vmatpush1.bf16.msra.mxu0 %v2871
        %4098 = vmatprep.subr.bf16.mxu0 %v2880
        %4099 = vmatpush1.bf16.msra.mxu0 %v2879
        %4100 = vmatprep.subr.bf16.mxu0 %v2888
        %4101 = vmatpush1.bf16.msra.mxu0 %v2887
        %4102 = vmatprep.subr.bf16.mxu0 %v2896
        %4103 = vmatpush1.bf16.msra.mxu0 %v2895
        %4104 = vmatprep.subr.bf16.mxu0 %v2904
        %4105 = vmatpush1.bf16.msra.mxu0 %v2903
        %4106 = vmatprep.subr.bf16.mxu0 %v2912
        %4107 = vmatpush1.bf16.msra.mxu0 %v2911
        %4108 = vmatprep.subr.bf16.mxu0 %v2920
        %4109 = vmatpush1.bf16.msra.mxu0 %v2919
        %4110 = vmatprep.subr.bf16.mxu0 %v2928
        %4111 = vmatpush1.bf16.msra.mxu0 %v2927
        %4112 = vmatprep.subr.bf16.mxu0 %v2936
        %4113 = vmatpush1.bf16.msra.mxu0 %v2935
        %4114 = vmatprep.subr.bf16.mxu0 %v2944
        %4115 = vmatpush1.bf16.msra.mxu0 %v2943
        %4116 = vmatprep.subr.bf16.mxu0 %v2952
        %4117 = vmatpush1.bf16.msra.mxu0 %v2951
        %4118 = vmatprep.subr.bf16.mxu0 %v2960
        %4119 = vmatpush1.bf16.msra.mxu0 %v2959
        %4120 = vmatprep.mubr.bf16.mxu0 %v398
        %4121 = vmatmul.mubr.bf16.gmra.mrb[0].mxu0 %v397
        %v4122 = vpop.f32.mrb[0].mxu0
        %v4123 = vadd.f32 %v4082, %v4122
        %v4124 = vpop.f32.mrb[0].mxu0
        %v4125 = vadd.f32 %v4084, %v4124
        %v4126 = vpop.f32.mrb[0].mxu0
        %v4127 = vpop.f32.mrb[0].mxu0
        %4128 = vdwg.mxu0
        %v4137 = vcombine.low %v3631, %v3633
        %v4138 = vcombine.low %v3795, %v3797
        %v4140 = vunpack.c.l.s4 1983009808
        %v4141 = vunpack.c.0.s8 %v4140
        %v4142 = vlaneseq
        %v4143 = vshrl.u32 %v4142, 7
        %v4144 = vsub.s32 %v4141, %v4143
        %v4145 = vrot.slane %v4137, %v4144
        %v4147 = vunpack.c.l.s4 1983009808
        %v4148 = vunpack.c.0.s8 %v4147
        %v4149 = vlaneseq
        %v4150 = vshrl.u32 %v4149, 7
        %v4151 = vsub.s32 %v4148, %v4150
        %v4152 = vrot.slane %v4138, %v4151
        %v4153 = vcombine.low %v4145, %v4152
        %v4154 = vcombine.low %v3959, %v3961
        %v4155 = vcombine.low %v4123, %v4125
        %v4157 = vunpack.c.l.s4 1983009808
        %v4158 = vunpack.c.0.s8 %v4157
        %v4159 = vlaneseq
        %v4160 = vshrl.u32 %v4159, 7
        %v4161 = vsub.s32 %v4158, %v4160
        %v4162 = vrot.slane %v4154, %v4161
        %v4164 = vunpack.c.l.s4 1983009808
        %v4165 = vunpack.c.0.s8 %v4164
        %v4166 = vlaneseq
        %v4167 = vshrl.u32 %v4166, 7
        %v4168 = vsub.s32 %v4165, %v4167
        %v4169 = vrot.slane %v4155, %v4168
        %v4170 = vcombine.low %v4162, %v4169
        %v4173 = vadd.f32 %v399, %v4153
        %v4174 = vadd.f32 %v400, %v4170
        %4175 = vst [vmem:[#allocation2] sm:$0xff] %v4173
        %4176 = vst [vmem:[#allocation2 + $0x8] sm:$0xff] %v4174
        %p4177 = scmp.eq.s32.totalorder %s26, 7
        // Predicated region
        $region53: #{classify_layer.2} parent=35 // pred_check
          %p4178 = pneg %p4177
        $region54: #{classify_layer.2} parent=35 // pred_check_branch
          %4180 = sbr.rel (%p4178) target = $region56
        $region55: #{classify_layer.2} parent=35 // pred_region
          %v4181 = vld [vmem:[#allocation2] sm:$0xff]
          %v4182 = vld [vmem:[#allocation2 + $0x8] sm:$0xff]
          %v4183 = vld [vmem:[%s273] sm:$0xff]
          %v4185 = vlaneseq
          %v4186 = vshrl.u32 %v4185, 7
          %v4187 = vsub.s32 0, %v4186
          %v4188 = vrot.slane %v4183, %v4187
          %v4189 = vlaneseq
          %v4190 = vshrl.u32 %v4189, 7
          %v4191 = vsub.s32 1, %v4190
          %v4192 = vrot.slane %v4183, %v4191
          %v4193 = vlaneseq
          %v4194 = vshrl.u32 %v4193, 7
          %v4195 = vsub.s32 2, %v4194
          %v4196 = vrot.slane %v4183, %v4195
          %v4197 = vlaneseq
          %v4198 = vshrl.u32 %v4197, 7
          %v4199 = vsub.s32 3, %v4198
          %v4200 = vrot.slane %v4183, %v4199
          %v4201 = vlaneseq
          %v4202 = vshrl.u32 %v4201, 7
          %v4203 = vsub.s32 4, %v4202
          %v4204 = vrot.slane %v4183, %v4203
          %v4205 = vlaneseq
          %v4206 = vshrl.u32 %v4205, 7
          %v4207 = vsub.s32 5, %v4206
          %v4208 = vrot.slane %v4183, %v4207
          %v4209 = vlaneseq
          %v4210 = vshrl.u32 %v4209, 7
          %v4211 = vsub.s32 6, %v4210
          %v4212 = vrot.slane %v4183, %v4211
          %v4213 = vlaneseq
          %v4214 = vshrl.u32 %v4213, 7
          %v4215 = vsub.s32 7, %v4214
          %v4216 = vrot.slane %v4183, %v4215
          %v4217 = vcombine.low %v4188, %v4192
          %v4218 = vcombine.low %v4196, %v4200
          %v4220 = vunpack.c.l.s4 1983009808
          %v4221 = vunpack.c.0.s8 %v4220
          %v4222 = vlaneseq
          %v4223 = vshrl.u32 %v4222, 7
          %v4224 = vsub.s32 %v4221, %v4223
          %v4225 = vrot.slane %v4217, %v4224
          %v4227 = vunpack.c.l.s4 1983009808
          %v4228 = vunpack.c.0.s8 %v4227
          %v4229 = vlaneseq
          %v4230 = vshrl.u32 %v4229, 7
          %v4231 = vsub.s32 %v4228, %v4230
          %v4232 = vrot.slane %v4218, %v4231
          %v4233 = vcombine.low %v4225, %v4232
          %v4234 = vcombine.low %v4204, %v4208
          %v4235 = vcombine.low %v4212, %v4216
          %v4237 = vunpack.c.l.s4 1983009808
          %v4238 = vunpack.c.0.s8 %v4237
          %v4239 = vlaneseq
          %v4240 = vshrl.u32 %v4239, 7
          %v4241 = vsub.s32 %v4238, %v4240
          %v4242 = vrot.slane %v4234, %v4241
          %v4244 = vunpack.c.l.s4 1983009808
          %v4245 = vunpack.c.0.s8 %v4244
          %v4246 = vlaneseq
          %v4247 = vshrl.u32 %v4246, 7
          %v4248 = vsub.s32 %v4245, %v4247
          %v4249 = vrot.slane %v4235, %v4248
          %v4250 = vcombine.low %v4242, %v4249
          %v4253 = vadd.f32 %v4181, %v4233
          %v4254 = vadd.f32 %v4182, %v4250
          %v4255 = vmax.f32 %v4253, 0.0
          %v4256 = vmax.f32 %v4254, 0.0
          %v4259 = vcombine.high %v4255, %v4255
          %v4261 = vunpack.c.l.s4 1983009808
          %v4262 = vunpack.c.0.s8 %v4261
          %v4263 = vlaneseq
          %v4264 = vshrl.u32 %v4263, 7
          %v4265 = vsub.s32 %v4262, %v4264
          %v4266 = vrot.slane %v4255, %v4265
          %v4268 = vunpack.c.l.s4 1983009808
          %v4269 = vunpack.c.0.s8 %v4268
          %v4270 = vlaneseq
          %v4271 = vshrl.u32 %v4270, 7
          %v4272 = vsub.s32 %v4269, %v4271
          %v4273 = vrot.slane %v4259, %v4272
          %v4274 = vcombine.high %v4266, %v4266
          %v4275 = vcombine.high %v4273, %v4273
          %v4276 = vcombine.high %v4256, %v4256
          %v4278 = vunpack.c.l.s4 1983009808
          %v4279 = vunpack.c.0.s8 %v4278
          %v4280 = vlaneseq
          %v4281 = vshrl.u32 %v4280, 7
          %v4282 = vsub.s32 %v4279, %v4281
          %v4283 = vrot.slane %v4256, %v4282
          %v4285 = vunpack.c.l.s4 1983009808
          %v4286 = vunpack.c.0.s8 %v4285
          %v4287 = vlaneseq
          %v4288 = vshrl.u32 %v4287, 7
          %v4289 = vsub.s32 %v4286, %v4288
          %v4290 = vrot.slane %v4276, %v4289
          %v4291 = vcombine.high %v4283, %v4283
          %v4292 = vcombine.high %v4290, %v4290
          %v4301 = vpack.c.bf16 %v4266, %v4266
          %v4302 = vpack.c.bf16 %v4274, %v4274
          %v4303 = vpack.c.bf16 %v4273, %v4273
          %v4304 = vpack.c.bf16 %v4275, %v4275
          %v4305 = vpack.c.bf16 %v4283, %v4283
          %v4306 = vpack.c.bf16 %v4291, %v4291
          %v4307 = vpack.c.bf16 %v4290, %v4290
          %v4308 = vpack.c.bf16 %v4292, %v4292
          %v4309 = vld [vmem:[%s282] sm:$0xff]
          %v4310 = vld [vmem:[%s282 + $0x8] sm:$0xff]
          %v4311 = vld [vmem:[%s282 + $0x10] sm:$0xff]
          %v4312 = vld [vmem:[%s282 + $0x18] sm:$0xff]
          %v4313 = vld [vmem:[%s282 + $0x20] sm:$0xff]
          %v4314 = vld [vmem:[%s282 + $0x28] sm:$0xff]
          %v4315 = vld [vmem:[%s282 + $0x30] sm:$0xff]
          %v4316 = vld [vmem:[%s282 + $0x38] sm:$0xff]
          %v4317 = vld [vmem:[%s282 + $0x40] sm:$0xff]
          %v4318 = vld [vmem:[%s282 + $0x48] sm:$0xff]
          %v4319 = vld [vmem:[%s282 + $0x50] sm:$0xff]
          %v4320 = vld [vmem:[%s282 + $0x58] sm:$0xff]
          %v4321 = vld [vmem:[%s282 + $0x60] sm:$0xff]
          %v4322 = vld [vmem:[%s282 + $0x68] sm:$0xff]
          %v4323 = vld [vmem:[%s282 + $0x70] sm:$0xff]
          %v4324 = vld [vmem:[%s282 + $0x78] sm:$0xff]
          %v4325 = vld [vmem:[%s282 + $0x80] sm:$0xff]
          %v4326 = vld [vmem:[%s282 + $0x88] sm:$0xff]
          %v4327 = vld [vmem:[%s282 + $0x90] sm:$0xff]
          %v4328 = vld [vmem:[%s282 + $0x98] sm:$0xff]
          %v4329 = vld [vmem:[%s282 + $0xa0] sm:$0xff]
          %v4330 = vld [vmem:[%s282 + $0xa8] sm:$0xff]
          %v4331 = vld [vmem:[%s282 + $0xb0] sm:$0xff]
          %v4332 = vld [vmem:[%s282 + $0xb8] sm:$0xff]
          %v4333 = vld [vmem:[%s282 + $0xc0] sm:$0xff]
          %v4334 = vld [vmem:[%s282 + $0xc8] sm:$0xff]
          %v4335 = vld [vmem:[%s282 + $0xd0] sm:$0xff]
          %v4336 = vld [vmem:[%s282 + $0xd8] sm:$0xff]
          %v4337 = vld [vmem:[%s282 + $0xe0] sm:$0xff]
          %v4338 = vld [vmem:[%s282 + $0xe8] sm:$0xff]
          %v4339 = vld [vmem:[%s282 + $0xf0] sm:$0xff]
          %v4340 = vld [vmem:[%s282 + $0xf8] sm:$0xff]
          %v4341 = vld [vmem:[%s282 + $0x100] sm:$0xff]
          %v4342 = vld [vmem:[%s282 + $0x108] sm:$0xff]
          %v4343 = vld [vmem:[%s282 + $0x110] sm:$0xff]
          %v4344 = vld [vmem:[%s282 + $0x118] sm:$0xff]
          %v4345 = vld [vmem:[%s282 + $0x120] sm:$0xff]
          %v4346 = vld [vmem:[%s282 + $0x128] sm:$0xff]
          %v4347 = vld [vmem:[%s282 + $0x130] sm:$0xff]
          %v4348 = vld [vmem:[%s282 + $0x138] sm:$0xff]
          %v4349 = vld [vmem:[%s282 + $0x140] sm:$0xff]
          %v4350 = vld [vmem:[%s282 + $0x148] sm:$0xff]
          %v4351 = vld [vmem:[%s282 + $0x150] sm:$0xff]
          %v4352 = vld [vmem:[%s282 + $0x158] sm:$0xff]
          %v4353 = vld [vmem:[%s282 + $0x160] sm:$0xff]
          %v4354 = vld [vmem:[%s282 + $0x168] sm:$0xff]
          %v4355 = vld [vmem:[%s282 + $0x170] sm:$0xff]
          %v4356 = vld [vmem:[%s282 + $0x178] sm:$0xff]
          %v4357 = vld [vmem:[%s282 + $0x180] sm:$0xff]
          %v4358 = vld [vmem:[%s282 + $0x188] sm:$0xff]
          %v4359 = vld [vmem:[%s282 + $0x190] sm:$0xff]
          %v4360 = vld [vmem:[%s282 + $0x198] sm:$0xff]
          %v4361 = vld [vmem:[%s282 + $0x1a0] sm:$0xff]
          %v4362 = vld [vmem:[%s282 + $0x1a8] sm:$0xff]
          %v4363 = vld [vmem:[%s282 + $0x1b0] sm:$0xff]
          %v4364 = vld [vmem:[%s282 + $0x1b8] sm:$0xff]
          %v4365 = vld [vmem:[%s282 + $0x1c0] sm:$0xff]
          %v4366 = vld [vmem:[%s282 + $0x1c8] sm:$0xff]
          %v4367 = vld [vmem:[%s282 + $0x1d0] sm:$0xff]
          %v4368 = vld [vmem:[%s282 + $0x1d8] sm:$0xff]
          %v4369 = vld [vmem:[%s282 + $0x1e0] sm:$0xff]
          %v4370 = vld [vmem:[%s282 + $0x1e8] sm:$0xff]
          %v4371 = vld [vmem:[%s282 + $0x1f0] sm:$0xff]
          %v4372 = vld [vmem:[%s282 + $0x1f8] sm:$0xff]
          %v4373 = vld [vmem:[%s282 + $0x200] sm:$0xff]
          %v4374 = vld [vmem:[%s282 + $0x208] sm:$0xff]
          %v4375 = vld [vmem:[%s282 + $0x210] sm:$0xff]
          %v4376 = vld [vmem:[%s282 + $0x218] sm:$0xff]
          %v4377 = vld [vmem:[%s282 + $0x220] sm:$0xff]
          %v4378 = vld [vmem:[%s282 + $0x228] sm:$0xff]
          %v4379 = vld [vmem:[%s282 + $0x230] sm:$0xff]
          %v4380 = vld [vmem:[%s282 + $0x238] sm:$0xff]
          %v4381 = vld [vmem:[%s282 + $0x240] sm:$0xff]
          %v4382 = vld [vmem:[%s282 + $0x248] sm:$0xff]
          %v4383 = vld [vmem:[%s282 + $0x250] sm:$0xff]
          %v4384 = vld [vmem:[%s282 + $0x258] sm:$0xff]
          %v4385 = vld [vmem:[%s282 + $0x260] sm:$0xff]
          %v4386 = vld [vmem:[%s282 + $0x268] sm:$0xff]
          %v4387 = vld [vmem:[%s282 + $0x270] sm:$0xff]
          %v4388 = vld [vmem:[%s282 + $0x278] sm:$0xff]
          %v4389 = vld [vmem:[%s282 + $0x280] sm:$0xff]
          %v4390 = vld [vmem:[%s282 + $0x288] sm:$0xff]
          %v4391 = vld [vmem:[%s282 + $0x290] sm:$0xff]
          %v4392 = vld [vmem:[%s282 + $0x298] sm:$0xff]
          %v4393 = vld [vmem:[%s282 + $0x2a0] sm:$0xff]
          %v4394 = vld [vmem:[%s282 + $0x2a8] sm:$0xff]
          %v4395 = vld [vmem:[%s282 + $0x2b0] sm:$0xff]
          %v4396 = vld [vmem:[%s282 + $0x2b8] sm:$0xff]
          %v4397 = vld [vmem:[%s282 + $0x2c0] sm:$0xff]
          %v4398 = vld [vmem:[%s282 + $0x2c8] sm:$0xff]
          %v4399 = vld [vmem:[%s282 + $0x2d0] sm:$0xff]
          %v4400 = vld [vmem:[%s282 + $0x2d8] sm:$0xff]
          %v4401 = vld [vmem:[%s282 + $0x2e0] sm:$0xff]
          %v4402 = vld [vmem:[%s282 + $0x2e8] sm:$0xff]
          %v4403 = vld [vmem:[%s282 + $0x2f0] sm:$0xff]
          %v4404 = vld [vmem:[%s282 + $0x2f8] sm:$0xff]
          %v4405 = vld [vmem:[%s282 + $0x300] sm:$0xff]
          %v4406 = vld [vmem:[%s282 + $0x308] sm:$0xff]
          %v4407 = vld [vmem:[%s282 + $0x310] sm:$0xff]
          %v4408 = vld [vmem:[%s282 + $0x318] sm:$0xff]
          %v4409 = vld [vmem:[%s282 + $0x320] sm:$0xff]
          %v4410 = vld [vmem:[%s282 + $0x328] sm:$0xff]
          %v4411 = vld [vmem:[%s282 + $0x330] sm:$0xff]
          %v4412 = vld [vmem:[%s282 + $0x338] sm:$0xff]
          %v4413 = vld [vmem:[%s282 + $0x340] sm:$0xff]
          %v4414 = vld [vmem:[%s282 + $0x348] sm:$0xff]
          %v4415 = vld [vmem:[%s282 + $0x350] sm:$0xff]
          %v4416 = vld [vmem:[%s282 + $0x358] sm:$0xff]
          %v4417 = vld [vmem:[%s282 + $0x360] sm:$0xff]
          %v4418 = vld [vmem:[%s282 + $0x368] sm:$0xff]
          %v4419 = vld [vmem:[%s282 + $0x370] sm:$0xff]
          %v4420 = vld [vmem:[%s282 + $0x378] sm:$0xff]
          %v4421 = vld [vmem:[%s282 + $0x380] sm:$0xff]
          %v4422 = vld [vmem:[%s282 + $0x388] sm:$0xff]
          %v4423 = vld [vmem:[%s282 + $0x390] sm:$0xff]
          %v4424 = vld [vmem:[%s282 + $0x398] sm:$0xff]
          %v4425 = vld [vmem:[%s282 + $0x3a0] sm:$0xff]
          %v4426 = vld [vmem:[%s282 + $0x3a8] sm:$0xff]
          %v4427 = vld [vmem:[%s282 + $0x3b0] sm:$0xff]
          %v4428 = vld [vmem:[%s282 + $0x3b8] sm:$0xff]
          %v4429 = vld [vmem:[%s282 + $0x3c0] sm:$0xff]
          %v4430 = vld [vmem:[%s282 + $0x3c8] sm:$0xff]
          %v4431 = vld [vmem:[%s282 + $0x3d0] sm:$0xff]
          %v4432 = vld [vmem:[%s282 + $0x3d8] sm:$0xff]
          %v4433 = vld [vmem:[%s282 + $0x3e0] sm:$0xff]
          %v4434 = vld [vmem:[%s282 + $0x3e8] sm:$0xff]
          %v4435 = vld [vmem:[%s282 + $0x3f0] sm:$0xff]
          %v4436 = vld [vmem:[%s282 + $0x3f8] sm:$0xff]
          %v4565 = vunpack.c.l.b16 %v4309
          %v4566 = vunpack.c.h.b16 %v4309
          %v4567 = vunpack.c.l.b16 %v4310
          %v4568 = vunpack.c.h.b16 %v4310
          %v4569 = vunpack.c.l.b16 %v4311
          %v4570 = vunpack.c.h.b16 %v4311
          %v4571 = vunpack.c.l.b16 %v4312
          %v4572 = vunpack.c.h.b16 %v4312
          %v4573 = vunpack.c.l.b16 %v4313
          %v4574 = vunpack.c.h.b16 %v4313
          %v4575 = vunpack.c.l.b16 %v4314
          %v4576 = vunpack.c.h.b16 %v4314
          %v4577 = vunpack.c.l.b16 %v4315
          %v4578 = vunpack.c.h.b16 %v4315
          %v4579 = vunpack.c.l.b16 %v4316
          %v4580 = vunpack.c.h.b16 %v4316
          %v4581 = vunpack.c.l.b16 %v4317
          %v4582 = vunpack.c.h.b16 %v4317
          %v4583 = vunpack.c.l.b16 %v4318
          %v4584 = vunpack.c.h.b16 %v4318
          %v4585 = vunpack.c.l.b16 %v4319
          %v4586 = vunpack.c.h.b16 %v4319
          %v4587 = vunpack.c.l.b16 %v4320
          %v4588 = vunpack.c.h.b16 %v4320
          %v4589 = vunpack.c.l.b16 %v4321
          %v4590 = vunpack.c.h.b16 %v4321
          %v4591 = vunpack.c.l.b16 %v4322
          %v4592 = vunpack.c.h.b16 %v4322
          %v4593 = vunpack.c.l.b16 %v4323
          %v4594 = vunpack.c.h.b16 %v4323
          %v4595 = vunpack.c.l.b16 %v4324
          %v4596 = vunpack.c.h.b16 %v4324
          %v4597 = vunpack.c.l.b16 %v4325
          %v4598 = vunpack.c.h.b16 %v4325
          %v4599 = vunpack.c.l.b16 %v4326
          %v4600 = vunpack.c.h.b16 %v4326
          %v4601 = vunpack.c.l.b16 %v4327
          %v4602 = vunpack.c.h.b16 %v4327
          %v4603 = vunpack.c.l.b16 %v4328
          %v4604 = vunpack.c.h.b16 %v4328
          %v4605 = vunpack.c.l.b16 %v4329
          %v4606 = vunpack.c.h.b16 %v4329
          %v4607 = vunpack.c.l.b16 %v4330
          %v4608 = vunpack.c.h.b16 %v4330
          %v4609 = vunpack.c.l.b16 %v4331
          %v4610 = vunpack.c.h.b16 %v4331
          %v4611 = vunpack.c.l.b16 %v4332
          %v4612 = vunpack.c.h.b16 %v4332
          %v4613 = vunpack.c.l.b16 %v4333
          %v4614 = vunpack.c.h.b16 %v4333
          %v4615 = vunpack.c.l.b16 %v4334
          %v4616 = vunpack.c.h.b16 %v4334
          %v4617 = vunpack.c.l.b16 %v4335
          %v4618 = vunpack.c.h.b16 %v4335
          %v4619 = vunpack.c.l.b16 %v4336
          %v4620 = vunpack.c.h.b16 %v4336
          %v4621 = vunpack.c.l.b16 %v4337
          %v4622 = vunpack.c.h.b16 %v4337
          %v4623 = vunpack.c.l.b16 %v4338
          %v4624 = vunpack.c.h.b16 %v4338
          %v4625 = vunpack.c.l.b16 %v4339
          %v4626 = vunpack.c.h.b16 %v4339
          %v4627 = vunpack.c.l.b16 %v4340
          %v4628 = vunpack.c.h.b16 %v4340
          %v4629 = vunpack.c.l.b16 %v4341
          %v4630 = vunpack.c.h.b16 %v4341
          %v4631 = vunpack.c.l.b16 %v4342
          %v4632 = vunpack.c.h.b16 %v4342
          %v4633 = vunpack.c.l.b16 %v4343
          %v4634 = vunpack.c.h.b16 %v4343
          %v4635 = vunpack.c.l.b16 %v4344
          %v4636 = vunpack.c.h.b16 %v4344
          %v4637 = vunpack.c.l.b16 %v4345
          %v4638 = vunpack.c.h.b16 %v4345
          %v4639 = vunpack.c.l.b16 %v4346
          %v4640 = vunpack.c.h.b16 %v4346
          %v4641 = vunpack.c.l.b16 %v4347
          %v4642 = vunpack.c.h.b16 %v4347
          %v4643 = vunpack.c.l.b16 %v4348
          %v4644 = vunpack.c.h.b16 %v4348
          %v4645 = vunpack.c.l.b16 %v4349
          %v4646 = vunpack.c.h.b16 %v4349
          %v4647 = vunpack.c.l.b16 %v4350
          %v4648 = vunpack.c.h.b16 %v4350
          %v4649 = vunpack.c.l.b16 %v4351
          %v4650 = vunpack.c.h.b16 %v4351
          %v4651 = vunpack.c.l.b16 %v4352
          %v4652 = vunpack.c.h.b16 %v4352
          %v4653 = vunpack.c.l.b16 %v4353
          %v4654 = vunpack.c.h.b16 %v4353
          %v4655 = vunpack.c.l.b16 %v4354
          %v4656 = vunpack.c.h.b16 %v4354
          %v4657 = vunpack.c.l.b16 %v4355
          %v4658 = vunpack.c.h.b16 %v4355
          %v4659 = vunpack.c.l.b16 %v4356
          %v4660 = vunpack.c.h.b16 %v4356
          %v4661 = vunpack.c.l.b16 %v4357
          %v4662 = vunpack.c.h.b16 %v4357
          %v4663 = vunpack.c.l.b16 %v4358
          %v4664 = vunpack.c.h.b16 %v4358
          %v4665 = vunpack.c.l.b16 %v4359
          %v4666 = vunpack.c.h.b16 %v4359
          %v4667 = vunpack.c.l.b16 %v4360
          %v4668 = vunpack.c.h.b16 %v4360
          %v4669 = vunpack.c.l.b16 %v4361
          %v4670 = vunpack.c.h.b16 %v4361
          %v4671 = vunpack.c.l.b16 %v4362
          %v4672 = vunpack.c.h.b16 %v4362
          %v4673 = vunpack.c.l.b16 %v4363
          %v4674 = vunpack.c.h.b16 %v4363
          %v4675 = vunpack.c.l.b16 %v4364
          %v4676 = vunpack.c.h.b16 %v4364
          %v4677 = vunpack.c.l.b16 %v4365
          %v4678 = vunpack.c.h.b16 %v4365
          %v4679 = vunpack.c.l.b16 %v4366
          %v4680 = vunpack.c.h.b16 %v4366
          %v4681 = vunpack.c.l.b16 %v4367
          %v4682 = vunpack.c.h.b16 %v4367
          %v4683 = vunpack.c.l.b16 %v4368
          %v4684 = vunpack.c.h.b16 %v4368
          %v4685 = vunpack.c.l.b16 %v4369
          %v4686 = vunpack.c.h.b16 %v4369
          %v4687 = vunpack.c.l.b16 %v4370
          %v4688 = vunpack.c.h.b16 %v4370
          %v4689 = vunpack.c.l.b16 %v4371
          %v4690 = vunpack.c.h.b16 %v4371
          %v4691 = vunpack.c.l.b16 %v4372
          %v4692 = vunpack.c.h.b16 %v4372
          %v4693 = vunpack.c.l.b16 %v4373
          %v4694 = vunpack.c.h.b16 %v4373
          %v4695 = vunpack.c.l.b16 %v4374
          %v4696 = vunpack.c.h.b16 %v4374
          %v4697 = vunpack.c.l.b16 %v4375
          %v4698 = vunpack.c.h.b16 %v4375
          %v4699 = vunpack.c.l.b16 %v4376
          %v4700 = vunpack.c.h.b16 %v4376
          %v4701 = vunpack.c.l.b16 %v4377
          %v4702 = vunpack.c.h.b16 %v4377
          %v4703 = vunpack.c.l.b16 %v4378
          %v4704 = vunpack.c.h.b16 %v4378
          %v4705 = vunpack.c.l.b16 %v4379
          %v4706 = vunpack.c.h.b16 %v4379
          %v4707 = vunpack.c.l.b16 %v4380
          %v4708 = vunpack.c.h.b16 %v4380
          %v4709 = vunpack.c.l.b16 %v4381
          %v4710 = vunpack.c.h.b16 %v4381
          %v4711 = vunpack.c.l.b16 %v4382
          %v4712 = vunpack.c.h.b16 %v4382
          %v4713 = vunpack.c.l.b16 %v4383
          %v4714 = vunpack.c.h.b16 %v4383
          %v4715 = vunpack.c.l.b16 %v4384
          %v4716 = vunpack.c.h.b16 %v4384
          %v4717 = vunpack.c.l.b16 %v4385
          %v4718 = vunpack.c.h.b16 %v4385
          %v4719 = vunpack.c.l.b16 %v4386
          %v4720 = vunpack.c.h.b16 %v4386
          %v4721 = vunpack.c.l.b16 %v4387
          %v4722 = vunpack.c.h.b16 %v4387
          %v4723 = vunpack.c.l.b16 %v4388
          %v4724 = vunpack.c.h.b16 %v4388
          %v4725 = vunpack.c.l.b16 %v4389
          %v4726 = vunpack.c.h.b16 %v4389
          %v4727 = vunpack.c.l.b16 %v4390
          %v4728 = vunpack.c.h.b16 %v4390
          %v4729 = vunpack.c.l.b16 %v4391
          %v4730 = vunpack.c.h.b16 %v4391
          %v4731 = vunpack.c.l.b16 %v4392
          %v4732 = vunpack.c.h.b16 %v4392
          %v4733 = vunpack.c.l.b16 %v4393
          %v4734 = vunpack.c.h.b16 %v4393
          %v4735 = vunpack.c.l.b16 %v4394
          %v4736 = vunpack.c.h.b16 %v4394
          %v4737 = vunpack.c.l.b16 %v4395
          %v4738 = vunpack.c.h.b16 %v4395
          %v4739 = vunpack.c.l.b16 %v4396
          %v4740 = vunpack.c.h.b16 %v4396
          %v4741 = vunpack.c.l.b16 %v4397
          %v4742 = vunpack.c.h.b16 %v4397
          %v4743 = vunpack.c.l.b16 %v4398
          %v4744 = vunpack.c.h.b16 %v4398
          %v4745 = vunpack.c.l.b16 %v4399
          %v4746 = vunpack.c.h.b16 %v4399
          %v4747 = vunpack.c.l.b16 %v4400
          %v4748 = vunpack.c.h.b16 %v4400
          %v4749 = vunpack.c.l.b16 %v4401
          %v4750 = vunpack.c.h.b16 %v4401
          %v4751 = vunpack.c.l.b16 %v4402
          %v4752 = vunpack.c.h.b16 %v4402
          %v4753 = vunpack.c.l.b16 %v4403
          %v4754 = vunpack.c.h.b16 %v4403
          %v4755 = vunpack.c.l.b16 %v4404
          %v4756 = vunpack.c.h.b16 %v4404
          %v4757 = vunpack.c.l.b16 %v4405
          %v4758 = vunpack.c.h.b16 %v4405
          %v4759 = vunpack.c.l.b16 %v4406
          %v4760 = vunpack.c.h.b16 %v4406
          %v4761 = vunpack.c.l.b16 %v4407
          %v4762 = vunpack.c.h.b16 %v4407
          %v4763 = vunpack.c.l.b16 %v4408
          %v4764 = vunpack.c.h.b16 %v4408
          %v4765 = vunpack.c.l.b16 %v4409
          %v4766 = vunpack.c.h.b16 %v4409
          %v4767 = vunpack.c.l.b16 %v4410
          %v4768 = vunpack.c.h.b16 %v4410
          %v4769 = vunpack.c.l.b16 %v4411
          %v4770 = vunpack.c.h.b16 %v4411
          %v4771 = vunpack.c.l.b16 %v4412
          %v4772 = vunpack.c.h.b16 %v4412
          %v4773 = vunpack.c.l.b16 %v4413
          %v4774 = vunpack.c.h.b16 %v4413
          %v4775 = vunpack.c.l.b16 %v4414
          %v4776 = vunpack.c.h.b16 %v4414
          %v4777 = vunpack.c.l.b16 %v4415
          %v4778 = vunpack.c.h.b16 %v4415
          %v4779 = vunpack.c.l.b16 %v4416
          %v4780 = vunpack.c.h.b16 %v4416
          %v4781 = vunpack.c.l.b16 %v4417
          %v4782 = vunpack.c.h.b16 %v4417
          %v4783 = vunpack.c.l.b16 %v4418
          %v4784 = vunpack.c.h.b16 %v4418
          %v4785 = vunpack.c.l.b16 %v4419
          %v4786 = vunpack.c.h.b16 %v4419
          %v4787 = vunpack.c.l.b16 %v4420
          %v4788 = vunpack.c.h.b16 %v4420
          %v4789 = vunpack.c.l.b16 %v4421
          %v4790 = vunpack.c.h.b16 %v4421
          %v4791 = vunpack.c.l.b16 %v4422
          %v4792 = vunpack.c.h.b16 %v4422
          %v4793 = vunpack.c.l.b16 %v4423
          %v4794 = vunpack.c.h.b16 %v4423
          %v4795 = vunpack.c.l.b16 %v4424
          %v4796 = vunpack.c.h.b16 %v4424
          %v4797 = vunpack.c.l.b16 %v4425
          %v4798 = vunpack.c.h.b16 %v4425
          %v4799 = vunpack.c.l.b16 %v4426
          %v4800 = vunpack.c.h.b16 %v4426
          %v4801 = vunpack.c.l.b16 %v4427
          %v4802 = vunpack.c.h.b16 %v4427
          %v4803 = vunpack.c.l.b16 %v4428
          %v4804 = vunpack.c.h.b16 %v4428
          %v4805 = vunpack.c.l.b16 %v4429
          %v4806 = vunpack.c.h.b16 %v4429
          %v4807 = vunpack.c.l.b16 %v4430
          %v4808 = vunpack.c.h.b16 %v4430
          %v4809 = vunpack.c.l.b16 %v4431
          %v4810 = vunpack.c.h.b16 %v4431
          %v4811 = vunpack.c.l.b16 %v4432
          %v4812 = vunpack.c.h.b16 %v4432
          %v4813 = vunpack.c.l.b16 %v4433
          %v4814 = vunpack.c.h.b16 %v4433
          %v4815 = vunpack.c.l.b16 %v4434
          %v4816 = vunpack.c.h.b16 %v4434
          %v4817 = vunpack.c.l.b16 %v4435
          %v4818 = vunpack.c.h.b16 %v4435
          %v4819 = vunpack.c.l.b16 %v4436
          %v4820 = vunpack.c.h.b16 %v4436
          %v4821 = vpack.c.b16 %v4567, %v4565
          %v4822 = vpack.c.b16 %v4568, %v4566
          %v4823 = vpack.c.b16 %v4571, %v4569
          %v4824 = vpack.c.b16 %v4572, %v4570
          %v4825 = vpack.c.b16 %v4575, %v4573
          %v4826 = vpack.c.b16 %v4576, %v4574
          %v4827 = vpack.c.b16 %v4579, %v4577
          %v4828 = vpack.c.b16 %v4580, %v4578
          %v4829 = vpack.c.b16 %v4583, %v4581
          %v4830 = vpack.c.b16 %v4584, %v4582
          %v4831 = vpack.c.b16 %v4587, %v4585
          %v4832 = vpack.c.b16 %v4588, %v4586
          %v4833 = vpack.c.b16 %v4591, %v4589
          %v4834 = vpack.c.b16 %v4592, %v4590
          %v4835 = vpack.c.b16 %v4595, %v4593
          %v4836 = vpack.c.b16 %v4596, %v4594
          %v4837 = vpack.c.b16 %v4599, %v4597
          %v4838 = vpack.c.b16 %v4600, %v4598
          %v4839 = vpack.c.b16 %v4603, %v4601
          %v4840 = vpack.c.b16 %v4604, %v4602
          %v4841 = vpack.c.b16 %v4607, %v4605
          %v4842 = vpack.c.b16 %v4608, %v4606
          %v4843 = vpack.c.b16 %v4611, %v4609
          %v4844 = vpack.c.b16 %v4612, %v4610
          %v4845 = vpack.c.b16 %v4615, %v4613
          %v4846 = vpack.c.b16 %v4616, %v4614
          %v4847 = vpack.c.b16 %v4619, %v4617
          %v4848 = vpack.c.b16 %v4620, %v4618
          %v4849 = vpack.c.b16 %v4623, %v4621
          %v4850 = vpack.c.b16 %v4624, %v4622
          %v4851 = vpack.c.b16 %v4627, %v4625
          %v4852 = vpack.c.b16 %v4628, %v4626
          %v4853 = vpack.c.b16 %v4631, %v4629
          %v4854 = vpack.c.b16 %v4632, %v4630
          %v4855 = vpack.c.b16 %v4635, %v4633
          %v4856 = vpack.c.b16 %v4636, %v4634
          %v4857 = vpack.c.b16 %v4639, %v4637
          %v4858 = vpack.c.b16 %v4640, %v4638
          %v4859 = vpack.c.b16 %v4643, %v4641
          %v4860 = vpack.c.b16 %v4644, %v4642
          %v4861 = vpack.c.b16 %v4647, %v4645
          %v4862 = vpack.c.b16 %v4648, %v4646
          %v4863 = vpack.c.b16 %v4651, %v4649
          %v4864 = vpack.c.b16 %v4652, %v4650
          %v4865 = vpack.c.b16 %v4655, %v4653
          %v4866 = vpack.c.b16 %v4656, %v4654
          %v4867 = vpack.c.b16 %v4659, %v4657
          %v4868 = vpack.c.b16 %v4660, %v4658
          %v4869 = vpack.c.b16 %v4663, %v4661
          %v4870 = vpack.c.b16 %v4664, %v4662
          %v4871 = vpack.c.b16 %v4667, %v4665
          %v4872 = vpack.c.b16 %v4668, %v4666
          %v4873 = vpack.c.b16 %v4671, %v4669
          %v4874 = vpack.c.b16 %v4672, %v4670
          %v4875 = vpack.c.b16 %v4675, %v4673
          %v4876 = vpack.c.b16 %v4676, %v4674
          %v4877 = vpack.c.b16 %v4679, %v4677
          %v4878 = vpack.c.b16 %v4680, %v4678
          %v4879 = vpack.c.b16 %v4683, %v4681
          %v4880 = vpack.c.b16 %v4684, %v4682
          %v4881 = vpack.c.b16 %v4687, %v4685
          %v4882 = vpack.c.b16 %v4688, %v4686
          %v4883 = vpack.c.b16 %v4691, %v4689
          %v4884 = vpack.c.b16 %v4692, %v4690
          %v4885 = vpack.c.b16 %v4695, %v4693
          %v4886 = vpack.c.b16 %v4696, %v4694
          %v4887 = vpack.c.b16 %v4699, %v4697
          %v4888 = vpack.c.b16 %v4700, %v4698
          %v4889 = vpack.c.b16 %v4703, %v4701
          %v4890 = vpack.c.b16 %v4704, %v4702
          %v4891 = vpack.c.b16 %v4707, %v4705
          %v4892 = vpack.c.b16 %v4708, %v4706
          %v4893 = vpack.c.b16 %v4711, %v4709
          %v4894 = vpack.c.b16 %v4712, %v4710
          %v4895 = vpack.c.b16 %v4715, %v4713
          %v4896 = vpack.c.b16 %v4716, %v4714
          %v4897 = vpack.c.b16 %v4719, %v4717
          %v4898 = vpack.c.b16 %v4720, %v4718
          %v4899 = vpack.c.b16 %v4723, %v4721
          %v4900 = vpack.c.b16 %v4724, %v4722
          %v4901 = vpack.c.b16 %v4727, %v4725
          %v4902 = vpack.c.b16 %v4728, %v4726
          %v4903 = vpack.c.b16 %v4731, %v4729
          %v4904 = vpack.c.b16 %v4732, %v4730
          %v4905 = vpack.c.b16 %v4735, %v4733
          %v4906 = vpack.c.b16 %v4736, %v4734
          %v4907 = vpack.c.b16 %v4739, %v4737
          %v4908 = vpack.c.b16 %v4740, %v4738
          %v4909 = vpack.c.b16 %v4743, %v4741
          %v4910 = vpack.c.b16 %v4744, %v4742
          %v4911 = vpack.c.b16 %v4747, %v4745
          %v4912 = vpack.c.b16 %v4748, %v4746
          %v4913 = vpack.c.b16 %v4751, %v4749
          %v4914 = vpack.c.b16 %v4752, %v4750
          %v4915 = vpack.c.b16 %v4755, %v4753
          %v4916 = vpack.c.b16 %v4756, %v4754
          %v4917 = vpack.c.b16 %v4759, %v4757
          %v4918 = vpack.c.b16 %v4760, %v4758
          %v4919 = vpack.c.b16 %v4763, %v4761
          %v4920 = vpack.c.b16 %v4764, %v4762
          %v4921 = vpack.c.b16 %v4767, %v4765
          %v4922 = vpack.c.b16 %v4768, %v4766
          %v4923 = vpack.c.b16 %v4771, %v4769
          %v4924 = vpack.c.b16 %v4772, %v4770
          %v4925 = vpack.c.b16 %v4775, %v4773
          %v4926 = vpack.c.b16 %v4776, %v4774
          %v4927 = vpack.c.b16 %v4779, %v4777
          %v4928 = vpack.c.b16 %v4780, %v4778
          %v4929 = vpack.c.b16 %v4783, %v4781
          %v4930 = vpack.c.b16 %v4784, %v4782
          %v4931 = vpack.c.b16 %v4787, %v4785
          %v4932 = vpack.c.b16 %v4788, %v4786
          %v4933 = vpack.c.b16 %v4791, %v4789
          %v4934 = vpack.c.b16 %v4792, %v4790
          %v4935 = vpack.c.b16 %v4795, %v4793
          %v4936 = vpack.c.b16 %v4796, %v4794
          %v4937 = vpack.c.b16 %v4799, %v4797
          %v4938 = vpack.c.b16 %v4800, %v4798
          %v4939 = vpack.c.b16 %v4803, %v4801
          %v4940 = vpack.c.b16 %v4804, %v4802
          %v4941 = vpack.c.b16 %v4807, %v4805
          %v4942 = vpack.c.b16 %v4808, %v4806
          %v4943 = vpack.c.b16 %v4811, %v4809
          %v4944 = vpack.c.b16 %v4812, %v4810
          %v4945 = vpack.c.b16 %v4815, %v4813
          %v4946 = vpack.c.b16 %v4816, %v4814
          %v4947 = vpack.c.b16 %v4819, %v4817
          %v4948 = vpack.c.b16 %v4820, %v4818
          %5077 = vmatprep.subr.bf16.mxu0 %v4822
          %5078 = vmatpush1.bf16.msra.mxu0 %v4821
          %5079 = vmatprep.subr.bf16.mxu0 %v4824
          %5080 = vmatpush1.bf16.msra.mxu0 %v4823
          %5081 = vmatprep.subr.bf16.mxu0 %v4826
          %5082 = vmatpush1.bf16.msra.mxu0 %v4825
          %5083 = vmatprep.subr.bf16.mxu0 %v4828
          %5084 = vmatpush1.bf16.msra.mxu0 %v4827
          %5085 = vmatprep.subr.bf16.mxu0 %v4830
          %5086 = vmatpush1.bf16.msra.mxu0 %v4829
          %5087 = vmatprep.subr.bf16.mxu0 %v4832
          %5088 = vmatpush1.bf16.msra.mxu0 %v4831
          %5089 = vmatprep.subr.bf16.mxu0 %v4834
          %5090 = vmatpush1.bf16.msra.mxu0 %v4833
          %5091 = vmatprep.subr.bf16.mxu0 %v4836
          %5092 = vmatpush1.bf16.msra.mxu0 %v4835
          %5093 = vmatprep.subr.bf16.mxu0 %v4838
          %5094 = vmatpush1.bf16.msra.mxu0 %v4837
          %5095 = vmatprep.subr.bf16.mxu0 %v4840
          %5096 = vmatpush1.bf16.msra.mxu0 %v4839
          %5097 = vmatprep.subr.bf16.mxu0 %v4842
          %5098 = vmatpush1.bf16.msra.mxu0 %v4841
          %5099 = vmatprep.subr.bf16.mxu0 %v4844
          %5100 = vmatpush1.bf16.msra.mxu0 %v4843
          %5101 = vmatprep.subr.bf16.mxu0 %v4846
          %5102 = vmatpush1.bf16.msra.mxu0 %v4845
          %5103 = vmatprep.subr.bf16.mxu0 %v4848
          %5104 = vmatpush1.bf16.msra.mxu0 %v4847
          %5105 = vmatprep.subr.bf16.mxu0 %v4850
          %5106 = vmatpush1.bf16.msra.mxu0 %v4849
          %5107 = vmatprep.subr.bf16.mxu0 %v4852
          %5108 = vmatpush1.bf16.msra.mxu0 %v4851
          %5109 = vmatprep.mubr.bf16.mxu0 %v4302
          %5110 = vmatmul.mubr.bf16.gmra.mrb[0].mxu0 %v4301
          %v5111 = vpop.f32.mrb[0].mxu0
          %v5112 = vadd.f32 0.0, %v5111
          %v5113 = vpop.f32.mrb[0].mxu0
          %v5114 = vadd.f32 0.0, %v5113
          %v5115 = vpop.f32.mrb[0].mxu0
          %v5116 = vpop.f32.mrb[0].mxu0
          %5117 = vdwg.mxu0
          %5118 = vmatprep.subr.bf16.mxu0 %v4854
          %5119 = vmatpush1.bf16.msra.mxu0 %v4853
          %5120 = vmatprep.subr.bf16.mxu0 %v4856
          %5121 = vmatpush1.bf16.msra.mxu0 %v4855
          %5122 = vmatprep.subr.bf16.mxu0 %v4858
          %5123 = vmatpush1.bf16.msra.mxu0 %v4857
          %5124 = vmatprep.subr.bf16.mxu0 %v4860
          %5125 = vmatpush1.bf16.msra.mxu0 %v4859
          %5126 = vmatprep.subr.bf16.mxu0 %v4862
          %5127 = vmatpush1.bf16.msra.mxu0 %v4861
          %5128 = vmatprep.subr.bf16.mxu0 %v4864
          %5129 = vmatpush1.bf16.msra.mxu0 %v4863
          %5130 = vmatprep.subr.bf16.mxu0 %v4866
          %5131 = vmatpush1.bf16.msra.mxu0 %v4865
          %5132 = vmatprep.subr.bf16.mxu0 %v4868
          %5133 = vmatpush1.bf16.msra.mxu0 %v4867
          %5134 = vmatprep.subr.bf16.mxu0 %v4870
          %5135 = vmatpush1.bf16.msra.mxu0 %v4869
          %5136 = vmatprep.subr.bf16.mxu0 %v4872
          %5137 = vmatpush1.bf16.msra.mxu0 %v4871
          %5138 = vmatprep.subr.bf16.mxu0 %v4874
          %5139 = vmatpush1.bf16.msra.mxu0 %v4873
          %5140 = vmatprep.subr.bf16.mxu0 %v4876
          %5141 = vmatpush1.bf16.msra.mxu0 %v4875
          %5142 = vmatprep.subr.bf16.mxu0 %v4878
          %5143 = vmatpush1.bf16.msra.mxu0 %v4877
          %5144 = vmatprep.subr.bf16.mxu0 %v4880
          %5145 = vmatpush1.bf16.msra.mxu0 %v4879
          %5146 = vmatprep.subr.bf16.mxu0 %v4882
          %5147 = vmatpush1.bf16.msra.mxu0 %v4881
          %5148 = vmatprep.subr.bf16.mxu0 %v4884
          %5149 = vmatpush1.bf16.msra.mxu0 %v4883
          %5150 = vmatprep.mubr.bf16.mxu0 %v4304
          %5151 = vmatmul.mubr.bf16.gmra.mrb[0].mxu0 %v4303
          %v5152 = vpop.f32.mrb[0].mxu0
          %v5153 = vadd.f32 %v5112, %v5152
          %v5154 = vpop.f32.mrb[0].mxu0
          %v5155 = vadd.f32 %v5114, %v5154
          %v5156 = vpop.f32.mrb[0].mxu0
          %v5157 = vpop.f32.mrb[0].mxu0
          %5158 = vdwg.mxu0
          %5159 = vmatprep.subr.bf16.mxu0 %v4886
          %5160 = vmatpush1.bf16.msra.mxu0 %v4885
          %5161 = vmatprep.subr.bf16.mxu0 %v4888
          %5162 = vmatpush1.bf16.msra.mxu0 %v4887
          %5163 = vmatprep.subr.bf16.mxu0 %v4890
          %5164 = vmatpush1.bf16.msra.mxu0 %v4889
          %5165 = vmatprep.subr.bf16.mxu0 %v4892
          %5166 = vmatpush1.bf16.msra.mxu0 %v4891
          %5167 = vmatprep.subr.bf16.mxu0 %v4894
          %5168 = vmatpush1.bf16.msra.mxu0 %v4893
          %5169 = vmatprep.subr.bf16.mxu0 %v4896
          %5170 = vmatpush1.bf16.msra.mxu0 %v4895
          %5171 = vmatprep.subr.bf16.mxu0 %v4898
          %5172 = vmatpush1.bf16.msra.mxu0 %v4897
          %5173 = vmatprep.subr.bf16.mxu0 %v4900
          %5174 = vmatpush1.bf16.msra.mxu0 %v4899
          %5175 = vmatprep.subr.bf16.mxu0 %v4902
          %5176 = vmatpush1.bf16.msra.mxu0 %v4901
          %5177 = vmatprep.subr.bf16.mxu0 %v4904
          %5178 = vmatpush1.bf16.msra.mxu0 %v4903
          %5179 = vmatprep.subr.bf16.mxu0 %v4906
          %5180 = vmatpush1.bf16.msra.mxu0 %v4905
          %5181 = vmatprep.subr.bf16.mxu0 %v4908
          %5182 = vmatpush1.bf16.msra.mxu0 %v4907
          %5183 = vmatprep.subr.bf16.mxu0 %v4910
          %5184 = vmatpush1.bf16.msra.mxu0 %v4909
          %5185 = vmatprep.subr.bf16.mxu0 %v4912
          %5186 = vmatpush1.bf16.msra.mxu0 %v4911
          %5187 = vmatprep.subr.bf16.mxu0 %v4914
          %5188 = vmatpush1.bf16.msra.mxu0 %v4913
          %5189 = vmatprep.subr.bf16.mxu0 %v4916
          %5190 = vmatpush1.bf16.msra.mxu0 %v4915
          %5191 = vmatprep.mubr.bf16.mxu0 %v4306
          %5192 = vmatmul.mubr.bf16.gmra.mrb[0].mxu0 %v4305
          %v5193 = vpop.f32.mrb[0].mxu0
          %v5194 = vadd.f32 %v5153, %v5193
          %v5195 = vpop.f32.mrb[0].mxu0
          %v5196 = vadd.f32 %v5155, %v5195
          %v5197 = vpop.f32.mrb[0].mxu0
          %v5198 = vpop.f32.mrb[0].mxu0
          %5199 = vdwg.mxu0
          %5200 = vmatprep.subr.bf16.mxu0 %v4918
          %5201 = vmatpush1.bf16.msra.mxu0 %v4917
          %5202 = vmatprep.subr.bf16.mxu0 %v4920
          %5203 = vmatpush1.bf16.msra.mxu0 %v4919
          %5204 = vmatprep.subr.bf16.mxu0 %v4922
          %5205 = vmatpush1.bf16.msra.mxu0 %v4921
          %5206 = vmatprep.subr.bf16.mxu0 %v4924
          %5207 = vmatpush1.bf16.msra.mxu0 %v4923
          %5208 = vmatprep.subr.bf16.mxu0 %v4926
          %5209 = vmatpush1.bf16.msra.mxu0 %v4925
          %5210 = vmatprep.subr.bf16.mxu0 %v4928
          %5211 = vmatpush1.bf16.msra.mxu0 %v4927
          %5212 = vmatprep.subr.bf16.mxu0 %v4930
          %5213 = vmatpush1.bf16.msra.mxu0 %v4929
          %5214 = vmatprep.subr.bf16.mxu0 %v4932
          %5215 = vmatpush1.bf16.msra.mxu0 %v4931
          %5216 = vmatprep.subr.bf16.mxu0 %v4934
          %5217 = vmatpush1.bf16.msra.mxu0 %v4933
          %5218 = vmatprep.subr.bf16.mxu0 %v4936
          %5219 = vmatpush1.bf16.msra.mxu0 %v4935
          %5220 = vmatprep.subr.bf16.mxu0 %v4938
          %5221 = vmatpush1.bf16.msra.mxu0 %v4937
          %5222 = vmatprep.subr.bf16.mxu0 %v4940
          %5223 = vmatpush1.bf16.msra.mxu0 %v4939
          %5224 = vmatprep.subr.bf16.mxu0 %v4942
          %5225 = vmatpush1.bf16.msra.mxu0 %v4941
          %5226 = vmatprep.subr.bf16.mxu0 %v4944
          %5227 = vmatpush1.bf16.msra.mxu0 %v4943
          %5228 = vmatprep.subr.bf16.mxu0 %v4946
          %5229 = vmatpush1.bf16.msra.mxu0 %v4945
          %5230 = vmatprep.subr.bf16.mxu0 %v4948
          %5231 = vmatpush1.bf16.msra.mxu0 %v4947
          %5232 = vmatprep.mubr.bf16.mxu0 %v4308
          %5233 = vmatmul.mubr.bf16.gmra.mrb[0].mxu0 %v4307
          %v5234 = vpop.f32.mrb[0].mxu0
          %v5235 = vadd.f32 %v5194, %v5234
          %v5236 = vpop.f32.mrb[0].mxu0
          %v5237 = vadd.f32 %v5196, %v5236
          %v5238 = vpop.f32.mrb[0].mxu0
          %v5239 = vpop.f32.mrb[0].mxu0
          %5240 = vdwg.mxu0
          %v5243 = vcombine.low %v5235, %v5237
          %v5245 = vunpack.c.l.s4 1983009808
          %v5246 = vunpack.c.0.s8 %v5245
          %v5247 = vlaneseq
          %v5248 = vshrl.u32 %v5247, 7
          %v5249 = vsub.s32 %v5246, %v5248
          %v5250 = vrot.slane %v5243, %v5249
          %5252 = vst [vmem:[%s336] sm:$0xf] %v5250
        $region56: #{classify_layer.2} parent=35 // pred_fallthru
          _
        %p5253 = scmp.lt.s32.totalorder %s25, 1
        %s5254 = scalar_select %p5253, %s25, 1
        %s5255 = smul.addr %s5254, 2
        %s5256 = smul.addr %s5255, 2
        %s5257 = scalar_lea.vmem %s4, %s5256
        // Predicated region
        $region57: #{classify_layer.2} parent=35 // pred_check
          %p5258 = pneg %p157
        $region58: #{classify_layer.2} parent=35 // pred_check_branch
          %5260 = sbr.rel (%p5258) target = $region60
        $region59: #{classify_layer.2} parent=35 // pred_region
          _
        $region60: #{classify_layer.2} parent=35 // pred_fallthru
          _
      $region36: #{classify_layer.2} parent=5 // pred_fallthru
        _
      %p5261 = scmp.le.s32.totalorder 2, %s16
      // Predicated region
      $region61: #{classify_layer.2} parent=5 // pred_check
        %p5262 = pneg %p5261
      $region62: #{classify_layer.2} parent=5 // pred_check_branch
        %5264 = sbr.rel (%p5262) target = $region64
      $region63: #{classify_layer.2} parent=5 // pred_region
        %s5265 = ssub.s32 %s16, 2
        // Predicated region
        $region65: #{classify_layer.2} parent=63 // pred_check
          %p5266 = pneg %p163
        $region66: #{classify_layer.2} parent=63 // pred_check_branch
          %5268 = sbr.rel (%p5266) target = $region68
        $region67: #{classify_layer.2} parent=63 // pred_region
          %p5269 = scmp.lt.s32.totalorder %s27, 1
          %s5270 = scalar_select %p5269, %s27, 1
          %s5271 = smul.addr %s5270, 2
          %s5272 = smul.addr %s5271, 2
          %s5273 = scalar_lea.vmem %s4, %s5272
        $region68: #{classify_layer.2} parent=63 // pred_fallthru
          _
      $region64: #{classify_layer.2} parent=5 // pred_fallthru
        _
    $region6: #{classify_layer.2} parent=1 // loop_footer
      %s20 = sadd.s32 1, %s16
    $region7: #{classify_layer.2} parent=1 // loop_footer_branch
      %15 = sbr.rel target = $region3
    $region8: #{classify_layer.2} parent=1 // loop_exit
      _
    %5274 = vsyncpa [#allocation4], 1
    %s5275 = scalar_lea.sflag [#allocation4], 1
    %5276 = vsyncpa %s5275, 1
    %5277 = vsyncpa [#allocation6], 1
    %s5278 = scalar_lea.sflag [#allocation6], 1
    %5279 = vsyncpa %s5278, 1

</llo_original>
